<compile_context>
chip_gen: v7x
topology: tpu7x:2x2x1
jax: 0.10.0
libtpu: 0.0.40
codegen_flags: <defaults>
</compile_context>

<pallas_src>
import numpy as np
import jax
import jax.numpy as jnp
from jax.experimental import pallas as pl
from jax.experimental.pallas import tpu as pltpu


# ---------------------------------------------------------------------------
# Fused kernel: avgpool + 1x1 conv + ReLU + fc + (dropout=identity) + classifier
# ---------------------------------------------------------------------------
def aux_fused_kernel(x_ref, p_ref, cwt_ref, cb_ref, w1_ref, b1_ref, w2_ref,
                     b2_ref, o_ref, feat_ref, h_ref):
    # x_ref:    (N, C, HW)        f32  input feature map (resident across grid)
    # p_ref:    (HW, OHW)         f32  pooling matrix, 1/25 folded in (resident)
    # cwt_ref:  (C, 128)          f32  1x1-conv weight, pre-transposed (resident)
    # cb_ref:   (1, 128)          f32  conv bias (resident)
    # w1_ref:   (QT, 128, 1024)   bf16 streamed K-tile of the fc weight
    # b1_ref:   (1, 1024)         f32  fc bias (resident)
    # w2_ref:   (1024, NC)        bf16 classifier weight (resident)
    # b2_ref:   (1, NC)           f32  classifier bias (resident)
    # o_ref:    (N, NC)           f32  output logits
    # feat_ref: (N, OHW, 128)     f32  scratch: pool+conv+relu features (lane-dense)
    # h_ref:    (N, 1024)         f32  scratch: fc accumulator
    k = pl.program_id(0)
    n_batch = x_ref.shape[0]
    qt = w1_ref.shape[0]

    # Grid step 0: avgpool + 1x1 conv + ReLU for the whole batch, kept in VMEM.
    @pl.when(k == 0)
    def _():
        h_ref[...] = jnp.zeros_like(h_ref)
        for n in range(n_batch):
            xn = x_ref[n]                                            # (C, HW)
            pooled = jnp.dot(xn, p_ref[...],
                             preferred_element_type=jnp.float32)     # (C, OHW)
            feat_n = jnp.dot(pooled.T, cwt_ref[...],
                             preferred_element_type=jnp.float32)     # (OHW, 128)
            feat_ref[n] = jnp.maximum(feat_n + cb_ref[...], 0.0)

    # fc partial product for this K tile: spatial positions q in [k*qt, (k+1)*qt).
    q0 = pl.multiple_of(k * qt, qt)
    fs = feat_ref[:, pl.ds(q0, qt), :]                               # (N, qt, 128)
    acc = h_ref[...]
    for dq in range(qt):
        acc = acc + jnp.dot(fs[:, dq, :].astype(w1_ref.dtype), w1_ref[dq],
                            preferred_element_type=jnp.float32)
    h_ref[...] = acc

    # Last step: fc bias, (inference) dropout, classifier.
    @pl.when(k == pl.num_programs(0) - 1)
    def _():
        h = h_ref[...] + b1_ref[...]
        # TODO(synk): Dropout(p=0.7) omitted -> inference semantics (identity).
        out = jnp.dot(h.astype(w2_ref.dtype), w2_ref[...],
                      preferred_element_type=jnp.float32) + b2_ref[...]
        o_ref[...] = out.astype(o_ref.dtype)


# ---------------------------------------------------------------------------
# One-time parameter / constant preparation (no per-call transposes)
# ---------------------------------------------------------------------------
def build_pool_matrix(H, W, k=5, s=3):
    """0/1 pooling matrix with the 1/(k*k) average folded in."""
    OH = (H - k) // s + 1
    OW = (W - k) // s + 1
    P = np.zeros((H * W, OH * OW), dtype=np.float32)
    inv = 1.0 / (k * k)
    for oh in range(OH):
        for ow in range(OW):
            for dh in range(k):
                for dw in range(k):
                    P[(oh * s + dh) * W + (ow * s + dw), oh * OW + ow] = inv
    return jnp.asarray(P), OH * OW


def prepare_params(params, H=14, W=14):
    """Rearrange weights ONCE into the kernel layout.

    The conv output is stored lane-dense as (N, OHW, 128) (flat index q*128+c),
    so the fc weight columns (PyTorch flatten order c*OHW+q) are permuted to
    w1r[q, c, h] = fc_w[h, c*OHW + q].  Big matmul weights are cast to bf16 for
    streaming; accumulation stays f32 in-kernel.
    """
    conv_w, conv_b, fc_w, fc_b, cls_w, cls_b = params
    P, OHW = build_pool_matrix(H, W)
    D_hid, D_in = fc_w.shape
    assert D_in == 128 * OHW, (D_in, OHW)
    num_classes = cls_w.shape[0]

    cwt = jnp.asarray(conv_w.T, jnp.float32)                         # (C, 128)
    cb = conv_b.reshape(1, 128).astype(jnp.float32)
    w1r = jnp.transpose(fc_w.reshape(D_hid, 128, OHW), (2, 1, 0)).astype(jnp.bfloat16)
    b1 = fc_b.reshape(1, D_hid).astype(jnp.float32)
    w2 = jnp.asarray(cls_w.T, jnp.bfloat16)                          # (1024, NC)
    b2 = cls_b.reshape(1, num_classes).astype(jnp.float32)
    return P, cwt, cb, w1r, b1, w2, b2


# ---------------------------------------------------------------------------
# Forward wrapper
# ---------------------------------------------------------------------------
def aux_classifier_forward(x, prepared):
    P, cwt, cb, w1r, b1, w2, b2 = prepared
    N, C, H, W = x.shape
    HW = H * W
    OHW, _, D_hid = w1r.shape                 # (16, 128, 1024)
    num_classes = w2.shape[1]
    QT = OHW // 2                             # 8 -> 2 grid steps, 2 MiB bf16 w1 tile each

    x_flat = x.reshape(N, C, HW)              # contiguous reshape: free

    return pl.pallas_call(
        aux_fused_kernel,
        out_shape=jax.ShapeDtypeStruct((N, num_classes), jnp.float32),
        grid=(OHW // QT,),
        in_specs=[
            pl.BlockSpec((N, C, HW), lambda k: (0, 0, 0)),            # resident
            pl.BlockSpec((HW, OHW), lambda k: (0, 0)),                # resident
            pl.BlockSpec((C, 128), lambda k: (0, 0)),                 # resident
            pl.BlockSpec((1, 128), lambda k: (0, 0)),                 # resident
            pl.BlockSpec((QT, 128, D_hid), lambda k: (k, 0, 0)),      # streamed bf16
            pl.BlockSpec((1, D_hid), lambda k: (0, 0)),               # resident
            pl.BlockSpec((D_hid, num_classes), lambda k: (0, 0)),     # resident bf16
            pl.BlockSpec((1, num_classes), lambda k: (0, 0)),         # resident
        ],
        out_specs=pl.BlockSpec((N, num_classes), lambda k: (0, 0)),
        scratch_shapes=[
            pltpu.VMEM((N, OHW, 128), jnp.float32),   # feat (never hits HBM)
            pltpu.VMEM((N, D_hid), jnp.float32),      # fc accumulator
        ],
        compiler_params=pltpu.CompilerParams(
            dimension_semantics=("arbitrary",),
            vmem_limit_bytes=32 * 1024 * 1024,        # well under v7x's 64 MiB VMEM
        ),
    )(x_flat, P, cwt, cb, w1r, b1, w2, b2)


# ---------------------------------------------------------------------------
# Params + pure-JAX reference (mirrors the PyTorch module, inference mode)
# ---------------------------------------------------------------------------
def init_params(key, in_fts, num_classes):
    ks = jax.random.split(key, 6)
    scale = 0.02
    conv_w = scale * jax.random.normal(ks[0], (128, in_fts), jnp.float32)      # Conv2d 1x1
    conv_b = scale * jax.random.normal(ks[1], (128,), jnp.float32)
    fc_w = scale * jax.random.normal(ks[2], (1024, 4 * 4 * 128), jnp.float32)  # Linear(2048,1024)
    fc_b = scale * jax.random.normal(ks[3], (1024,), jnp.float32)
    cls_w = scale * jax.random.normal(ks[4], (num_classes, 1024), jnp.float32)  # Linear(1024,NC)
    cls_b = scale * jax.random.normal(ks[5], (num_classes,), jnp.float32)
    return conv_w, conv_b, fc_w, fc_b, cls_w, cls_b


def reference_forward(x, params):
    conv_w, conv_b, fc_w, fc_b, cls_w, cls_b = params
    pooled = jax.lax.reduce_window(
        x, 0.0, jax.lax.add, (1, 1, 5, 5), (1, 1, 3, 3), "VALID") / 25.0
    conv = jnp.einsum("nchw,oc->nohw", pooled, conv_w) + conv_b[None, :, None, None]
    conv = jnp.maximum(conv, 0.0)
    flat = conv.reshape(x.shape[0], -1)
    h = flat @ fc_w.T + fc_b              # fc; dropout(p=0.7) = identity at inference
    return h @ cls_w.T + cls_b            # classifier


if __name__ == "__main__":
    # Spatial must be 14x14 so AvgPool2d(5, stride=3) -> 4x4 and fc sees 4*4*128.
    N, C, H, W = 2, 16, 14, 14
    num_classes = 10

    key = jax.random.PRNGKey(0)
    k_x, k_p = jax.random.split(key)
    x = jax.random.normal(k_x, (N, C, H, W), jnp.float32)
    params = init_params(k_p, C, num_classes)
    prepared = prepare_params(params, H, W)   # one-time weight layout + bf16 cast

    out = aux_classifier_forward(x, prepared)
    out = jax.block_until_ready(out)

    ref = reference_forward(x, params)
    assert out.shape == (N, num_classes), out.shape
    assert jnp.allclose(out, ref, atol=1e-2, rtol=1e-2), float(jnp.max(jnp.abs(out - ref)))
    print("KERNEL_OK")
</pallas_src>

<mosaic_0001>
module attributes {stable_mosaic.version = 11 : i64} {
  func.func @aux_fused_kernel(%arg0: i32, %arg1: memref<2x16x196xf32, #tpu.memory_space<vmem>>, %arg2: memref<196x16xf32, #tpu.memory_space<vmem>>, %arg3: memref<16x128xf32, #tpu.memory_space<vmem>>, %arg4: memref<1x128xf32, #tpu.memory_space<vmem>>, %arg5: memref<8x128x1024xbf16, #tpu.memory_space<vmem>>, %arg6: memref<1x1024xf32, #tpu.memory_space<vmem>>, %arg7: memref<1024x10xbf16, #tpu.memory_space<vmem>>, %arg8: memref<1x10xf32, #tpu.memory_space<vmem>>, %arg9: memref<2x10xf32, #tpu.memory_space<vmem>>, %arg10: memref<2x16x128xf32, #tpu.memory_space<vmem>>, %arg11: memref<2x1024xf32, #tpu.memory_space<vmem>>) attributes {dimension_semantics = [#tpu.dimension_semantics<arbitrary>], iteration_bounds = array<i64: 2>, scalar_prefetch = 0 : i64, scratch_operands = 2 : i64, tpu.core_type = #tpu.core_type<tc>, window_params = [{pipeline_mode = #tpu.pipeline_mode<synchronous>, transform_indices = @transform_0, window_bounds = array<i64: 2, 16, 196>}, {pipeline_mode = #tpu.pipeline_mode<synchronous>, transform_indices = @transform_1, window_bounds = array<i64: 196, 16>}, {pipeline_mode = #tpu.pipeline_mode<synchronous>, transform_indices = @transform_2, window_bounds = array<i64: 16, 128>}, {pipeline_mode = #tpu.pipeline_mode<synchronous>, transform_indices = @transform_3, window_bounds = array<i64: 1, 128>}, {transform_indices = @transform_4, window_bounds = array<i64: 8, 128, 1024>}, {pipeline_mode = #tpu.pipeline_mode<synchronous>, transform_indices = @transform_5, window_bounds = array<i64: 1, 1024>}, {pipeline_mode = #tpu.pipeline_mode<synchronous>, transform_indices = @transform_6, window_bounds = array<i64: 1024, 10>}, {pipeline_mode = #tpu.pipeline_mode<synchronous>, transform_indices = @transform_7, window_bounds = array<i64: 1, 10>}, {pipeline_mode = #tpu.pipeline_mode<synchronous>, transform_indices = @transform_8, window_bounds = array<i64: 2, 10>}]} {
    %c0_i32 = arith.constant 0 : i32
    %0 = arith.cmpi eq, %arg0, %c0_i32 : i32
    %1 = arith.extui %0 : i1 to i32
    %c0_i32_0 = arith.constant 0 : i32
    %2 = arith.cmpi ne, %1, %c0_i32_0 : i32
    scf.if %2 {
      %cst_31 = arith.constant 0.000000e+00 : f32
      %68 = vector.broadcast %cst_31 : f32 to vector<2x1024xf32>
      %c0_32 = arith.constant 0 : index
      %c0_33 = arith.constant 0 : index
      %69 = vector.load %arg11[%c0_32, %c0_33] : memref<2x1024xf32, #tpu.memory_space<vmem>>, vector<2x1024xf32>
      tpu.vector_store %arg11[%c0_32, %c0_33], %68 {strides = array<i32>} : memref<2x1024xf32, #tpu.memory_space<vmem>>, vector<2x1024xf32>,
      %c0_34 = arith.constant 0 : index
      %c0_35 = arith.constant 0 : index
      %c0_36 = arith.constant 0 : index
      %70 = vector.load %arg1[%c0_34, %c0_35, %c0_36] : memref<2x16x196xf32, #tpu.memory_space<vmem>>, vector<1x16x196xf32>
      %71 = vector.shape_cast %70 : vector<1x16x196xf32> to vector<16x196xf32>
      %c0_37 = arith.constant 0 : index
      %c0_38 = arith.constant 0 : index
      %72 = vector.load %arg2[%c0_37, %c0_38] : memref<196x16xf32, #tpu.memory_space<vmem>>, vector<196x16xf32>
      %cst_39 = arith.constant dense<0.000000e+00> : vector<16x16xf32>
      %73 = tpu.matmul %71, %72, %cst_39 {dimension_numbers = #tpu.dot_dimension_numbers<[1], [0], [0], [1], [0, 0, 1, 1], [], []>} : vector<16x196xf32>, vector<196x16xf32>, vector<16x16xf32> -> vector<16x16xf32>
      %74 = tpu.transpose %73, [1, 0] : vector<16x16xf32> -> vector<16x16xf32>
      %c0_40 = arith.constant 0 : index
      %c0_41 = arith.constant 0 : index
      %75 = vector.load %arg3[%c0_40, %c0_41] : memref<16x128xf32, #tpu.memory_space<vmem>>, vector<16x128xf32>
      %cst_42 = arith.constant dense<0.000000e+00> : vector<16x128xf32>
      %76 = tpu.matmul %74, %75, %cst_42 {dimension_numbers = #tpu.dot_dimension_numbers<[1], [0], [0], [1], [0, 0, 1, 1], [], []>} : vector<16x16xf32>, vector<16x128xf32>, vector<16x128xf32> -> vector<16x128xf32>
      %c0_43 = arith.constant 0 : index
      %c0_44 = arith.constant 0 : index
      %77 = vector.load %arg4[%c0_43, %c0_44] : memref<1x128xf32, #tpu.memory_space<vmem>>, vector<1x128xf32>
      %78 = vector.broadcast %77 : vector<1x128xf32> to vector<16x128xf32>
      %79 = arith.addf %76, %78 : vector<16x128xf32>
      %cst_45 = arith.constant 0.000000e+00 : f32
      %80 = vector.broadcast %cst_45 : f32 to vector<16x128xf32>
      %81 = arith.maximumf %79, %80 : vector<16x128xf32>
      %c0_46 = arith.constant 0 : index
      %c0_47 = arith.constant 0 : index
      %c0_48 = arith.constant 0 : index
      %82 = vector.load %arg10[%c0_46, %c0_47, %c0_48] : memref<2x16x128xf32, #tpu.memory_space<vmem>>, vector<1x16x128xf32>
      %83 = vector.shape_cast %82 : vector<1x16x128xf32> to vector<16x128xf32>
      %84 = vector.shape_cast %81 : vector<16x128xf32> to vector<1x16x128xf32>
      tpu.vector_store %arg10[%c0_46, %c0_47, %c0_48], %84 {strides = array<i32>} : memref<2x16x128xf32, #tpu.memory_space<vmem>>, vector<1x16x128xf32>,
      %c1_49 = arith.constant 1 : index
      %c0_50 = arith.constant 0 : index
      %c0_51 = arith.constant 0 : index
      %85 = vector.load %arg1[%c1_49, %c0_50, %c0_51] : memref<2x16x196xf32, #tpu.memory_space<vmem>>, vector<1x16x196xf32>
      %86 = vector.shape_cast %85 : vector<1x16x196xf32> to vector<16x196xf32>
      %c0_52 = arith.constant 0 : index
      %c0_53 = arith.constant 0 : index
      %87 = vector.load %arg2[%c0_52, %c0_53] : memref<196x16xf32, #tpu.memory_space<vmem>>, vector<196x16xf32>
      %cst_54 = arith.constant dense<0.000000e+00> : vector<16x16xf32>
      %88 = tpu.matmul %86, %87, %cst_54 {dimension_numbers = #tpu.dot_dimension_numbers<[1], [0], [0], [1], [0, 0, 1, 1], [], []>} : vector<16x196xf32>, vector<196x16xf32>, vector<16x16xf32> -> vector<16x16xf32>
      %89 = tpu.transpose %88, [1, 0] : vector<16x16xf32> -> vector<16x16xf32>
      %c0_55 = arith.constant 0 : index
      %c0_56 = arith.constant 0 : index
      %90 = vector.load %arg3[%c0_55, %c0_56] : memref<16x128xf32, #tpu.memory_space<vmem>>, vector<16x128xf32>
      %cst_57 = arith.constant dense<0.000000e+00> : vector<16x128xf32>
      %91 = tpu.matmul %89, %90, %cst_57 {dimension_numbers = #tpu.dot_dimension_numbers<[1], [0], [0], [1], [0, 0, 1, 1], [], []>} : vector<16x16xf32>, vector<16x128xf32>, vector<16x128xf32> -> vector<16x128xf32>
      %c0_58 = arith.constant 0 : index
      %c0_59 = arith.constant 0 : index
      %92 = vector.load %arg4[%c0_58, %c0_59] : memref<1x128xf32, #tpu.memory_space<vmem>>, vector<1x128xf32>
      %93 = vector.broadcast %92 : vector<1x128xf32> to vector<16x128xf32>
      %94 = arith.addf %91, %93 : vector<16x128xf32>
      %cst_60 = arith.constant 0.000000e+00 : f32
      %95 = vector.broadcast %cst_60 : f32 to vector<16x128xf32>
      %96 = arith.maximumf %94, %95 : vector<16x128xf32>
      %c1_61 = arith.constant 1 : index
      %c0_62 = arith.constant 0 : index
      %c0_63 = arith.constant 0 : index
      %97 = vector.load %arg10[%c1_61, %c0_62, %c0_63] : memref<2x16x128xf32, #tpu.memory_space<vmem>>, vector<1x16x128xf32>
      %98 = vector.shape_cast %97 : vector<1x16x128xf32> to vector<16x128xf32>
      %99 = vector.shape_cast %96 : vector<16x128xf32> to vector<1x16x128xf32>
      tpu.vector_store %arg10[%c1_61, %c0_62, %c0_63], %99 {strides = array<i32>} : memref<2x16x128xf32, #tpu.memory_space<vmem>>, vector<1x16x128xf32>,
    } else {
    }
    %c8_i32 = arith.constant 8 : i32
    %3 = arith.muli %arg0, %c8_i32 : i32
    %4 = tpu.assume_multiple %3, 8 : i32
    %c0 = arith.constant 0 : index
    %5 = arith.index_cast %4 : i32 to index
    %c0_1 = arith.constant 0 : index
    %6 = vector.load %arg10[%c0, %5, %c0_1] : memref<2x16x128xf32, #tpu.memory_space<vmem>>, vector<2x8x128xf32>
    %c0_2 = arith.constant 0 : index
    %c0_3 = arith.constant 0 : index
    %7 = vector.load %arg11[%c0_2, %c0_3] : memref<2x1024xf32, #tpu.memory_space<vmem>>, vector<2x1024xf32>
    %8 = vector.extract_strided_slice %6 {offsets = [0, 0, 0], sizes = [2, 1, 128], strides = [1, 1, 1]} : vector<2x8x128xf32> to vector<2x1x128xf32>
    %9 = vector.shape_cast %8 : vector<2x1x128xf32> to vector<2x128xf32>
    %10 = arith.truncf %9 : vector<2x128xf32> to vector<2x128xbf16>
    %c0_4 = arith.constant 0 : index
    %c0_5 = arith.constant 0 : index
    %c0_6 = arith.constant 0 : index
    %11 = vector.load %arg5[%c0_4, %c0_5, %c0_6] : memref<8x128x1024xbf16, #tpu.memory_space<vmem>>, vector<1x128x1024xbf16>
    %12 = vector.shape_cast %11 : vector<1x128x1024xbf16> to vector<128x1024xbf16>
    %cst = arith.constant dense<0.000000e+00> : vector<2x1024xf32>
    %13 = tpu.matmul %10, %12, %cst {dimension_numbers = #tpu.dot_dimension_numbers<[1], [0], [0], [1], [0, 0, 1, 1], [], []>} : vector<2x128xbf16>, vector<128x1024xbf16>, vector<2x1024xf32> -> vector<2x1024xf32>
    %14 = arith.addf %7, %13 : vector<2x1024xf32>
    %15 = vector.extract_strided_slice %6 {offsets = [0, 1, 0], sizes = [2, 1, 128], strides = [1, 1, 1]} : vector<2x8x128xf32> to vector<2x1x128xf32>
    %16 = vector.shape_cast %15 : vector<2x1x128xf32> to vector<2x128xf32>
    %17 = arith.truncf %16 : vector<2x128xf32> to vector<2x128xbf16>
    %c1 = arith.constant 1 : index
    %c0_7 = arith.constant 0 : index
    %c0_8 = arith.constant 0 : index
    %18 = vector.load %arg5[%c1, %c0_7, %c0_8] : memref<8x128x1024xbf16, #tpu.memory_space<vmem>>, vector<1x128x1024xbf16>
    %19 = vector.shape_cast %18 : vector<1x128x1024xbf16> to vector<128x1024xbf16>
    %cst_9 = arith.constant dense<0.000000e+00> : vector<2x1024xf32>
    %20 = tpu.matmul %17, %19, %cst_9 {dimension_numbers = #tpu.dot_dimension_numbers<[1], [0], [0], [1], [0, 0, 1, 1], [], []>} : vector<2x128xbf16>, vector<128x1024xbf16>, vector<2x1024xf32> -> vector<2x1024xf32>
    %21 = arith.addf %14, %20 : vector<2x1024xf32>
    %22 = vector.extract_strided_slice %6 {offsets = [0, 2, 0], sizes = [2, 1, 128], strides = [1, 1, 1]} : vector<2x8x128xf32> to vector<2x1x128xf32>
    %23 = vector.shape_cast %22 : vector<2x1x128xf32> to vector<2x128xf32>
    %24 = arith.truncf %23 : vector<2x128xf32> to vector<2x128xbf16>
    %c2 = arith.constant 2 : index
    %c0_10 = arith.constant 0 : index
    %c0_11 = arith.constant 0 : index
    %25 = vector.load %arg5[%c2, %c0_10, %c0_11] : memref<8x128x1024xbf16, #tpu.memory_space<vmem>>, vector<1x128x1024xbf16>
    %26 = vector.shape_cast %25 : vector<1x128x1024xbf16> to vector<128x1024xbf16>
    %cst_12 = arith.constant dense<0.000000e+00> : vector<2x1024xf32>
    %27 = tpu.matmul %24, %26, %cst_12 {dimension_numbers = #tpu.dot_dimension_numbers<[1], [0], [0], [1], [0, 0, 1, 1], [], []>} : vector<2x128xbf16>, vector<128x1024xbf16>, vector<2x1024xf32> -> vector<2x1024xf32>
    %28 = arith.addf %21, %27 : vector<2x1024xf32>
    %29 = vector.extract_strided_slice %6 {offsets = [0, 3, 0], sizes = [2, 1, 128], strides = [1, 1, 1]} : vector<2x8x128xf32> to vector<2x1x128xf32>
    %30 = vector.shape_cast %29 : vector<2x1x128xf32> to vector<2x128xf32>
    %31 = arith.truncf %30 : vector<2x128xf32> to vector<2x128xbf16>
    %c3 = arith.constant 3 : index
    %c0_13 = arith.constant 0 : index
    %c0_14 = arith.constant 0 : index
    %32 = vector.load %arg5[%c3, %c0_13, %c0_14] : memref<8x128x1024xbf16, #tpu.memory_space<vmem>>, vector<1x128x1024xbf16>
    %33 = vector.shape_cast %32 : vector<1x128x1024xbf16> to vector<128x1024xbf16>
    %cst_15 = arith.constant dense<0.000000e+00> : vector<2x1024xf32>
    %34 = tpu.matmul %31, %33, %cst_15 {dimension_numbers = #tpu.dot_dimension_numbers<[1], [0], [0], [1], [0, 0, 1, 1], [], []>} : vector<2x128xbf16>, vector<128x1024xbf16>, vector<2x1024xf32> -> vector<2x1024xf32>
    %35 = arith.addf %28, %34 : vector<2x1024xf32>
    %36 = vector.extract_strided_slice %6 {offsets = [0, 4, 0], sizes = [2, 1, 128], strides = [1, 1, 1]} : vector<2x8x128xf32> to vector<2x1x128xf32>
    %37 = vector.shape_cast %36 : vector<2x1x128xf32> to vector<2x128xf32>
    %38 = arith.truncf %37 : vector<2x128xf32> to vector<2x128xbf16>
    %c4 = arith.constant 4 : index
    %c0_16 = arith.constant 0 : index
    %c0_17 = arith.constant 0 : index
    %39 = vector.load %arg5[%c4, %c0_16, %c0_17] : memref<8x128x1024xbf16, #tpu.memory_space<vmem>>, vector<1x128x1024xbf16>
    %40 = vector.shape_cast %39 : vector<1x128x1024xbf16> to vector<128x1024xbf16>
    %cst_18 = arith.constant dense<0.000000e+00> : vector<2x1024xf32>
    %41 = tpu.matmul %38, %40, %cst_18 {dimension_numbers = #tpu.dot_dimension_numbers<[1], [0], [0], [1], [0, 0, 1, 1], [], []>} : vector<2x128xbf16>, vector<128x1024xbf16>, vector<2x1024xf32> -> vector<2x1024xf32>
    %42 = arith.addf %35, %41 : vector<2x1024xf32>
    %43 = vector.extract_strided_slice %6 {offsets = [0, 5, 0], sizes = [2, 1, 128], strides = [1, 1, 1]} : vector<2x8x128xf32> to vector<2x1x128xf32>
    %44 = vector.shape_cast %43 : vector<2x1x128xf32> to vector<2x128xf32>
    %45 = arith.truncf %44 : vector<2x128xf32> to vector<2x128xbf16>
    %c5 = arith.constant 5 : index
    %c0_19 = arith.constant 0 : index
    %c0_20 = arith.constant 0 : index
    %46 = vector.load %arg5[%c5, %c0_19, %c0_20] : memref<8x128x1024xbf16, #tpu.memory_space<vmem>>, vector<1x128x1024xbf16>
    %47 = vector.shape_cast %46 : vector<1x128x1024xbf16> to vector<128x1024xbf16>
    %cst_21 = arith.constant dense<0.000000e+00> : vector<2x1024xf32>
    %48 = tpu.matmul %45, %47, %cst_21 {dimension_numbers = #tpu.dot_dimension_numbers<[1], [0], [0], [1], [0, 0, 1, 1], [], []>} : vector<2x128xbf16>, vector<128x1024xbf16>, vector<2x1024xf32> -> vector<2x1024xf32>
    %49 = arith.addf %42, %48 : vector<2x1024xf32>
    %50 = vector.extract_strided_slice %6 {offsets = [0, 6, 0], sizes = [2, 1, 128], strides = [1, 1, 1]} : vector<2x8x128xf32> to vector<2x1x128xf32>
    %51 = vector.shape_cast %50 : vector<2x1x128xf32> to vector<2x128xf32>
    %52 = arith.truncf %51 : vector<2x128xf32> to vector<2x128xbf16>
    %c6 = arith.constant 6 : index
    %c0_22 = arith.constant 0 : index
    %c0_23 = arith.constant 0 : index
    %53 = vector.load %arg5[%c6, %c0_22, %c0_23] : memref<8x128x1024xbf16, #tpu.memory_space<vmem>>, vector<1x128x1024xbf16>
    %54 = vector.shape_cast %53 : vector<1x128x1024xbf16> to vector<128x1024xbf16>
    %cst_24 = arith.constant dense<0.000000e+00> : vector<2x1024xf32>
    %55 = tpu.matmul %52, %54, %cst_24 {dimension_numbers = #tpu.dot_dimension_numbers<[1], [0], [0], [1], [0, 0, 1, 1], [], []>} : vector<2x128xbf16>, vector<128x1024xbf16>, vector<2x1024xf32> -> vector<2x1024xf32>
    %56 = arith.addf %49, %55 : vector<2x1024xf32>
    %57 = vector.extract_strided_slice %6 {offsets = [0, 7, 0], sizes = [2, 1, 128], strides = [1, 1, 1]} : vector<2x8x128xf32> to vector<2x1x128xf32>
    %58 = vector.shape_cast %57 : vector<2x1x128xf32> to vector<2x128xf32>
    %59 = arith.truncf %58 : vector<2x128xf32> to vector<2x128xbf16>
    %c7 = arith.constant 7 : index
    %c0_25 = arith.constant 0 : index
    %c0_26 = arith.constant 0 : index
    %60 = vector.load %arg5[%c7, %c0_25, %c0_26] : memref<8x128x1024xbf16, #tpu.memory_space<vmem>>, vector<1x128x1024xbf16>
    %61 = vector.shape_cast %60 : vector<1x128x1024xbf16> to vector<128x1024xbf16>
    %cst_27 = arith.constant dense<0.000000e+00> : vector<2x1024xf32>
    %62 = tpu.matmul %59, %61, %cst_27 {dimension_numbers = #tpu.dot_dimension_numbers<[1], [0], [0], [1], [0, 0, 1, 1], [], []>} : vector<2x128xbf16>, vector<128x1024xbf16>, vector<2x1024xf32> -> vector<2x1024xf32>
    %63 = arith.addf %56, %62 : vector<2x1024xf32>
    %c0_28 = arith.constant 0 : index
    %c0_29 = arith.constant 0 : index
    %64 = vector.load %arg11[%c0_28, %c0_29] : memref<2x1024xf32, #tpu.memory_space<vmem>>, vector<2x1024xf32>
    tpu.vector_store %arg11[%c0_28, %c0_29], %63 {strides = array<i32>} : memref<2x1024xf32, #tpu.memory_space<vmem>>, vector<2x1024xf32>,
    %c1_i32 = arith.constant 1 : i32
    %65 = arith.cmpi eq, %arg0, %c1_i32 : i32
    %66 = arith.extui %65 : i1 to i32
    %c0_i32_30 = arith.constant 0 : i32
    %67 = arith.cmpi ne, %66, %c0_i32_30 : i32
    scf.if %67 {
      %c0_31 = arith.constant 0 : index
      %c0_32 = arith.constant 0 : index
      %68 = vector.load %arg11[%c0_31, %c0_32] : memref<2x1024xf32, #tpu.memory_space<vmem>>, vector<2x1024xf32>
      %c0_33 = arith.constant 0 : index
      %c0_34 = arith.constant 0 : index
      %69 = vector.load %arg6[%c0_33, %c0_34] : memref<1x1024xf32, #tpu.memory_space<vmem>>, vector<1x1024xf32>
      %70 = vector.broadcast %69 : vector<1x1024xf32> to vector<2x1024xf32>
      %71 = arith.addf %68, %70 : vector<2x1024xf32>
      %72 = arith.truncf %71 : vector<2x1024xf32> to vector<2x1024xbf16>
      %c0_35 = arith.constant 0 : index
      %c0_36 = arith.constant 0 : index
      %73 = vector.load %arg7[%c0_35, %c0_36] : memref<1024x10xbf16, #tpu.memory_space<vmem>>, vector<1024x10xbf16>
      %cst_37 = arith.constant dense<0.000000e+00> : vector<2x10xf32>
      %74 = tpu.matmul %72, %73, %cst_37 {dimension_numbers = #tpu.dot_dimension_numbers<[1], [0], [0], [1], [0, 0, 1, 1], [], []>} : vector<2x1024xbf16>, vector<1024x10xbf16>, vector<2x10xf32> -> vector<2x10xf32>
      %c0_38 = arith.constant 0 : index
      %c0_39 = arith.constant 0 : index
      %75 = vector.load %arg8[%c0_38, %c0_39] : memref<1x10xf32, #tpu.memory_space<vmem>>, vector<1x10xf32>
      %76 = vector.broadcast %75 : vector<1x10xf32> to vector<2x10xf32>
      %77 = arith.addf %74, %76 : vector<2x10xf32>
      %c0_40 = arith.constant 0 : index
      %c0_41 = arith.constant 0 : index
      %78 = vector.load %arg9[%c0_40, %c0_41] : memref<2x10xf32, #tpu.memory_space<vmem>>, vector<2x10xf32>
      tpu.vector_store %arg9[%c0_40, %c0_41], %77 {strides = array<i32>} : memref<2x10xf32, #tpu.memory_space<vmem>>, vector<2x10xf32>,
    } else {
    }
    return
  }
  func.func @transform_0(%arg0: i32) -> (i32, i32, i32) {
    %c0_i32 = arith.constant 0 : i32
    %c0_i32_0 = arith.constant 0 : i32
    %c0_i32_1 = arith.constant 0 : i32
    %c0_i32_2 = arith.constant 0 : i32
    return %c0_i32, %c0_i32_0, %c0_i32_1 : i32, i32, i32
  }
  func.func @transform_1(%arg0: i32) -> (i32, i32) {
    %c0_i32 = arith.constant 0 : i32
    %c0_i32_0 = arith.constant 0 : i32
    %c0_i32_1 = arith.constant 0 : i32
    return %c0_i32, %c0_i32_0 : i32, i32
  }
  func.func @transform_2(%arg0: i32) -> (i32, i32) {
    %c0_i32 = arith.constant 0 : i32
    %c0_i32_0 = arith.constant 0 : i32
    %c0_i32_1 = arith.constant 0 : i32
    return %c0_i32, %c0_i32_0 : i32, i32
  }
  func.func @transform_3(%arg0: i32) -> (i32, i32) {
    %c0_i32 = arith.constant 0 : i32
    %c0_i32_0 = arith.constant 0 : i32
    %c0_i32_1 = arith.constant 0 : i32
    return %c0_i32, %c0_i32_0 : i32, i32
  }
  func.func @transform_4(%arg0: i32) -> (i32, i32, i32) {
    %c0_i32 = arith.constant 0 : i32
    %c0_i32_0 = arith.constant 0 : i32
    %c0_i32_1 = arith.constant 0 : i32
    return %arg0, %c0_i32, %c0_i32_0 : i32, i32, i32
  }
  func.func @transform_5(%arg0: i32) -> (i32, i32) {
    %c0_i32 = arith.constant 0 : i32
    %c0_i32_0 = arith.constant 0 : i32
    %c0_i32_1 = arith.constant 0 : i32
    return %c0_i32, %c0_i32_0 : i32, i32
  }
  func.func @transform_6(%arg0: i32) -> (i32, i32) {
    %c0_i32 = arith.constant 0 : i32
    %c0_i32_0 = arith.constant 0 : i32
    %c0_i32_1 = arith.constant 0 : i32
    return %c0_i32, %c0_i32_0 : i32, i32
  }
  func.func @transform_7(%arg0: i32) -> (i32, i32) {
    %c0_i32 = arith.constant 0 : i32
    %c0_i32_0 = arith.constant 0 : i32
    %c0_i32_1 = arith.constant 0 : i32
    return %c0_i32, %c0_i32_0 : i32, i32
  }
  func.func @transform_8(%arg0: i32) -> (i32, i32) {
    %c0_i32 = arith.constant 0 : i32
    %c0_i32_0 = arith.constant 0 : i32
    %c0_i32_1 = arith.constant 0 : i32
    return %c0_i32, %c0_i32_0 : i32, i32
  }
}

</mosaic_0001>

<llo_original>
// kernel: tpu_custom_call.1
$region0: #{tpu_custom_call.1}
  #allocation0 [shape = 'u32[]', space=smem, size = 0x4, offset = 0x4, fixed_abs, tag = 'smem constant byte address 0x4 - core index']
  #allocation1 [shape = 'u32[144,128]{1,0:T(1,128)}', space=vmem, size = 0x12000, scoped, tag = 'internal scratch']
  #allocation2 [shape = 'f32[2,16,128]{2,1,0:T(8,128)}', space=vmem, size = 0x4000, scoped, tag = 'scratch operand']
  #allocation3 [shape = 'f32[2,1024]{1,0:T(2,128)}', space=vmem, size = 0x2000, scoped, tag = 'scratch operand']
  %s0 = inlined_call_operand.hbm [shape: f32[2,16,196], index: 0, kind: input, shape index: {}]
  %s1 = inlined_call_operand.vmem [shape: f32[196,16], index: 1, kind: input, shape index: {}]
  %s2 = inlined_call_operand.hbm [shape: f32[16,128], index: 2, kind: input, shape index: {}]
  %s3 = inlined_call_operand.hbm [shape: f32[1,128], index: 3, kind: input, shape index: {}]
  %s4 = inlined_call_operand.hbm [shape: bf16[16,128,1024], index: 4, kind: input, shape index: {}]
  %s5 = inlined_call_operand.hbm [shape: f32[1,1024], index: 5, kind: input, shape index: {}]
  %s6 = inlined_call_operand.vmem [shape: bf16[1024,10], index: 6, kind: input, shape index: {}]
  %s7 = inlined_call_operand.hbm [shape: f32[1,10], index: 7, kind: input, shape index: {}]
  %s8 = inlined_call_operand.hbm [shape: f32[2,10], index: 8, kind: output, shape index: {}]
  %s9 = sld [smem:[#allocation0]]
  $region97: #{tpu_custom_call.1} parent=0
    _
  %s11 = ssub.s32 1, %s9
  %s12 = scalar_select 0, %s11, %s9
  $region1: #{tpu_custom_call.1} parent=0
    #allocation4 [shape = 'u8[32768]{0}', space=vmem, size = 0x8000, scoped, tag = 'input window, operand 0, single buffered']
    #allocation5 [shape = 's32[2]{0}', space=sflag, size = 0x8, scoped, tag = 'scoped memory for tpu_custom_call.1']
    #allocation6 [shape = 's32[2]{0}', space=sflag, size = 0x8, scoped, tag = 'scoped memory for tpu_custom_call.1']
    #allocation7 [shape = 'u8[8192]{0}', space=vmem, size = 0x2000, scoped, tag = 'input window, operand 2, single buffered']
    #allocation8 [shape = 's32[1]{0}', space=sflag, size = 0x4, scoped, tag = 'scoped memory for tpu_custom_call.1']
    #allocation9 [shape = 'u8[512]{0}', space=vmem, size = 0x400, scoped, tag = 'input window, operand 3, single buffered']
    #allocation10 [shape = 'u8[4194304]{0}', space=vmem, size = 0x400000, scoped, tag = 'input window, operand 4']
    #allocation11 [shape = 's32[2]{0}', space=sflag, size = 0x8, scoped, tag = 'scoped memory for tpu_custom_call.1']
    #allocation12 [shape = 'u8[4096]{0}', space=vmem, size = 0x1000, scoped, tag = 'input window, operand 5, single buffered']
    #allocation13 [shape = 'u8[512]{0}', space=vmem, size = 0x400, scoped, tag = 'input window, operand 7, single buffered']
    #allocation14 [shape = 's32[1]{0}', space=sflag, size = 0x4, scoped, tag = 'scoped memory for tpu_custom_call.1']
    #allocation15 [shape = 'u8[1024]{0}', space=vmem, size = 0x400, scoped, tag = 'output window, operand 0, single buffered']
    %13 = vsyncpa [#allocation5], 0
    %14 = vsyncpa [#allocation8], 0
    %15 = vsyncpa [#allocation11], 0
    %s16 = scalar_lea.sflag [#allocation11], 1
    %17 = vsyncpa %s16, 0
    %18 = vsyncpa [#allocation14], 0
    %19 = vsyncpa [#allocation6], 0
    loop: start=0, step=1, limit=4
    $region2: #{tpu_custom_call.1} parent=1 // loop_pre_header
      _
    $region3: #{tpu_custom_call.1} parent=1 // loop_header
      %s21 = sphi 0, %s25
      %p22 = scmp.ge.s32.totalorder %s21, 4
      %s29 = sphi 0, %s29
      %s31 = sphi 0, %s29
      %s32 = sphi 0, %s31
      %s46 = sphi 0, %s32
      %s50 = sphi 0, %s50
      %s52 = sphi 0, %s50
      %s53 = sphi 0, %s52
      %s67 = sphi 0, %s53
      %s71 = sphi 0, %s71
      %s73 = sphi 0, %s71
      %s74 = sphi 0, %s73
      %s88 = sphi 0, %s74
      %s92 = sphi 0, %s92
      %s94 = sphi 0, %s92
      %s95 = sphi 0, %s94
      %s109 = sphi 0, %s95
      %s115 = sphi 0, %s117
      %s118 = sphi 0, %s115
      %s119 = sphi 0, %s118
      %s135 = sphi 0, %s119
      %s139 = sphi 0, %s139
      %s141 = sphi 0, %s139
      %s142 = sphi 0, %s141
      %s156 = sphi 0, %s142
      %s160 = sphi 0, %s160
      %s162 = sphi 0, %s160
      %s163 = sphi 0, %s162
      %s177 = sphi 0, %s163
      %s181 = sphi 0, %s181
      %s183 = sphi 0, %s181
      %s184 = sphi 0, %s183
      %s198 = sphi 0, %s184
      %s202 = sphi 0, %s202
      %s204 = sphi 0, %s202
      %s205 = sphi 0, %s204
      %s219 = sphi 0, %s205
    $region4: #{tpu_custom_call.1} parent=1 // loop_header_branch
      %24 = sbr.rel (%p22) target = $region8
    $region5: #{tpu_custom_call.1} parent=1 // loop_body
      %s26 = ssub.s32 %s21, 1
      %s27 = ssub.s32 %s21, 2
      %s28 = sadd.s32 %s21, 1
      %s30 = sadd.s32 %s29, 1
      %p33 = scmp.eq.s32.totalorder %s21, 1
      %p34 = scmp.ne.s32.totalorder %s29, %s31
      %p35 = scmp.eq.s32.totalorder %s21, 0
      %p36 = por %p34, %p35
      %p37 = scmp.ne.s32.totalorder %s29, %s31
      %p38 = scmp.eq.s32.totalorder %s26, 1
      %p39 = por %p37, %p38
      %p40 = scmp.ne.s32.totalorder %s31, %s32
      %p41 = scmp.eq.s32.totalorder %s26, 0
      %p42 = por %p40, %p41
      %p43 = scmp.ne.s32.totalorder %s31, %s32
      %p44 = scmp.eq.s32.totalorder %s27, 1
      %p45 = por %p43, %p44
      %p47 = scmp.ne.s32.totalorder %s32, %s46
      %p48 = scmp.eq.s32.totalorder %s27, 0
      %p49 = por %p47, %p48
      %s51 = sadd.s32 %s50, 1
      %p54 = scmp.eq.s32.totalorder %s21, 1
      %p55 = scmp.ne.s32.totalorder %s50, %s52
      %p56 = scmp.eq.s32.totalorder %s21, 0
      %p57 = por %p55, %p56
      %p58 = scmp.ne.s32.totalorder %s50, %s52
      %p59 = scmp.eq.s32.totalorder %s26, 1
      %p60 = por %p58, %p59
      %p61 = scmp.ne.s32.totalorder %s52, %s53
      %p62 = scmp.eq.s32.totalorder %s26, 0
      %p63 = por %p61, %p62
      %p64 = scmp.ne.s32.totalorder %s52, %s53
      %p65 = scmp.eq.s32.totalorder %s27, 1
      %p66 = por %p64, %p65
      %p68 = scmp.ne.s32.totalorder %s53, %s67
      %p69 = scmp.eq.s32.totalorder %s27, 0
      %p70 = por %p68, %p69
      %s72 = sadd.s32 %s71, 1
      %p75 = scmp.eq.s32.totalorder %s21, 1
      %p76 = scmp.ne.s32.totalorder %s71, %s73
      %p77 = scmp.eq.s32.totalorder %s21, 0
      %p78 = por %p76, %p77
      %p79 = scmp.ne.s32.totalorder %s71, %s73
      %p80 = scmp.eq.s32.totalorder %s26, 1
      %p81 = por %p79, %p80
      %p82 = scmp.ne.s32.totalorder %s73, %s74
      %p83 = scmp.eq.s32.totalorder %s26, 0
      %p84 = por %p82, %p83
      %p85 = scmp.ne.s32.totalorder %s73, %s74
      %p86 = scmp.eq.s32.totalorder %s27, 1
      %p87 = por %p85, %p86
      %p89 = scmp.ne.s32.totalorder %s74, %s88
      %p90 = scmp.eq.s32.totalorder %s27, 0
      %p91 = por %p89, %p90
      %s93 = sadd.s32 %s92, 1
      %p96 = scmp.eq.s32.totalorder %s21, 1
      %p97 = scmp.ne.s32.totalorder %s92, %s94
      %p98 = scmp.eq.s32.totalorder %s21, 0
      %p99 = por %p97, %p98
      %p100 = scmp.ne.s32.totalorder %s92, %s94
      %p101 = scmp.eq.s32.totalorder %s26, 1
      %p102 = por %p100, %p101
      %p103 = scmp.ne.s32.totalorder %s94, %s95
      %p104 = scmp.eq.s32.totalorder %s26, 0
      %p105 = por %p103, %p104
      %p106 = scmp.ne.s32.totalorder %s94, %s95
      %p107 = scmp.eq.s32.totalorder %s27, 1
      %p108 = por %p106, %p107
      %p110 = scmp.ne.s32.totalorder %s95, %s109
      %p111 = scmp.eq.s32.totalorder %s27, 0
      %p112 = por %p110, %p111
      %s113 = ssub.s32 %s21, %s28
      %p114 = scmp.eq.s32.totalorder %s113, 0
      %s116 = sadd.s32 %s115, 1
      %s117 = scalar_select %p114, %s115, %s116
      %p120 = pneg %p114
      %p121 = scmp.eq.s32.totalorder %s21, 1
      %p122 = por %p120, %p121
      %p123 = scmp.ne.s32.totalorder %s115, %s118
      %p124 = scmp.eq.s32.totalorder %s21, 0
      %p125 = por %p123, %p124
      %p126 = scmp.ne.s32.totalorder %s115, %s118
      %p127 = scmp.eq.s32.totalorder %s26, 1
      %p128 = por %p126, %p127
      %p129 = scmp.ne.s32.totalorder %s118, %s119
      %p130 = scmp.eq.s32.totalorder %s26, 0
      %p131 = por %p129, %p130
      %p132 = scmp.ne.s32.totalorder %s118, %s119
      %p133 = scmp.eq.s32.totalorder %s27, 1
      %p134 = por %p132, %p133
      %p136 = scmp.ne.s32.totalorder %s119, %s135
      %p137 = scmp.eq.s32.totalorder %s27, 0
      %p138 = por %p136, %p137
      %s140 = sadd.s32 %s139, 1
      %p143 = scmp.eq.s32.totalorder %s21, 1
      %p144 = scmp.ne.s32.totalorder %s139, %s141
      %p145 = scmp.eq.s32.totalorder %s21, 0
      %p146 = por %p144, %p145
      %p147 = scmp.ne.s32.totalorder %s139, %s141
      %p148 = scmp.eq.s32.totalorder %s26, 1
      %p149 = por %p147, %p148
      %p150 = scmp.ne.s32.totalorder %s141, %s142
      %p151 = scmp.eq.s32.totalorder %s26, 0
      %p152 = por %p150, %p151
      %p153 = scmp.ne.s32.totalorder %s141, %s142
      %p154 = scmp.eq.s32.totalorder %s27, 1
      %p155 = por %p153, %p154
      %p157 = scmp.ne.s32.totalorder %s142, %s156
      %p158 = scmp.eq.s32.totalorder %s27, 0
      %p159 = por %p157, %p158
      %s161 = sadd.s32 %s160, 1
      %p164 = scmp.eq.s32.totalorder %s21, 1
      %p165 = scmp.ne.s32.totalorder %s160, %s162
      %p166 = scmp.eq.s32.totalorder %s21, 0
      %p167 = por %p165, %p166
      %p168 = scmp.ne.s32.totalorder %s160, %s162
      %p169 = scmp.eq.s32.totalorder %s26, 1
      %p170 = por %p168, %p169
      %p171 = scmp.ne.s32.totalorder %s162, %s163
      %p172 = scmp.eq.s32.totalorder %s26, 0
      %p173 = por %p171, %p172
      %p174 = scmp.ne.s32.totalorder %s162, %s163
      %p175 = scmp.eq.s32.totalorder %s27, 1
      %p176 = por %p174, %p175
      %p178 = scmp.ne.s32.totalorder %s163, %s177
      %p179 = scmp.eq.s32.totalorder %s27, 0
      %p180 = por %p178, %p179
      %s182 = sadd.s32 %s181, 1
      %p185 = scmp.eq.s32.totalorder %s21, 1
      %p186 = scmp.ne.s32.totalorder %s181, %s183
      %p187 = scmp.eq.s32.totalorder %s21, 0
      %p188 = por %p186, %p187
      %p189 = scmp.ne.s32.totalorder %s181, %s183
      %p190 = scmp.eq.s32.totalorder %s26, 1
      %p191 = por %p189, %p190
      %p192 = scmp.ne.s32.totalorder %s183, %s184
      %p193 = scmp.eq.s32.totalorder %s26, 0
      %p194 = por %p192, %p193
      %p195 = scmp.ne.s32.totalorder %s183, %s184
      %p196 = scmp.eq.s32.totalorder %s27, 1
      %p197 = por %p195, %p196
      %p199 = scmp.ne.s32.totalorder %s184, %s198
      %p200 = scmp.eq.s32.totalorder %s27, 0
      %p201 = por %p199, %p200
      %s203 = sadd.s32 %s202, 1
      %p206 = scmp.eq.s32.totalorder %s21, 1
      %p207 = scmp.ne.s32.totalorder %s202, %s204
      %p208 = scmp.eq.s32.totalorder %s21, 0
      %p209 = por %p207, %p208
      %p210 = scmp.ne.s32.totalorder %s202, %s204
      %p211 = scmp.eq.s32.totalorder %s26, 1
      %p212 = por %p210, %p211
      %p213 = scmp.ne.s32.totalorder %s204, %s205
      %p214 = scmp.eq.s32.totalorder %s26, 0
      %p215 = por %p213, %p214
      %p216 = scmp.ne.s32.totalorder %s204, %s205
      %p217 = scmp.eq.s32.totalorder %s27, 1
      %p218 = por %p216, %p217
      %p220 = scmp.ne.s32.totalorder %s205, %s219
      %p221 = scmp.eq.s32.totalorder %s27, 0
      %p222 = por %p220, %p221
      %p223 = scmp.le.s32.totalorder 1, %s21
      %p224 = scmp.lt.s32.totalorder %s21, 3
      %p225 = pnand %p223, %p224
      %p226 = pneg %p225
      // Predicated region
      $region9: #{tpu_custom_call.1} parent=5 // pred_check
        _
      $region10: #{tpu_custom_call.1} parent=5 // pred_check_branch
        %228 = sbr.rel (%p225) target = $region12
      $region11: #{tpu_custom_call.1} parent=5 // pred_region
        %s229 = ssub.s32 %s21, 1
        // Predicated region
        $region13: #{tpu_custom_call.1} parent=11 // pred_check
          %p230 = pneg %p42
        $region14: #{tpu_custom_call.1} parent=11 // pred_check_branch
          %232 = sbr.rel (%p230) target = $region16
        $region15: #{tpu_custom_call.1} parent=11 // pred_region
          %s234 = ssub.s32 1024, 1024
          %235 = vsyncadd [#allocation5], %s234
          %s236 = sshll.u32 [#allocation4], 4
          %s237 = int_to_ptr.vmem [resolvable:$true] %s236
          %242 = dma.hbm_to_vmem [thread:$0]  %s0, 1024, %s237, [#allocation5], 256, 256, 16
        $region16: #{tpu_custom_call.1} parent=11 // pred_fallthru
          _
        // Predicated region
        $region17: #{tpu_custom_call.1} parent=11 // pred_check
          %p243 = pneg %p63
        $region18: #{tpu_custom_call.1} parent=11 // pred_check_branch
          %245 = sbr.rel (%p243) target = $region20
        $region19: #{tpu_custom_call.1} parent=11 // pred_region
          _
        $region20: #{tpu_custom_call.1} parent=11 // pred_fallthru
          _
        // Predicated region
        $region21: #{tpu_custom_call.1} parent=11 // pred_check
          %p246 = pneg %p84
        $region22: #{tpu_custom_call.1} parent=11 // pred_check_branch
          %248 = sbr.rel (%p246) target = $region24
        $region23: #{tpu_custom_call.1} parent=11 // pred_region
          %s250 = ssub.s32 256, 256
          %251 = vsyncadd [#allocation8], %s250
          %s252 = sshll.u32 [#allocation7], 4
          %s253 = int_to_ptr.vmem [resolvable:$true] %s252
          %258 = dma.hbm_to_vmem [thread:$0]  %s2, 256, %s253, [#allocation8], 128, 128, 8
        $region24: #{tpu_custom_call.1} parent=11 // pred_fallthru
          _
        // Predicated region
        $region25: #{tpu_custom_call.1} parent=11 // pred_check
          %p259 = pneg %p105
        $region26: #{tpu_custom_call.1} parent=11 // pred_check_branch
          %261 = sbr.rel (%p259) target = $region28
        $region27: #{tpu_custom_call.1} parent=11 // pred_region
          %s263 = ssub.s32 16, 16
          %264 = vsyncadd [#allocation8], %s263
          %s266 = sshll.u32 [#allocation9], 4
          %s267 = int_to_ptr.vmem [resolvable:$true] %s266
          %269 = dma.hbm_to_vmem [thread:$0]  %s3, 16, %s267, [#allocation8]
        $region28: #{tpu_custom_call.1} parent=11 // pred_fallthru
          _
        // Predicated region
        $region29: #{tpu_custom_call.1} parent=11 // pred_check
          %p270 = pneg %p152
        $region30: #{tpu_custom_call.1} parent=11 // pred_check_branch
          %272 = sbr.rel (%p270) target = $region32
        $region31: #{tpu_custom_call.1} parent=11 // pred_region
          %s274 = ssub.s32 128, 128
          %275 = vsyncadd [#allocation11], %s274
          %s277 = sshll.u32 [#allocation12], 4
          %s278 = int_to_ptr.vmem [resolvable:$true] %s277
          %280 = dma.hbm_to_vmem [thread:$0]  %s5, 128, %s278, [#allocation11]
        $region32: #{tpu_custom_call.1} parent=11 // pred_fallthru
          _
        // Predicated region
        $region33: #{tpu_custom_call.1} parent=11 // pred_check
          %p281 = pneg %p173
        $region34: #{tpu_custom_call.1} parent=11 // pred_check_branch
          %283 = sbr.rel (%p281) target = $region36
        $region35: #{tpu_custom_call.1} parent=11 // pred_region
          _
        $region36: #{tpu_custom_call.1} parent=11 // pred_fallthru
          _
        // Predicated region
        $region37: #{tpu_custom_call.1} parent=11 // pred_check
          %p284 = pneg %p194
        $region38: #{tpu_custom_call.1} parent=11 // pred_check_branch
          %286 = sbr.rel (%p284) target = $region40
        $region39: #{tpu_custom_call.1} parent=11 // pred_region
          %s288 = ssub.s32 16, 16
          %289 = vsyncadd [#allocation14], %s288
          %s291 = sshll.u32 [#allocation13], 4
          %s292 = int_to_ptr.vmem [resolvable:$true] %s291
          %294 = dma.hbm_to_vmem [thread:$0]  %s7, 16, %s292, [#allocation14]
        $region40: #{tpu_custom_call.1} parent=11 // pred_fallthru
          _
      $region12: #{tpu_custom_call.1} parent=5 // pred_fallthru
        _
      %p295 = scmp.lt.s32.totalorder %s21, 2
      // Predicated region
      $region41: #{tpu_custom_call.1} parent=5 // pred_check
        %p296 = pneg %p295
      $region42: #{tpu_custom_call.1} parent=5 // pred_check_branch
        %298 = sbr.rel (%p296) target = $region44
      $region43: #{tpu_custom_call.1} parent=5 // pred_region
        // Predicated region
        $region45: #{tpu_custom_call.1} parent=43 // pred_check
          %p299 = pneg %p125
        $region46: #{tpu_custom_call.1} parent=43 // pred_check_branch
          %301 = sbr.rel (%p299) target = $region48
        $region47: #{tpu_custom_call.1} parent=43 // pred_region
          %s302 = sand.u32 %s21, 1
          %s303 = scalar_lea.sflag [#allocation11], %s302
          %s304 = sand.u32 %s115, 1
          %s305 = smul.addr %s304, 4096
          %s306 = scalar_lea.vmem [#allocation10], %s305
          %s307 = smul.u32 8, %s21
          %s309 = ssub.s32 65536, 65536
          %310 = vsyncadd %s303, %s309
          %s311 = smul.addr %s307, 128
          %s312 = smul.addr %s311, 64
          %s313 = scalar_lea.hbm %s4, %s312
          %s314 = sshll.u32 %s306, 4
          %s315 = int_to_ptr.vmem [resolvable:$true] %s314
          %320 = dma.hbm_to_vmem [thread:$0]  %s313, 65536, %s315, %s303, 512, 512, 32
        $region48: #{tpu_custom_call.1} parent=43 // pred_fallthru
          _
      $region44: #{tpu_custom_call.1} parent=5 // pred_fallthru
        _
      %p321 = scmp.le.s32.totalorder 1, %s21
      %p322 = scmp.lt.s32.totalorder %s21, 3
      %p323 = pnand %p321, %p322
      %p324 = pneg %p323
      // Predicated region
      $region49: #{tpu_custom_call.1} parent=5 // pred_check
        _
      $region50: #{tpu_custom_call.1} parent=5 // pred_check_branch
        %326 = sbr.rel (%p323) target = $region52
      $region51: #{tpu_custom_call.1} parent=5 // pred_region
        %s327 = ssub.s32 %s21, 1
        // Predicated region
        $region53: #{tpu_custom_call.1} parent=51 // pred_check
          %p328 = pneg %p42
        $region54: #{tpu_custom_call.1} parent=51 // pred_check_branch
          %330 = sbr.rel (%p328) target = $region56
        $region55: #{tpu_custom_call.1} parent=51 // pred_region
          %331 = dma.done [#allocation5], 1024
        $region56: #{tpu_custom_call.1} parent=51 // pred_fallthru
          _
        // Predicated region
        $region57: #{tpu_custom_call.1} parent=51 // pred_check
          %p332 = pneg %p84
        $region58: #{tpu_custom_call.1} parent=51 // pred_check_branch
          %334 = sbr.rel (%p332) target = $region60
        $region59: #{tpu_custom_call.1} parent=51 // pred_region
          %335 = dma.done [#allocation8], 256
        $region60: #{tpu_custom_call.1} parent=51 // pred_fallthru
          _
        // Predicated region
        $region61: #{tpu_custom_call.1} parent=51 // pred_check
          %p336 = pneg %p105
        $region62: #{tpu_custom_call.1} parent=51 // pred_check_branch
          %338 = sbr.rel (%p336) target = $region64
        $region63: #{tpu_custom_call.1} parent=51 // pred_region
          %339 = dma.done [#allocation8], 16
        $region64: #{tpu_custom_call.1} parent=51 // pred_fallthru
          _
        %s340 = sand.u32 %s26, 1
        %s341 = scalar_lea.sflag [#allocation11], %s340
        %s342 = sand.u32 %s118, 1
        %s343 = smul.addr %s342, 4096
        %s344 = scalar_lea.vmem [#allocation10], %s343
        // Predicated region
        $region65: #{tpu_custom_call.1} parent=51 // pred_check
          %p345 = pneg %p131
        $region66: #{tpu_custom_call.1} parent=51 // pred_check_branch
          %347 = sbr.rel (%p345) target = $region68
        $region67: #{tpu_custom_call.1} parent=51 // pred_region
          %348 = dma.done %s341, 65536
        $region68: #{tpu_custom_call.1} parent=51 // pred_fallthru
          _
        // Predicated region
        $region69: #{tpu_custom_call.1} parent=51 // pred_check
          %p349 = pneg %p152
        $region70: #{tpu_custom_call.1} parent=51 // pred_check_branch
          %351 = sbr.rel (%p349) target = $region72
        $region71: #{tpu_custom_call.1} parent=51 // pred_region
          %352 = dma.done [#allocation11], 128
        $region72: #{tpu_custom_call.1} parent=51 // pred_fallthru
          _
        // Predicated region
        $region73: #{tpu_custom_call.1} parent=51 // pred_check
          %p353 = pneg %p194
        $region74: #{tpu_custom_call.1} parent=51 // pred_check_branch
          %355 = sbr.rel (%p353) target = $region76
        $region75: #{tpu_custom_call.1} parent=51 // pred_region
          %356 = dma.done [#allocation14], 16
        $region76: #{tpu_custom_call.1} parent=51 // pred_fallthru
          _
        %p357 = pneg %p42
        %p358 = pneg %p39
        %p359 = pneg %p63
        %p360 = pneg %p60
        %p361 = pneg %p84
        %p362 = pneg %p81
        %p363 = pneg %p105
        %p364 = pneg %p102
        %s365 = sand.u32 %s26, 1
        %s366 = scalar_lea.sflag [#allocation11], %s365
        %s367 = sand.u32 %s118, 1
        %s368 = smul.addr %s367, 4096
        %s369 = scalar_lea.vmem [#allocation10], %s368
        %p370 = pneg %p131
        %p371 = pneg %p128
        %p372 = pneg %p152
        %p373 = pneg %p149
        %p374 = pneg %p173
        %p375 = pneg %p170
        %p376 = pneg %p194
        %p377 = pneg %p191
        %p378 = pneg %p215
        %p379 = pneg %p212
        %s380 = smul.u32 8, %s26
        %p382 = scmp.eq.s32.totalorder %s26, 0
        // Predicated region
        $region77: #{tpu_custom_call.1} parent=51 // pred_check
          %p383 = pneg %p382
        $region78: #{tpu_custom_call.1} parent=51 // pred_check_branch
          %385 = sbr.rel (%p383) target = $region80
        $region79: #{tpu_custom_call.1} parent=51 // pred_region
          %386 = vst [vmem:[#allocation3] sm:$0xff] 0.0
          %387 = vst [vmem:[#allocation3 + $0x8] sm:$0xff] 0.0
          %v388 = vld [vmem:[#allocation4] sm:$0xff]
          %v389 = vld [vmem:[#allocation4 + $0x8] sm:$0xff]
          %v390 = vld [vmem:[#allocation4 + $0x10] sm:$0xff]
          %v391 = vld [vmem:[#allocation4 + $0x18] sm:$0xff]
          %v392 = vld [vmem:[%s1] sm:$0xff]
          %v393 = vld [vmem:[%s1 + $0x8] sm:$0xff]
          %v394 = vld [vmem:[%s1 + $0x10] sm:$0xff]
          %v395 = vld [vmem:[%s1 + $0x18] sm:$0xff]
          %v396 = vld [vmem:[%s1 + $0x20] sm:$0xff]
          %v397 = vld [vmem:[%s1 + $0x28] sm:$0xff]
          %v398 = vld [vmem:[%s1 + $0x30] sm:$0xff]
          %v399 = vld [vmem:[%s1 + $0x38] sm:$0xff]
          %v400 = vld [vmem:[%s1 + $0x40] sm:$0xff]
          %v401 = vld [vmem:[%s1 + $0x48] sm:$0xff]
          %v402 = vld [vmem:[%s1 + $0x50] sm:$0xff]
          %v403 = vld [vmem:[%s1 + $0x58] sm:$0xff]
          %v404 = vld [vmem:[%s1 + $0x60] sm:$0xff]
          %v405 = vld [vmem:[%s1 + $0x68] sm:$0xff]
          %v406 = vld [vmem:[%s1 + $0x70] sm:$0xff]
          %v407 = vld [vmem:[%s1 + $0x78] sm:$0xff]
          %v408 = vld [vmem:[%s1 + $0x80] sm:$0xff]
          %v409 = vld [vmem:[%s1 + $0x88] sm:$0xff]
          %v410 = vld [vmem:[%s1 + $0x90] sm:$0xff]
          %v411 = vld [vmem:[%s1 + $0x98] sm:$0xff]
          %v412 = vld [vmem:[%s1 + $0xa0] sm:$0xff]
          %v413 = vld [vmem:[%s1 + $0xa8] sm:$0xff]
          %v414 = vld [vmem:[%s1 + $0xb0] sm:$0xff]
          %v415 = vld [vmem:[%s1 + $0xb8] sm:$0xff]
          %v416 = vld [vmem:[%s1 + $0xc0] sm:$0xf]
          %vm417 = vcmask 556032
          %v419 = vsel %vm417, %v389, 0
          %v422 = vsel %vm417, %v391, 0
          %vm424 = vcmask 1043456
          %v426 = vsel %vm424, %v416, 0
          %428 = vmatprep.subr.mxu0 0.0
          %429 = vmatpush1.msra.mxu0 %v392
          %430 = vmatprep.subr.mxu0 0.0
          %431 = vmatpush1.msra.mxu0 %v393
          %432 = vmatprep.subr.mxu0 0.0
          %433 = vmatpush1.msra.mxu0 %v394
          %434 = vmatprep.subr.mxu0 0.0
          %435 = vmatpush1.msra.mxu0 %v395
          %436 = vmatprep.subr.mxu0 0.0
          %437 = vmatpush1.msra.mxu0 %v396
          %438 = vmatprep.subr.mxu0 0.0
          %439 = vmatpush1.msra.mxu0 %v397
          %440 = vmatprep.subr.mxu0 0.0
          %441 = vmatpush1.msra.mxu0 %v398
          %442 = vmatprep.subr.mxu0 0.0
          %443 = vmatpush1.msra.mxu0 %v399
          %444 = vmatprep.subr.mxu0 0.0
          %445 = vmatpush1.msra.mxu0 %v400
          %446 = vmatprep.subr.mxu0 0.0
          %447 = vmatpush1.msra.mxu0 %v401
          %448 = vmatprep.subr.mxu0 0.0
          %449 = vmatpush1.msra.mxu0 %v402
          %450 = vmatprep.subr.mxu0 0.0
          %451 = vmatpush1.msra.mxu0 %v403
          %452 = vmatprep.subr.mxu0 0.0
          %453 = vmatpush1.msra.mxu0 %v404
          %454 = vmatprep.subr.mxu0 0.0
          %455 = vmatpush1.msra.mxu0 %v405
          %456 = vmatprep.subr.mxu0 0.0
          %457 = vmatpush1.msra.mxu0 %v406
          %458 = vmatprep.subr.mxu0 0.0
          %459 = vmatpush1.msra.mxu0 %v407
          %460 = vmatprep.subr.mxu0 0.0
          %461 = vmatpush1.msra.mxu0 %v408
          %462 = vmatprep.subr.mxu0 0.0
          %463 = vmatpush1.msra.mxu0 %v409
          %464 = vmatprep.subr.mxu0 0.0
          %465 = vmatpush1.msra.mxu0 %v410
          %466 = vmatprep.subr.mxu0 0.0
          %467 = vmatpush1.msra.mxu0 %v411
          %468 = vmatprep.subr.mxu0 0.0
          %469 = vmatpush1.msra.mxu0 %v412
          %470 = vmatprep.subr.mxu0 0.0
          %471 = vmatpush1.msra.mxu0 %v413
          %472 = vmatprep.subr.mxu0 0.0
          %473 = vmatpush1.msra.mxu0 %v414
          %474 = vmatprep.subr.mxu0 0.0
          %475 = vmatpush1.msra.mxu0 %v415
          %476 = vmatprep.subr.mxu0 0.0
          %477 = vmatpush1.msra.mxu0 %v426
          %478 = vmatprep.subr.mxu0 0.0
          %479 = vmatpush1.msra.mxu0 0.0
          %480 = vmatprep.subr.mxu0 0.0
          %481 = vmatpush1.msra.mxu0 0.0
          %482 = vmatprep.subr.mxu0 0.0
          %483 = vmatpush1.msra.mxu0 0.0
          %484 = vmatprep.subr.mxu0 0.0
          %485 = vmatpush1.msra.mxu0 0.0
          %486 = vmatprep.subr.mxu0 0.0
          %487 = vmatpush1.msra.mxu0 0.0
          %488 = vmatprep.subr.mxu0 0.0
          %489 = vmatpush1.msra.mxu0 0.0
          %490 = vmatprep.subr.mxu0 0.0
          %491 = vmatpush1.msra.mxu0 0.0
          %492 = vmatprep.mubr.f32.mxu0 %v419
          %493 = vmatmul.mubr.f32.gmra.mrb[0].mxu0 %v388
          %v494 = vpop.f32.mrb[0].mxu0
          %v495 = vadd.f32 0.0, %v494
          %v496 = vpop.f32.mrb[0].mxu0
          %497 = vmatprep.mubr.f32.mxu0 %v422
          %498 = vmatmul.mubr.f32.gmra.mrb[0].mxu0 %v390
          %v499 = vpop.f32.mrb[0].mxu0
          %v500 = vadd.f32 0.0, %v499
          %v501 = vpop.f32.mrb[0].mxu0
          %502 = vdwg.mxu0
          %503 = vxpose.xlu0.b32.start [1/16] %v495, 128
          %504 = vxpose.xlu0.b32.cont [2/16] %v500, 128
          %505 = vxpose.xlu0.b32.cont [3/16] 0.0, 128
          %506 = vxpose.xlu0.b32.cont [4/16] 0.0, 128
          %507 = vxpose.xlu0.b32.cont [5/16] 0.0, 128
          %508 = vxpose.xlu0.b32.cont [6/16] 0.0, 128
          %509 = vxpose.xlu0.b32.cont [7/16] 0.0, 128
          %510 = vxpose.xlu0.b32.cont [8/16] 0.0, 128
          %511 = vxpose.xlu0.b32.cont [9/16] 0.0, 128
          %512 = vxpose.xlu0.b32.cont [10/16] 0.0, 128
          %513 = vxpose.xlu0.b32.cont [11/16] 0.0, 128
          %514 = vxpose.xlu0.b32.cont [12/16] 0.0, 128
          %515 = vxpose.xlu0.b32.cont [13/16] 0.0, 128
          %516 = vxpose.xlu0.b32.cont [14/16] 0.0, 128
          %517 = vxpose.xlu0.b32.cont [15/16] 0.0, 128
          %518 = vxpose.xlu0.b32.end [16/16] 0.0, 128
          %v519 = vpop.trf.xlu0
          %v520 = vpop.trf.xlu0
          %v521 = vpop.trf.xlu0
          %v522 = vpop.trf.xlu0
          %v523 = vpop.trf.xlu0
          %v524 = vpop.trf.xlu0
          %v525 = vpop.trf.xlu0
          %v526 = vpop.trf.xlu0
          %v527 = vpop.trf.xlu0
          %v528 = vpop.trf.xlu0
          %v529 = vpop.trf.xlu0
          %v530 = vpop.trf.xlu0
          %v531 = vpop.trf.xlu0
          %v532 = vpop.trf.xlu0
          %v533 = vpop.trf.xlu0
          %v534 = vpop.trf.xlu0
          %v535 = vld [vmem:[#allocation7] sm:$0xff]
          %v536 = vld [vmem:[#allocation7 + $0x8] sm:$0xff]
          %v537 = vld [vmem:[#allocation9] sm:$0x1]
          %v539 = vlaneseq
          %v540 = vshrl.u32 %v539, 7
          %v541 = vsub.s32 0, %v540
          %v542 = vrot.slane %v537, %v541
          %vm544 = vcmask 130048
          %v546 = vsel %vm544, %v519, 0
          %v549 = vsel %vm544, %v520, 0
          %551 = vmatprep.subr.mxu0 0.0
          %552 = vmatpush1.msra.mxu0 %v535
          %553 = vmatprep.subr.mxu0 0.0
          %554 = vmatpush1.msra.mxu0 %v536
          %555 = vmatprep.subr.mxu0 0.0
          %556 = vmatpush1.msra.mxu0 0.0
          %557 = vmatprep.subr.mxu0 0.0
          %558 = vmatpush1.msra.mxu0 0.0
          %559 = vmatprep.subr.mxu0 0.0
          %560 = vmatpush1.msra.mxu0 0.0
          %561 = vmatprep.subr.mxu0 0.0
          %562 = vmatpush1.msra.mxu0 0.0
          %563 = vmatprep.subr.mxu0 0.0
          %564 = vmatpush1.msra.mxu0 0.0
          %565 = vmatprep.subr.mxu0 0.0
          %566 = vmatpush1.msra.mxu0 0.0
          %567 = vmatprep.subr.mxu0 0.0
          %568 = vmatpush1.msra.mxu0 0.0
          %569 = vmatprep.subr.mxu0 0.0
          %570 = vmatpush1.msra.mxu0 0.0
          %571 = vmatprep.subr.mxu0 0.0
          %572 = vmatpush1.msra.mxu0 0.0
          %573 = vmatprep.subr.mxu0 0.0
          %574 = vmatpush1.msra.mxu0 0.0
          %575 = vmatprep.subr.mxu0 0.0
          %576 = vmatpush1.msra.mxu0 0.0
          %577 = vmatprep.subr.mxu0 0.0
          %578 = vmatpush1.msra.mxu0 0.0
          %579 = vmatprep.subr.mxu0 0.0
          %580 = vmatpush1.msra.mxu0 0.0
          %581 = vmatprep.subr.mxu0 0.0
          %582 = vmatpush1.msra.mxu0 0.0
          %583 = vmatprep.subr.mxu0 0.0
          %584 = vmatpush1.msra.mxu0 0.0
          %585 = vmatprep.subr.mxu0 0.0
          %586 = vmatpush1.msra.mxu0 0.0
          %587 = vmatprep.subr.mxu0 0.0
          %588 = vmatpush1.msra.mxu0 0.0
          %589 = vmatprep.subr.mxu0 0.0
          %590 = vmatpush1.msra.mxu0 0.0
          %591 = vmatprep.subr.mxu0 0.0
          %592 = vmatpush1.msra.mxu0 0.0
          %593 = vmatprep.subr.mxu0 0.0
          %594 = vmatpush1.msra.mxu0 0.0
          %595 = vmatprep.subr.mxu0 0.0
          %596 = vmatpush1.msra.mxu0 0.0
          %597 = vmatprep.subr.mxu0 0.0
          %598 = vmatpush1.msra.mxu0 0.0
          %599 = vmatprep.subr.mxu0 0.0
          %600 = vmatpush1.msra.mxu0 0.0
          %601 = vmatprep.subr.mxu0 0.0
          %602 = vmatpush1.msra.mxu0 0.0
          %603 = vmatprep.subr.mxu0 0.0
          %604 = vmatpush1.msra.mxu0 0.0
          %605 = vmatprep.subr.mxu0 0.0
          %606 = vmatpush1.msra.mxu0 0.0
          %607 = vmatprep.subr.mxu0 0.0
          %608 = vmatpush1.msra.mxu0 0.0
          %609 = vmatprep.subr.mxu0 0.0
          %610 = vmatpush1.msra.mxu0 0.0
          %611 = vmatprep.subr.mxu0 0.0
          %612 = vmatpush1.msra.mxu0 0.0
          %613 = vmatprep.subr.mxu0 0.0
          %614 = vmatpush1.msra.mxu0 0.0
          %615 = vmatprep.mubr.f32.mxu0 0.0
          %616 = vmatmul.mubr.f32.gmra.mrb[0].mxu0 %v546
          %v617 = vpop.f32.mrb[0].mxu0
          %v618 = vadd.f32 %v542, %v617
          %v619 = vpop.f32.mrb[0].mxu0
          %620 = vmatprep.mubr.f32.mxu0 0.0
          %621 = vmatmul.mubr.f32.gmra.mrb[0].mxu0 %v549
          %v622 = vpop.f32.mrb[0].mxu0
          %v623 = vadd.f32 %v542, %v622
          %v624 = vpop.f32.mrb[0].mxu0
          %625 = vdwg.mxu0
          %v626 = vmax.f32 %v618, 0.0
          %v627 = vmax.f32 %v623, 0.0
          %628 = vst [vmem:[#allocation2] sm:$0xff] %v626
          %629 = vst [vmem:[#allocation2 + $0x8] sm:$0xff] %v627
          %s630 = scalar_lea.vmem [#allocation4], 32
          %v631 = vld [vmem:[%s630] sm:$0xff]
          %v632 = vld [vmem:[%s630 + $0x8] sm:$0xff]
          %v633 = vld [vmem:[%s630 + $0x10] sm:$0xff]
          %v634 = vld [vmem:[%s630 + $0x18] sm:$0xff]
          %v635 = vld [vmem:[%s1] sm:$0xff]
          %v636 = vld [vmem:[%s1 + $0x8] sm:$0xff]
          %v637 = vld [vmem:[%s1 + $0x10] sm:$0xff]
          %v638 = vld [vmem:[%s1 + $0x18] sm:$0xff]
          %v639 = vld [vmem:[%s1 + $0x20] sm:$0xff]
          %v640 = vld [vmem:[%s1 + $0x28] sm:$0xff]
          %v641 = vld [vmem:[%s1 + $0x30] sm:$0xff]
          %v642 = vld [vmem:[%s1 + $0x38] sm:$0xff]
          %v643 = vld [vmem:[%s1 + $0x40] sm:$0xff]
          %v644 = vld [vmem:[%s1 + $0x48] sm:$0xff]
          %v645 = vld [vmem:[%s1 + $0x50] sm:$0xff]
          %v646 = vld [vmem:[%s1 + $0x58] sm:$0xff]
          %v647 = vld [vmem:[%s1 + $0x60] sm:$0xff]
          %v648 = vld [vmem:[%s1 + $0x68] sm:$0xff]
          %v649 = vld [vmem:[%s1 + $0x70] sm:$0xff]
          %v650 = vld [vmem:[%s1 + $0x78] sm:$0xff]
          %v651 = vld [vmem:[%s1 + $0x80] sm:$0xff]
          %v652 = vld [vmem:[%s1 + $0x88] sm:$0xff]
          %v653 = vld [vmem:[%s1 + $0x90] sm:$0xff]
          %v654 = vld [vmem:[%s1 + $0x98] sm:$0xff]
          %v655 = vld [vmem:[%s1 + $0xa0] sm:$0xff]
          %v656 = vld [vmem:[%s1 + $0xa8] sm:$0xff]
          %v657 = vld [vmem:[%s1 + $0xb0] sm:$0xff]
          %v658 = vld [vmem:[%s1 + $0xb8] sm:$0xff]
          %v659 = vld [vmem:[%s1 + $0xc0] sm:$0xf]
          %v661 = vsel %vm417, %v632, 0
          %v664 = vsel %vm417, %v634, 0
          %v667 = vsel %vm424, %v659, 0
          %669 = vmatprep.subr.mxu0 0.0
          %670 = vmatpush1.msra.mxu0 %v635
          %671 = vmatprep.subr.mxu0 0.0
          %672 = vmatpush1.msra.mxu0 %v636
          %673 = vmatprep.subr.mxu0 0.0
          %674 = vmatpush1.msra.mxu0 %v637
          %675 = vmatprep.subr.mxu0 0.0
          %676 = vmatpush1.msra.mxu0 %v638
          %677 = vmatprep.subr.mxu0 0.0
          %678 = vmatpush1.msra.mxu0 %v639
          %679 = vmatprep.subr.mxu0 0.0
          %680 = vmatpush1.msra.mxu0 %v640
          %681 = vmatprep.subr.mxu0 0.0
          %682 = vmatpush1.msra.mxu0 %v641
          %683 = vmatprep.subr.mxu0 0.0
          %684 = vmatpush1.msra.mxu0 %v642
          %685 = vmatprep.subr.mxu0 0.0
          %686 = vmatpush1.msra.mxu0 %v643
          %687 = vmatprep.subr.mxu0 0.0
          %688 = vmatpush1.msra.mxu0 %v644
          %689 = vmatprep.subr.mxu0 0.0
          %690 = vmatpush1.msra.mxu0 %v645
          %691 = vmatprep.subr.mxu0 0.0
          %692 = vmatpush1.msra.mxu0 %v646
          %693 = vmatprep.subr.mxu0 0.0
          %694 = vmatpush1.msra.mxu0 %v647
          %695 = vmatprep.subr.mxu0 0.0
          %696 = vmatpush1.msra.mxu0 %v648
          %697 = vmatprep.subr.mxu0 0.0
          %698 = vmatpush1.msra.mxu0 %v649
          %699 = vmatprep.subr.mxu0 0.0
          %700 = vmatpush1.msra.mxu0 %v650
          %701 = vmatprep.subr.mxu0 0.0
          %702 = vmatpush1.msra.mxu0 %v651
          %703 = vmatprep.subr.mxu0 0.0
          %704 = vmatpush1.msra.mxu0 %v652
          %705 = vmatprep.subr.mxu0 0.0
          %706 = vmatpush1.msra.mxu0 %v653
          %707 = vmatprep.subr.mxu0 0.0
          %708 = vmatpush1.msra.mxu0 %v654
          %709 = vmatprep.subr.mxu0 0.0
          %710 = vmatpush1.msra.mxu0 %v655
          %711 = vmatprep.subr.mxu0 0.0
          %712 = vmatpush1.msra.mxu0 %v656
          %713 = vmatprep.subr.mxu0 0.0
          %714 = vmatpush1.msra.mxu0 %v657
          %715 = vmatprep.subr.mxu0 0.0
          %716 = vmatpush1.msra.mxu0 %v658
          %717 = vmatprep.subr.mxu0 0.0
          %718 = vmatpush1.msra.mxu0 %v667
          %719 = vmatprep.subr.mxu0 0.0
          %720 = vmatpush1.msra.mxu0 0.0
          %721 = vmatprep.subr.mxu0 0.0
          %722 = vmatpush1.msra.mxu0 0.0
          %723 = vmatprep.subr.mxu0 0.0
          %724 = vmatpush1.msra.mxu0 0.0
          %725 = vmatprep.subr.mxu0 0.0
          %726 = vmatpush1.msra.mxu0 0.0
          %727 = vmatprep.subr.mxu0 0.0
          %728 = vmatpush1.msra.mxu0 0.0
          %729 = vmatprep.subr.mxu0 0.0
          %730 = vmatpush1.msra.mxu0 0.0
          %731 = vmatprep.subr.mxu0 0.0
          %732 = vmatpush1.msra.mxu0 0.0
          %733 = vmatprep.mubr.f32.mxu0 %v661
          %734 = vmatmul.mubr.f32.gmra.mrb[0].mxu0 %v631
          %v735 = vpop.f32.mrb[0].mxu0
          %v736 = vadd.f32 0.0, %v735
          %v737 = vpop.f32.mrb[0].mxu0
          %738 = vmatprep.mubr.f32.mxu0 %v664
          %739 = vmatmul.mubr.f32.gmra.mrb[0].mxu0 %v633
          %v740 = vpop.f32.mrb[0].mxu0
          %v741 = vadd.f32 0.0, %v740
          %v742 = vpop.f32.mrb[0].mxu0
          %743 = vdwg.mxu0
          %744 = vxpose.xlu0.b32.start [1/16] %v736, 128
          %745 = vxpose.xlu0.b32.cont [2/16] %v741, 128
          %746 = vxpose.xlu0.b32.cont [3/16] 0.0, 128
          %747 = vxpose.xlu0.b32.cont [4/16] 0.0, 128
          %748 = vxpose.xlu0.b32.cont [5/16] 0.0, 128
          %749 = vxpose.xlu0.b32.cont [6/16] 0.0, 128
          %750 = vxpose.xlu0.b32.cont [7/16] 0.0, 128
          %751 = vxpose.xlu0.b32.cont [8/16] 0.0, 128
          %752 = vxpose.xlu0.b32.cont [9/16] 0.0, 128
          %753 = vxpose.xlu0.b32.cont [10/16] 0.0, 128
          %754 = vxpose.xlu0.b32.cont [11/16] 0.0, 128
          %755 = vxpose.xlu0.b32.cont [12/16] 0.0, 128
          %756 = vxpose.xlu0.b32.cont [13/16] 0.0, 128
          %757 = vxpose.xlu0.b32.cont [14/16] 0.0, 128
          %758 = vxpose.xlu0.b32.cont [15/16] 0.0, 128
          %759 = vxpose.xlu0.b32.end [16/16] 0.0, 128
          %v760 = vpop.trf.xlu0
          %v761 = vpop.trf.xlu0
          %v762 = vpop.trf.xlu0
          %v763 = vpop.trf.xlu0
          %v764 = vpop.trf.xlu0
          %v765 = vpop.trf.xlu0
          %v766 = vpop.trf.xlu0
          %v767 = vpop.trf.xlu0
          %v768 = vpop.trf.xlu0
          %v769 = vpop.trf.xlu0
          %v770 = vpop.trf.xlu0
          %v771 = vpop.trf.xlu0
          %v772 = vpop.trf.xlu0
          %v773 = vpop.trf.xlu0
          %v774 = vpop.trf.xlu0
          %v775 = vpop.trf.xlu0
          %v776 = vld [vmem:[#allocation7] sm:$0xff]
          %v777 = vld [vmem:[#allocation7 + $0x8] sm:$0xff]
          %v778 = vld [vmem:[#allocation9] sm:$0x1]
          %v780 = vlaneseq
          %v781 = vshrl.u32 %v780, 7
          %v782 = vsub.s32 0, %v781
          %v783 = vrot.slane %v778, %v782
          %v786 = vsel %vm544, %v760, 0
          %v789 = vsel %vm544, %v761, 0
          %791 = vmatprep.subr.mxu0 0.0
          %792 = vmatpush1.msra.mxu0 %v776
          %793 = vmatprep.subr.mxu0 0.0
          %794 = vmatpush1.msra.mxu0 %v777
          %795 = vmatprep.subr.mxu0 0.0
          %796 = vmatpush1.msra.mxu0 0.0
          %797 = vmatprep.subr.mxu0 0.0
          %798 = vmatpush1.msra.mxu0 0.0
          %799 = vmatprep.subr.mxu0 0.0
          %800 = vmatpush1.msra.mxu0 0.0
          %801 = vmatprep.subr.mxu0 0.0
          %802 = vmatpush1.msra.mxu0 0.0
          %803 = vmatprep.subr.mxu0 0.0
          %804 = vmatpush1.msra.mxu0 0.0
          %805 = vmatprep.subr.mxu0 0.0
          %806 = vmatpush1.msra.mxu0 0.0
          %807 = vmatprep.subr.mxu0 0.0
          %808 = vmatpush1.msra.mxu0 0.0
          %809 = vmatprep.subr.mxu0 0.0
          %810 = vmatpush1.msra.mxu0 0.0
          %811 = vmatprep.subr.mxu0 0.0
          %812 = vmatpush1.msra.mxu0 0.0
          %813 = vmatprep.subr.mxu0 0.0
          %814 = vmatpush1.msra.mxu0 0.0
          %815 = vmatprep.subr.mxu0 0.0
          %816 = vmatpush1.msra.mxu0 0.0
          %817 = vmatprep.subr.mxu0 0.0
          %818 = vmatpush1.msra.mxu0 0.0
          %819 = vmatprep.subr.mxu0 0.0
          %820 = vmatpush1.msra.mxu0 0.0
          %821 = vmatprep.subr.mxu0 0.0
          %822 = vmatpush1.msra.mxu0 0.0
          %823 = vmatprep.subr.mxu0 0.0
          %824 = vmatpush1.msra.mxu0 0.0
          %825 = vmatprep.subr.mxu0 0.0
          %826 = vmatpush1.msra.mxu0 0.0
          %827 = vmatprep.subr.mxu0 0.0
          %828 = vmatpush1.msra.mxu0 0.0
          %829 = vmatprep.subr.mxu0 0.0
          %830 = vmatpush1.msra.mxu0 0.0
          %831 = vmatprep.subr.mxu0 0.0
          %832 = vmatpush1.msra.mxu0 0.0
          %833 = vmatprep.subr.mxu0 0.0
          %834 = vmatpush1.msra.mxu0 0.0
          %835 = vmatprep.subr.mxu0 0.0
          %836 = vmatpush1.msra.mxu0 0.0
          %837 = vmatprep.subr.mxu0 0.0
          %838 = vmatpush1.msra.mxu0 0.0
          %839 = vmatprep.subr.mxu0 0.0
          %840 = vmatpush1.msra.mxu0 0.0
          %841 = vmatprep.subr.mxu0 0.0
          %842 = vmatpush1.msra.mxu0 0.0
          %843 = vmatprep.subr.mxu0 0.0
          %844 = vmatpush1.msra.mxu0 0.0
          %845 = vmatprep.subr.mxu0 0.0
          %846 = vmatpush1.msra.mxu0 0.0
          %847 = vmatprep.subr.mxu0 0.0
          %848 = vmatpush1.msra.mxu0 0.0
          %849 = vmatprep.subr.mxu0 0.0
          %850 = vmatpush1.msra.mxu0 0.0
          %851 = vmatprep.subr.mxu0 0.0
          %852 = vmatpush1.msra.mxu0 0.0
          %853 = vmatprep.subr.mxu0 0.0
          %854 = vmatpush1.msra.mxu0 0.0
          %855 = vmatprep.mubr.f32.mxu0 0.0
          %856 = vmatmul.mubr.f32.gmra.mrb[0].mxu0 %v786
          %v857 = vpop.f32.mrb[0].mxu0
          %v858 = vadd.f32 %v783, %v857
          %v859 = vpop.f32.mrb[0].mxu0
          %860 = vmatprep.mubr.f32.mxu0 0.0
          %861 = vmatmul.mubr.f32.gmra.mrb[0].mxu0 %v789
          %v862 = vpop.f32.mrb[0].mxu0
          %v863 = vadd.f32 %v783, %v862
          %v864 = vpop.f32.mrb[0].mxu0
          %865 = vdwg.mxu0
          %v866 = vmax.f32 %v858, 0.0
          %v867 = vmax.f32 %v863, 0.0
          %s868 = scalar_lea.vmem [#allocation2], 16
          %869 = vst [vmem:[%s868] sm:$0xff] %v866
          %870 = vst [vmem:[%s868 + $0x8] sm:$0xff] %v867
        $region80: #{tpu_custom_call.1} parent=51 // pred_fallthru
          _
        %s871 = smul.u32 %s26, 8
        %s872 = scalar_lea.vmem [#allocation2], %s871
        %v873 = vld [vmem:[%s872] sm:$0xff]
        %v874 = vld [vmem:[%s872 + $0x10] sm:$0xff]
        %v875 = vld [vmem:[#allocation3] sm:$0xff]
        %v876 = vld [vmem:[#allocation3 + $0x8] sm:$0xff]
        %v877 = vpack.c.bf16 %v873, %v873
        %v878 = vpack.c.bf16 %v874, %v874
        %v879 = vld [vmem:[%s344] sm:$0xff]
        %v880 = vld [vmem:[%s344 + $0x8] sm:$0xff]
        %v881 = vld [vmem:[%s344 + $0x10] sm:$0xff]
        %v882 = vld [vmem:[%s344 + $0x18] sm:$0xff]
        %v883 = vld [vmem:[%s344 + $0x20] sm:$0xff]
        %v884 = vld [vmem:[%s344 + $0x28] sm:$0xff]
        %v885 = vld [vmem:[%s344 + $0x30] sm:$0xff]
        %v886 = vld [vmem:[%s344 + $0x38] sm:$0xff]
        %v887 = vld [vmem:[%s344 + $0x40] sm:$0xff]
        %v888 = vld [vmem:[%s344 + $0x48] sm:$0xff]
        %v889 = vld [vmem:[%s344 + $0x50] sm:$0xff]
        %v890 = vld [vmem:[%s344 + $0x58] sm:$0xff]
        %v891 = vld [vmem:[%s344 + $0x60] sm:$0xff]
        %v892 = vld [vmem:[%s344 + $0x68] sm:$0xff]
        %v893 = vld [vmem:[%s344 + $0x70] sm:$0xff]
        %v894 = vld [vmem:[%s344 + $0x78] sm:$0xff]
        %v895 = vld [vmem:[%s344 + $0x80] sm:$0xff]
        %v896 = vld [vmem:[%s344 + $0x88] sm:$0xff]
        %v897 = vld [vmem:[%s344 + $0x90] sm:$0xff]
        %v898 = vld [vmem:[%s344 + $0x98] sm:$0xff]
        %v899 = vld [vmem:[%s344 + $0xa0] sm:$0xff]
        %v900 = vld [vmem:[%s344 + $0xa8] sm:$0xff]
        %v901 = vld [vmem:[%s344 + $0xb0] sm:$0xff]
        %v902 = vld [vmem:[%s344 + $0xb8] sm:$0xff]
        %v903 = vld [vmem:[%s344 + $0xc0] sm:$0xff]
        %v904 = vld [vmem:[%s344 + $0xc8] sm:$0xff]
        %v905 = vld [vmem:[%s344 + $0xd0] sm:$0xff]
        %v906 = vld [vmem:[%s344 + $0xd8] sm:$0xff]
        %v907 = vld [vmem:[%s344 + $0xe0] sm:$0xff]
        %v908 = vld [vmem:[%s344 + $0xe8] sm:$0xff]
        %v909 = vld [vmem:[%s344 + $0xf0] sm:$0xff]
        %v910 = vld [vmem:[%s344 + $0xf8] sm:$0xff]
        %v911 = vld [vmem:[%s344 + $0x100] sm:$0xff]
        %v912 = vld [vmem:[%s344 + $0x108] sm:$0xff]
        %v913 = vld [vmem:[%s344 + $0x110] sm:$0xff]
        %v914 = vld [vmem:[%s344 + $0x118] sm:$0xff]
        %v915 = vld [vmem:[%s344 + $0x120] sm:$0xff]
        %v916 = vld [vmem:[%s344 + $0x128] sm:$0xff]
        %v917 = vld [vmem:[%s344 + $0x130] sm:$0xff]
        %v918 = vld [vmem:[%s344 + $0x138] sm:$0xff]
        %v919 = vld [vmem:[%s344 + $0x140] sm:$0xff]
        %v920 = vld [vmem:[%s344 + $0x148] sm:$0xff]
        %v921 = vld [vmem:[%s344 + $0x150] sm:$0xff]
        %v922 = vld [vmem:[%s344 + $0x158] sm:$0xff]
        %v923 = vld [vmem:[%s344 + $0x160] sm:$0xff]
        %v924 = vld [vmem:[%s344 + $0x168] sm:$0xff]
        %v925 = vld [vmem:[%s344 + $0x170] sm:$0xff]
        %v926 = vld [vmem:[%s344 + $0x178] sm:$0xff]
        %v927 = vld [vmem:[%s344 + $0x180] sm:$0xff]
        %v928 = vld [vmem:[%s344 + $0x188] sm:$0xff]
        %v929 = vld [vmem:[%s344 + $0x190] sm:$0xff]
        %v930 = vld [vmem:[%s344 + $0x198] sm:$0xff]
        %v931 = vld [vmem:[%s344 + $0x1a0] sm:$0xff]
        %v932 = vld [vmem:[%s344 + $0x1a8] sm:$0xff]
        %v933 = vld [vmem:[%s344 + $0x1b0] sm:$0xff]
        %v934 = vld [vmem:[%s344 + $0x1b8] sm:$0xff]
        %v935 = vld [vmem:[%s344 + $0x1c0] sm:$0xff]
        %v936 = vld [vmem:[%s344 + $0x1c8] sm:$0xff]
        %v937 = vld [vmem:[%s344 + $0x1d0] sm:$0xff]
        %v938 = vld [vmem:[%s344 + $0x1d8] sm:$0xff]
        %v939 = vld [vmem:[%s344 + $0x1e0] sm:$0xff]
        %v940 = vld [vmem:[%s344 + $0x1e8] sm:$0xff]
        %v941 = vld [vmem:[%s344 + $0x1f0] sm:$0xff]
        %v942 = vld [vmem:[%s344 + $0x1f8] sm:$0xff]
        %v945 = vunpack.c.l.b16 %v877
        %v946 = vunpack.c.l.b16 %v878
        %v947 = vrot.slane %v946, 7
        %vm948 = vcmask 1041409
        %v949 = vsel %vm948, %v947, %v945
        %v950 = vpack.c.b16 %v949, %v949
        %v1016 = vunpack.c.l.b16 %v879
        %v1017 = vunpack.c.h.b16 %v879
        %v1018 = vunpack.c.l.b16 %v880
        %v1019 = vunpack.c.h.b16 %v880
        %v1020 = vunpack.c.l.b16 %v881
        %v1021 = vunpack.c.h.b16 %v881
        %v1022 = vunpack.c.l.b16 %v882
        %v1023 = vunpack.c.h.b16 %v882
        %v1024 = vunpack.c.l.b16 %v883
        %v1025 = vunpack.c.h.b16 %v883
        %v1026 = vunpack.c.l.b16 %v884
        %v1027 = vunpack.c.h.b16 %v884
        %v1028 = vunpack.c.l.b16 %v885
        %v1029 = vunpack.c.h.b16 %v885
        %v1030 = vunpack.c.l.b16 %v886
        %v1031 = vunpack.c.h.b16 %v886
        %v1032 = vunpack.c.l.b16 %v887
        %v1033 = vunpack.c.h.b16 %v887
        %v1034 = vunpack.c.l.b16 %v888
        %v1035 = vunpack.c.h.b16 %v888
        %v1036 = vunpack.c.l.b16 %v889
        %v1037 = vunpack.c.h.b16 %v889
        %v1038 = vunpack.c.l.b16 %v890
        %v1039 = vunpack.c.h.b16 %v890
        %v1040 = vunpack.c.l.b16 %v891
        %v1041 = vunpack.c.h.b16 %v891
        %v1042 = vunpack.c.l.b16 %v892
        %v1043 = vunpack.c.h.b16 %v892
        %v1044 = vunpack.c.l.b16 %v893
        %v1045 = vunpack.c.h.b16 %v893
        %v1046 = vunpack.c.l.b16 %v894
        %v1047 = vunpack.c.h.b16 %v894
        %v1048 = vunpack.c.l.b16 %v895
        %v1049 = vunpack.c.h.b16 %v895
        %v1050 = vunpack.c.l.b16 %v896
        %v1051 = vunpack.c.h.b16 %v896
        %v1052 = vunpack.c.l.b16 %v897
        %v1053 = vunpack.c.h.b16 %v897
        %v1054 = vunpack.c.l.b16 %v898
        %v1055 = vunpack.c.h.b16 %v898
        %v1056 = vunpack.c.l.b16 %v899
        %v1057 = vunpack.c.h.b16 %v899
        %v1058 = vunpack.c.l.b16 %v900
        %v1059 = vunpack.c.h.b16 %v900
        %v1060 = vunpack.c.l.b16 %v901
        %v1061 = vunpack.c.h.b16 %v901
        %v1062 = vunpack.c.l.b16 %v902
        %v1063 = vunpack.c.h.b16 %v902
        %v1064 = vunpack.c.l.b16 %v903
        %v1065 = vunpack.c.h.b16 %v903
        %v1066 = vunpack.c.l.b16 %v904
        %v1067 = vunpack.c.h.b16 %v904
        %v1068 = vunpack.c.l.b16 %v905
        %v1069 = vunpack.c.h.b16 %v905
        %v1070 = vunpack.c.l.b16 %v906
        %v1071 = vunpack.c.h.b16 %v906
        %v1072 = vunpack.c.l.b16 %v907
        %v1073 = vunpack.c.h.b16 %v907
        %v1074 = vunpack.c.l.b16 %v908
        %v1075 = vunpack.c.h.b16 %v908
        %v1076 = vunpack.c.l.b16 %v909
        %v1077 = vunpack.c.h.b16 %v909
        %v1078 = vunpack.c.l.b16 %v910
        %v1079 = vunpack.c.h.b16 %v910
        %v1080 = vunpack.c.l.b16 %v911
        %v1081 = vunpack.c.h.b16 %v911
        %v1082 = vunpack.c.l.b16 %v912
        %v1083 = vunpack.c.h.b16 %v912
        %v1084 = vunpack.c.l.b16 %v913
        %v1085 = vunpack.c.h.b16 %v913
        %v1086 = vunpack.c.l.b16 %v914
        %v1087 = vunpack.c.h.b16 %v914
        %v1088 = vunpack.c.l.b16 %v915
        %v1089 = vunpack.c.h.b16 %v915
        %v1090 = vunpack.c.l.b16 %v916
        %v1091 = vunpack.c.h.b16 %v916
        %v1092 = vunpack.c.l.b16 %v917
        %v1093 = vunpack.c.h.b16 %v917
        %v1094 = vunpack.c.l.b16 %v918
        %v1095 = vunpack.c.h.b16 %v918
        %v1096 = vunpack.c.l.b16 %v919
        %v1097 = vunpack.c.h.b16 %v919
        %v1098 = vunpack.c.l.b16 %v920
        %v1099 = vunpack.c.h.b16 %v920
        %v1100 = vunpack.c.l.b16 %v921
        %v1101 = vunpack.c.h.b16 %v921
        %v1102 = vunpack.c.l.b16 %v922
        %v1103 = vunpack.c.h.b16 %v922
        %v1104 = vunpack.c.l.b16 %v923
        %v1105 = vunpack.c.h.b16 %v923
        %v1106 = vunpack.c.l.b16 %v924
        %v1107 = vunpack.c.h.b16 %v924
        %v1108 = vunpack.c.l.b16 %v925
        %v1109 = vunpack.c.h.b16 %v925
        %v1110 = vunpack.c.l.b16 %v926
        %v1111 = vunpack.c.h.b16 %v926
        %v1112 = vunpack.c.l.b16 %v927
        %v1113 = vunpack.c.h.b16 %v927
        %v1114 = vunpack.c.l.b16 %v928
        %v1115 = vunpack.c.h.b16 %v928
        %v1116 = vunpack.c.l.b16 %v929
        %v1117 = vunpack.c.h.b16 %v929
        %v1118 = vunpack.c.l.b16 %v930
        %v1119 = vunpack.c.h.b16 %v930
        %v1120 = vunpack.c.l.b16 %v931
        %v1121 = vunpack.c.h.b16 %v931
        %v1122 = vunpack.c.l.b16 %v932
        %v1123 = vunpack.c.h.b16 %v932
        %v1124 = vunpack.c.l.b16 %v933
        %v1125 = vunpack.c.h.b16 %v933
        %v1126 = vunpack.c.l.b16 %v934
        %v1127 = vunpack.c.h.b16 %v934
        %v1128 = vunpack.c.l.b16 %v935
        %v1129 = vunpack.c.h.b16 %v935
        %v1130 = vunpack.c.l.b16 %v936
        %v1131 = vunpack.c.h.b16 %v936
        %v1132 = vunpack.c.l.b16 %v937
        %v1133 = vunpack.c.h.b16 %v937
        %v1134 = vunpack.c.l.b16 %v938
        %v1135 = vunpack.c.h.b16 %v938
        %v1136 = vunpack.c.l.b16 %v939
        %v1137 = vunpack.c.h.b16 %v939
        %v1138 = vunpack.c.l.b16 %v940
        %v1139 = vunpack.c.h.b16 %v940
        %v1140 = vunpack.c.l.b16 %v941
        %v1141 = vunpack.c.h.b16 %v941
        %v1142 = vunpack.c.l.b16 %v942
        %v1143 = vunpack.c.h.b16 %v942
        %v1144 = vpack.c.b16 %v1024, %v1016
        %v1145 = vpack.c.b16 %v1025, %v1017
        %v1146 = vpack.c.b16 %v1026, %v1018
        %v1147 = vpack.c.b16 %v1027, %v1019
        %v1148 = vpack.c.b16 %v1028, %v1020
        %v1149 = vpack.c.b16 %v1029, %v1021
        %v1150 = vpack.c.b16 %v1030, %v1022
        %v1151 = vpack.c.b16 %v1031, %v1023
        %v1152 = vpack.c.b16 %v1040, %v1032
        %v1153 = vpack.c.b16 %v1041, %v1033
        %v1154 = vpack.c.b16 %v1042, %v1034
        %v1155 = vpack.c.b16 %v1043, %v1035
        %v1156 = vpack.c.b16 %v1044, %v1036
        %v1157 = vpack.c.b16 %v1045, %v1037
        %v1158 = vpack.c.b16 %v1046, %v1038
        %v1159 = vpack.c.b16 %v1047, %v1039
        %v1160 = vpack.c.b16 %v1056, %v1048
        %v1161 = vpack.c.b16 %v1057, %v1049
        %v1162 = vpack.c.b16 %v1058, %v1050
        %v1163 = vpack.c.b16 %v1059, %v1051
        %v1164 = vpack.c.b16 %v1060, %v1052
        %v1165 = vpack.c.b16 %v1061, %v1053
        %v1166 = vpack.c.b16 %v1062, %v1054
        %v1167 = vpack.c.b16 %v1063, %v1055
        %v1168 = vpack.c.b16 %v1072, %v1064
        %v1169 = vpack.c.b16 %v1073, %v1065
        %v1170 = vpack.c.b16 %v1074, %v1066
        %v1171 = vpack.c.b16 %v1075, %v1067
        %v1172 = vpack.c.b16 %v1076, %v1068
        %v1173 = vpack.c.b16 %v1077, %v1069
        %v1174 = vpack.c.b16 %v1078, %v1070
        %v1175 = vpack.c.b16 %v1079, %v1071
        %v1176 = vpack.c.b16 %v1088, %v1080
        %v1177 = vpack.c.b16 %v1089, %v1081
        %v1178 = vpack.c.b16 %v1090, %v1082
        %v1179 = vpack.c.b16 %v1091, %v1083
        %v1180 = vpack.c.b16 %v1092, %v1084
        %v1181 = vpack.c.b16 %v1093, %v1085
        %v1182 = vpack.c.b16 %v1094, %v1086
        %v1183 = vpack.c.b16 %v1095, %v1087
        %v1184 = vpack.c.b16 %v1104, %v1096
        %v1185 = vpack.c.b16 %v1105, %v1097
        %v1186 = vpack.c.b16 %v1106, %v1098
        %v1187 = vpack.c.b16 %v1107, %v1099
        %v1188 = vpack.c.b16 %v1108, %v1100
        %v1189 = vpack.c.b16 %v1109, %v1101
        %v1190 = vpack.c.b16 %v1110, %v1102
        %v1191 = vpack.c.b16 %v1111, %v1103
        %v1192 = vpack.c.b16 %v1120, %v1112
        %v1193 = vpack.c.b16 %v1121, %v1113
        %v1194 = vpack.c.b16 %v1122, %v1114
        %v1195 = vpack.c.b16 %v1123, %v1115
        %v1196 = vpack.c.b16 %v1124, %v1116
        %v1197 = vpack.c.b16 %v1125, %v1117
        %v1198 = vpack.c.b16 %v1126, %v1118
        %v1199 = vpack.c.b16 %v1127, %v1119
        %v1200 = vpack.c.b16 %v1136, %v1128
        %v1201 = vpack.c.b16 %v1137, %v1129
        %v1202 = vpack.c.b16 %v1138, %v1130
        %v1203 = vpack.c.b16 %v1139, %v1131
        %v1204 = vpack.c.b16 %v1140, %v1132
        %v1205 = vpack.c.b16 %v1141, %v1133
        %v1206 = vpack.c.b16 %v1142, %v1134
        %v1207 = vpack.c.b16 %v1143, %v1135
        %1272 = vmatprep.subr.bf16.mxu0 %v1145
        %1273 = vmatpush1.bf16.msra.mxu0 %v1144
        %1274 = vmatprep.subr.bf16.mxu0 %v1153
        %1275 = vmatpush1.bf16.msra.mxu0 %v1152
        %1276 = vmatprep.subr.bf16.mxu0 %v1161
        %1277 = vmatpush1.bf16.msra.mxu0 %v1160
        %1278 = vmatprep.subr.bf16.mxu0 %v1169
        %1279 = vmatpush1.bf16.msra.mxu0 %v1168
        %1280 = vmatprep.subr.bf16.mxu0 %v1177
        %1281 = vmatpush1.bf16.msra.mxu0 %v1176
        %1282 = vmatprep.subr.bf16.mxu0 %v1185
        %1283 = vmatpush1.bf16.msra.mxu0 %v1184
        %1284 = vmatprep.subr.bf16.mxu0 %v1193
        %1285 = vmatpush1.bf16.msra.mxu0 %v1192
        %1286 = vmatprep.subr.bf16.mxu0 %v1201
        %1287 = vmatpush1.bf16.msra.mxu0 %v1200
        %1288 = vmatprep.subr.bf16.mxu0 0
        %1289 = vmatpush1.bf16.msra.mxu0 0
        %1290 = vmatprep.subr.bf16.mxu0 0
        %1291 = vmatpush1.bf16.msra.mxu0 0
        %1292 = vmatprep.subr.bf16.mxu0 0
        %1293 = vmatpush1.bf16.msra.mxu0 0
        %1294 = vmatprep.subr.bf16.mxu0 0
        %1295 = vmatpush1.bf16.msra.mxu0 0
        %1296 = vmatprep.subr.bf16.mxu0 0
        %1297 = vmatpush1.bf16.msra.mxu0 0
        %1298 = vmatprep.subr.bf16.mxu0 0
        %1299 = vmatpush1.bf16.msra.mxu0 0
        %1300 = vmatprep.subr.bf16.mxu0 0
        %1301 = vmatpush1.bf16.msra.mxu0 0
        %1302 = vmatprep.subr.bf16.mxu0 0
        %1303 = vmatpush1.bf16.msra.mxu0 0
        %1304 = vmatprep.mubr.bf16.mxu0 0
        %1305 = vmatmul.mubr.bf16.gmra.mrb[0].mxu0 %v950
        %v1306 = vpop.f32.mrb[0].mxu0
        %v1307 = vadd.f32 0.0, %v1306
        %v1308 = vpop.f32.mrb[0].mxu0
        %v1309 = vadd.f32 0.0, %v1308
        %v1310 = vpop.f32.mrb[0].mxu0
        %v1311 = vpop.f32.mrb[0].mxu0
        %1312 = vdwg.mxu0
        %1313 = vmatprep.subr.bf16.mxu0 %v1147
        %1314 = vmatpush1.bf16.msra.mxu0 %v1146
        %1315 = vmatprep.subr.bf16.mxu0 %v1155
        %1316 = vmatpush1.bf16.msra.mxu0 %v1154
        %1317 = vmatprep.subr.bf16.mxu0 %v1163
        %1318 = vmatpush1.bf16.msra.mxu0 %v1162
        %1319 = vmatprep.subr.bf16.mxu0 %v1171
        %1320 = vmatpush1.bf16.msra.mxu0 %v1170
        %1321 = vmatprep.subr.bf16.mxu0 %v1179
        %1322 = vmatpush1.bf16.msra.mxu0 %v1178
        %1323 = vmatprep.subr.bf16.mxu0 %v1187
        %1324 = vmatpush1.bf16.msra.mxu0 %v1186
        %1325 = vmatprep.subr.bf16.mxu0 %v1195
        %1326 = vmatpush1.bf16.msra.mxu0 %v1194
        %1327 = vmatprep.subr.bf16.mxu0 %v1203
        %1328 = vmatpush1.bf16.msra.mxu0 %v1202
        %1329 = vmatprep.subr.bf16.mxu0 0
        %1330 = vmatpush1.bf16.msra.mxu0 0
        %1331 = vmatprep.subr.bf16.mxu0 0
        %1332 = vmatpush1.bf16.msra.mxu0 0
        %1333 = vmatprep.subr.bf16.mxu0 0
        %1334 = vmatpush1.bf16.msra.mxu0 0
        %1335 = vmatprep.subr.bf16.mxu0 0
        %1336 = vmatpush1.bf16.msra.mxu0 0
        %1337 = vmatprep.subr.bf16.mxu0 0
        %1338 = vmatpush1.bf16.msra.mxu0 0
        %1339 = vmatprep.subr.bf16.mxu0 0
        %1340 = vmatpush1.bf16.msra.mxu0 0
        %1341 = vmatprep.subr.bf16.mxu0 0
        %1342 = vmatpush1.bf16.msra.mxu0 0
        %1343 = vmatprep.subr.bf16.mxu0 0
        %1344 = vmatpush1.bf16.msra.mxu0 0
        %1345 = vmatprep.mubr.bf16.mxu0 0
        %1346 = vmatmul.mubr.bf16.gmra.mrb[0].mxu0 %v950
        %v1347 = vpop.f32.mrb[0].mxu0
        %v1348 = vadd.f32 0.0, %v1347
        %v1349 = vpop.f32.mrb[0].mxu0
        %v1350 = vadd.f32 0.0, %v1349
        %v1351 = vpop.f32.mrb[0].mxu0
        %v1352 = vpop.f32.mrb[0].mxu0
        %1353 = vdwg.mxu0
        %1354 = vmatprep.subr.bf16.mxu0 %v1149
        %1355 = vmatpush1.bf16.msra.mxu0 %v1148
        %1356 = vmatprep.subr.bf16.mxu0 %v1157
        %1357 = vmatpush1.bf16.msra.mxu0 %v1156
        %1358 = vmatprep.subr.bf16.mxu0 %v1165
        %1359 = vmatpush1.bf16.msra.mxu0 %v1164
        %1360 = vmatprep.subr.bf16.mxu0 %v1173
        %1361 = vmatpush1.bf16.msra.mxu0 %v1172
        %1362 = vmatprep.subr.bf16.mxu0 %v1181
        %1363 = vmatpush1.bf16.msra.mxu0 %v1180
        %1364 = vmatprep.subr.bf16.mxu0 %v1189
        %1365 = vmatpush1.bf16.msra.mxu0 %v1188
        %1366 = vmatprep.subr.bf16.mxu0 %v1197
        %1367 = vmatpush1.bf16.msra.mxu0 %v1196
        %1368 = vmatprep.subr.bf16.mxu0 %v1205
        %1369 = vmatpush1.bf16.msra.mxu0 %v1204
        %1370 = vmatprep.subr.bf16.mxu0 0
        %1371 = vmatpush1.bf16.msra.mxu0 0
        %1372 = vmatprep.subr.bf16.mxu0 0
        %1373 = vmatpush1.bf16.msra.mxu0 0
        %1374 = vmatprep.subr.bf16.mxu0 0
        %1375 = vmatpush1.bf16.msra.mxu0 0
        %1376 = vmatprep.subr.bf16.mxu0 0
        %1377 = vmatpush1.bf16.msra.mxu0 0
        %1378 = vmatprep.subr.bf16.mxu0 0
        %1379 = vmatpush1.bf16.msra.mxu0 0
        %1380 = vmatprep.subr.bf16.mxu0 0
        %1381 = vmatpush1.bf16.msra.mxu0 0
        %1382 = vmatprep.subr.bf16.mxu0 0
        %1383 = vmatpush1.bf16.msra.mxu0 0
        %1384 = vmatprep.subr.bf16.mxu0 0
        %1385 = vmatpush1.bf16.msra.mxu0 0
        %1386 = vmatprep.mubr.bf16.mxu0 0
        %1387 = vmatmul.mubr.bf16.gmra.mrb[0].mxu0 %v950
        %v1388 = vpop.f32.mrb[0].mxu0
        %v1389 = vadd.f32 0.0, %v1388
        %v1390 = vpop.f32.mrb[0].mxu0
        %v1391 = vadd.f32 0.0, %v1390
        %v1392 = vpop.f32.mrb[0].mxu0
        %v1393 = vpop.f32.mrb[0].mxu0
        %1394 = vdwg.mxu0
        %1395 = vmatprep.subr.bf16.mxu0 %v1151
        %1396 = vmatpush1.bf16.msra.mxu0 %v1150
        %1397 = vmatprep.subr.bf16.mxu0 %v1159
        %1398 = vmatpush1.bf16.msra.mxu0 %v1158
        %1399 = vmatprep.subr.bf16.mxu0 %v1167
        %1400 = vmatpush1.bf16.msra.mxu0 %v1166
        %1401 = vmatprep.subr.bf16.mxu0 %v1175
        %1402 = vmatpush1.bf16.msra.mxu0 %v1174
        %1403 = vmatprep.subr.bf16.mxu0 %v1183
        %1404 = vmatpush1.bf16.msra.mxu0 %v1182
        %1405 = vmatprep.subr.bf16.mxu0 %v1191
        %1406 = vmatpush1.bf16.msra.mxu0 %v1190
        %1407 = vmatprep.subr.bf16.mxu0 %v1199
        %1408 = vmatpush1.bf16.msra.mxu0 %v1198
        %1409 = vmatprep.subr.bf16.mxu0 %v1207
        %1410 = vmatpush1.bf16.msra.mxu0 %v1206
        %1411 = vmatprep.subr.bf16.mxu0 0
        %1412 = vmatpush1.bf16.msra.mxu0 0
        %1413 = vmatprep.subr.bf16.mxu0 0
        %1414 = vmatpush1.bf16.msra.mxu0 0
        %1415 = vmatprep.subr.bf16.mxu0 0
        %1416 = vmatpush1.bf16.msra.mxu0 0
        %1417 = vmatprep.subr.bf16.mxu0 0
        %1418 = vmatpush1.bf16.msra.mxu0 0
        %1419 = vmatprep.subr.bf16.mxu0 0
        %1420 = vmatpush1.bf16.msra.mxu0 0
        %1421 = vmatprep.subr.bf16.mxu0 0
        %1422 = vmatpush1.bf16.msra.mxu0 0
        %1423 = vmatprep.subr.bf16.mxu0 0
        %1424 = vmatpush1.bf16.msra.mxu0 0
        %1425 = vmatprep.subr.bf16.mxu0 0
        %1426 = vmatpush1.bf16.msra.mxu0 0
        %1427 = vmatprep.mubr.bf16.mxu0 0
        %1428 = vmatmul.mubr.bf16.gmra.mrb[0].mxu0 %v950
        %v1429 = vpop.f32.mrb[0].mxu0
        %v1430 = vadd.f32 0.0, %v1429
        %v1431 = vpop.f32.mrb[0].mxu0
        %v1432 = vadd.f32 0.0, %v1431
        %v1433 = vpop.f32.mrb[0].mxu0
        %v1434 = vpop.f32.mrb[0].mxu0
        %1435 = vdwg.mxu0
        %v1444 = vcombine.low %v1307, %v1309
        %v1445 = vcombine.low %v1348, %v1350
        %v1447 = vunpack.c.l.s4 1983009808
        %v1448 = vunpack.c.0.s8 %v1447
        %v1449 = vlaneseq
        %v1450 = vshrl.u32 %v1449, 7
        %v1451 = vsub.s32 %v1448, %v1450
        %v1452 = vrot.slane %v1444, %v1451
        %v1454 = vunpack.c.l.s4 1983009808
        %v1455 = vunpack.c.0.s8 %v1454
        %v1456 = vlaneseq
        %v1457 = vshrl.u32 %v1456, 7
        %v1458 = vsub.s32 %v1455, %v1457
        %v1459 = vrot.slane %v1445, %v1458
        %v1460 = vcombine.low %v1452, %v1459
        %v1461 = vcombine.low %v1389, %v1391
        %v1462 = vcombine.low %v1430, %v1432
        %v1464 = vunpack.c.l.s4 1983009808
        %v1465 = vunpack.c.0.s8 %v1464
        %v1466 = vlaneseq
        %v1467 = vshrl.u32 %v1466, 7
        %v1468 = vsub.s32 %v1465, %v1467
        %v1469 = vrot.slane %v1461, %v1468
        %v1471 = vunpack.c.l.s4 1983009808
        %v1472 = vunpack.c.0.s8 %v1471
        %v1473 = vlaneseq
        %v1474 = vshrl.u32 %v1473, 7
        %v1475 = vsub.s32 %v1472, %v1474
        %v1476 = vrot.slane %v1462, %v1475
        %v1477 = vcombine.low %v1469, %v1476
        %v1480 = vadd.f32 %v875, %v1460
        %v1481 = vadd.f32 %v876, %v1477
        %s1482 = scalar_lea.vmem %s344, 512 [#allocation10]
        %v1483 = vld [vmem:[%s1482] sm:$0xff]
        %v1484 = vld [vmem:[%s1482 + $0x8] sm:$0xff]
        %v1485 = vld [vmem:[%s1482 + $0x10] sm:$0xff]
        %v1486 = vld [vmem:[%s1482 + $0x18] sm:$0xff]
        %v1487 = vld [vmem:[%s1482 + $0x20] sm:$0xff]
        %v1488 = vld [vmem:[%s1482 + $0x28] sm:$0xff]
        %v1489 = vld [vmem:[%s1482 + $0x30] sm:$0xff]
        %v1490 = vld [vmem:[%s1482 + $0x38] sm:$0xff]
        %v1491 = vld [vmem:[%s1482 + $0x40] sm:$0xff]
        %v1492 = vld [vmem:[%s1482 + $0x48] sm:$0xff]
        %v1493 = vld [vmem:[%s1482 + $0x50] sm:$0xff]
        %v1494 = vld [vmem:[%s1482 + $0x58] sm:$0xff]
        %v1495 = vld [vmem:[%s1482 + $0x60] sm:$0xff]
        %v1496 = vld [vmem:[%s1482 + $0x68] sm:$0xff]
        %v1497 = vld [vmem:[%s1482 + $0x70] sm:$0xff]
        %v1498 = vld [vmem:[%s1482 + $0x78] sm:$0xff]
        %v1499 = vld [vmem:[%s1482 + $0x80] sm:$0xff]
        %v1500 = vld [vmem:[%s1482 + $0x88] sm:$0xff]
        %v1501 = vld [vmem:[%s1482 + $0x90] sm:$0xff]
        %v1502 = vld [vmem:[%s1482 + $0x98] sm:$0xff]
        %v1503 = vld [vmem:[%s1482 + $0xa0] sm:$0xff]
        %v1504 = vld [vmem:[%s1482 + $0xa8] sm:$0xff]
        %v1505 = vld [vmem:[%s1482 + $0xb0] sm:$0xff]
        %v1506 = vld [vmem:[%s1482 + $0xb8] sm:$0xff]
        %v1507 = vld [vmem:[%s1482 + $0xc0] sm:$0xff]
        %v1508 = vld [vmem:[%s1482 + $0xc8] sm:$0xff]
        %v1509 = vld [vmem:[%s1482 + $0xd0] sm:$0xff]
        %v1510 = vld [vmem:[%s1482 + $0xd8] sm:$0xff]
        %v1511 = vld [vmem:[%s1482 + $0xe0] sm:$0xff]
        %v1512 = vld [vmem:[%s1482 + $0xe8] sm:$0xff]
        %v1513 = vld [vmem:[%s1482 + $0xf0] sm:$0xff]
        %v1514 = vld [vmem:[%s1482 + $0xf8] sm:$0xff]
        %v1515 = vld [vmem:[%s1482 + $0x100] sm:$0xff]
        %v1516 = vld [vmem:[%s1482 + $0x108] sm:$0xff]
        %v1517 = vld [vmem:[%s1482 + $0x110] sm:$0xff]
        %v1518 = vld [vmem:[%s1482 + $0x118] sm:$0xff]
        %v1519 = vld [vmem:[%s1482 + $0x120] sm:$0xff]
        %v1520 = vld [vmem:[%s1482 + $0x128] sm:$0xff]
        %v1521 = vld [vmem:[%s1482 + $0x130] sm:$0xff]
        %v1522 = vld [vmem:[%s1482 + $0x138] sm:$0xff]
        %v1523 = vld [vmem:[%s1482 + $0x140] sm:$0xff]
        %v1524 = vld [vmem:[%s1482 + $0x148] sm:$0xff]
        %v1525 = vld [vmem:[%s1482 + $0x150] sm:$0xff]
        %v1526 = vld [vmem:[%s1482 + $0x158] sm:$0xff]
        %v1527 = vld [vmem:[%s1482 + $0x160] sm:$0xff]
        %v1528 = vld [vmem:[%s1482 + $0x168] sm:$0xff]
        %v1529 = vld [vmem:[%s1482 + $0x170] sm:$0xff]
        %v1530 = vld [vmem:[%s1482 + $0x178] sm:$0xff]
        %v1531 = vld [vmem:[%s1482 + $0x180] sm:$0xff]
        %v1532 = vld [vmem:[%s1482 + $0x188] sm:$0xff]
        %v1533 = vld [vmem:[%s1482 + $0x190] sm:$0xff]
        %v1534 = vld [vmem:[%s1482 + $0x198] sm:$0xff]
        %v1535 = vld [vmem:[%s1482 + $0x1a0] sm:$0xff]
        %v1536 = vld [vmem:[%s1482 + $0x1a8] sm:$0xff]
        %v1537 = vld [vmem:[%s1482 + $0x1b0] sm:$0xff]
        %v1538 = vld [vmem:[%s1482 + $0x1b8] sm:$0xff]
        %v1539 = vld [vmem:[%s1482 + $0x1c0] sm:$0xff]
        %v1540 = vld [vmem:[%s1482 + $0x1c8] sm:$0xff]
        %v1541 = vld [vmem:[%s1482 + $0x1d0] sm:$0xff]
        %v1542 = vld [vmem:[%s1482 + $0x1d8] sm:$0xff]
        %v1543 = vld [vmem:[%s1482 + $0x1e0] sm:$0xff]
        %v1544 = vld [vmem:[%s1482 + $0x1e8] sm:$0xff]
        %v1545 = vld [vmem:[%s1482 + $0x1f0] sm:$0xff]
        %v1546 = vld [vmem:[%s1482 + $0x1f8] sm:$0xff]
        %v1547 = vrot.slane %v945, 1
        %v1548 = vsel %vm948, %v946, %v1547
        %v1549 = vpack.c.b16 %v1548, %v1548
        %v1615 = vunpack.c.l.b16 %v1483
        %v1616 = vunpack.c.h.b16 %v1483
        %v1617 = vunpack.c.l.b16 %v1484
        %v1618 = vunpack.c.h.b16 %v1484
        %v1619 = vunpack.c.l.b16 %v1485
        %v1620 = vunpack.c.h.b16 %v1485
        %v1621 = vunpack.c.l.b16 %v1486
        %v1622 = vunpack.c.h.b16 %v1486
        %v1623 = vunpack.c.l.b16 %v1487
        %v1624 = vunpack.c.h.b16 %v1487
        %v1625 = vunpack.c.l.b16 %v1488
        %v1626 = vunpack.c.h.b16 %v1488
        %v1627 = vunpack.c.l.b16 %v1489
        %v1628 = vunpack.c.h.b16 %v1489
        %v1629 = vunpack.c.l.b16 %v1490
        %v1630 = vunpack.c.h.b16 %v1490
        %v1631 = vunpack.c.l.b16 %v1491
        %v1632 = vunpack.c.h.b16 %v1491
        %v1633 = vunpack.c.l.b16 %v1492
        %v1634 = vunpack.c.h.b16 %v1492
        %v1635 = vunpack.c.l.b16 %v1493
        %v1636 = vunpack.c.h.b16 %v1493
        %v1637 = vunpack.c.l.b16 %v1494
        %v1638 = vunpack.c.h.b16 %v1494
        %v1639 = vunpack.c.l.b16 %v1495
        %v1640 = vunpack.c.h.b16 %v1495
        %v1641 = vunpack.c.l.b16 %v1496
        %v1642 = vunpack.c.h.b16 %v1496
        %v1643 = vunpack.c.l.b16 %v1497
        %v1644 = vunpack.c.h.b16 %v1497
        %v1645 = vunpack.c.l.b16 %v1498
        %v1646 = vunpack.c.h.b16 %v1498
        %v1647 = vunpack.c.l.b16 %v1499
        %v1648 = vunpack.c.h.b16 %v1499
        %v1649 = vunpack.c.l.b16 %v1500
        %v1650 = vunpack.c.h.b16 %v1500
        %v1651 = vunpack.c.l.b16 %v1501
        %v1652 = vunpack.c.h.b16 %v1501
        %v1653 = vunpack.c.l.b16 %v1502
        %v1654 = vunpack.c.h.b16 %v1502
        %v1655 = vunpack.c.l.b16 %v1503
        %v1656 = vunpack.c.h.b16 %v1503
        %v1657 = vunpack.c.l.b16 %v1504
        %v1658 = vunpack.c.h.b16 %v1504
        %v1659 = vunpack.c.l.b16 %v1505
        %v1660 = vunpack.c.h.b16 %v1505
        %v1661 = vunpack.c.l.b16 %v1506
        %v1662 = vunpack.c.h.b16 %v1506
        %v1663 = vunpack.c.l.b16 %v1507
        %v1664 = vunpack.c.h.b16 %v1507
        %v1665 = vunpack.c.l.b16 %v1508
        %v1666 = vunpack.c.h.b16 %v1508
        %v1667 = vunpack.c.l.b16 %v1509
        %v1668 = vunpack.c.h.b16 %v1509
        %v1669 = vunpack.c.l.b16 %v1510
        %v1670 = vunpack.c.h.b16 %v1510
        %v1671 = vunpack.c.l.b16 %v1511
        %v1672 = vunpack.c.h.b16 %v1511
        %v1673 = vunpack.c.l.b16 %v1512
        %v1674 = vunpack.c.h.b16 %v1512
        %v1675 = vunpack.c.l.b16 %v1513
        %v1676 = vunpack.c.h.b16 %v1513
        %v1677 = vunpack.c.l.b16 %v1514
        %v1678 = vunpack.c.h.b16 %v1514
        %v1679 = vunpack.c.l.b16 %v1515
        %v1680 = vunpack.c.h.b16 %v1515
        %v1681 = vunpack.c.l.b16 %v1516
        %v1682 = vunpack.c.h.b16 %v1516
        %v1683 = vunpack.c.l.b16 %v1517
        %v1684 = vunpack.c.h.b16 %v1517
        %v1685 = vunpack.c.l.b16 %v1518
        %v1686 = vunpack.c.h.b16 %v1518
        %v1687 = vunpack.c.l.b16 %v1519
        %v1688 = vunpack.c.h.b16 %v1519
        %v1689 = vunpack.c.l.b16 %v1520
        %v1690 = vunpack.c.h.b16 %v1520
        %v1691 = vunpack.c.l.b16 %v1521
        %v1692 = vunpack.c.h.b16 %v1521
        %v1693 = vunpack.c.l.b16 %v1522
        %v1694 = vunpack.c.h.b16 %v1522
        %v1695 = vunpack.c.l.b16 %v1523
        %v1696 = vunpack.c.h.b16 %v1523
        %v1697 = vunpack.c.l.b16 %v1524
        %v1698 = vunpack.c.h.b16 %v1524
        %v1699 = vunpack.c.l.b16 %v1525
        %v1700 = vunpack.c.h.b16 %v1525
        %v1701 = vunpack.c.l.b16 %v1526
        %v1702 = vunpack.c.h.b16 %v1526
        %v1703 = vunpack.c.l.b16 %v1527
        %v1704 = vunpack.c.h.b16 %v1527
        %v1705 = vunpack.c.l.b16 %v1528
        %v1706 = vunpack.c.h.b16 %v1528
        %v1707 = vunpack.c.l.b16 %v1529
        %v1708 = vunpack.c.h.b16 %v1529
        %v1709 = vunpack.c.l.b16 %v1530
        %v1710 = vunpack.c.h.b16 %v1530
        %v1711 = vunpack.c.l.b16 %v1531
        %v1712 = vunpack.c.h.b16 %v1531
        %v1713 = vunpack.c.l.b16 %v1532
        %v1714 = vunpack.c.h.b16 %v1532
        %v1715 = vunpack.c.l.b16 %v1533
        %v1716 = vunpack.c.h.b16 %v1533
        %v1717 = vunpack.c.l.b16 %v1534
        %v1718 = vunpack.c.h.b16 %v1534
        %v1719 = vunpack.c.l.b16 %v1535
        %v1720 = vunpack.c.h.b16 %v1535
        %v1721 = vunpack.c.l.b16 %v1536
        %v1722 = vunpack.c.h.b16 %v1536
        %v1723 = vunpack.c.l.b16 %v1537
        %v1724 = vunpack.c.h.b16 %v1537
        %v1725 = vunpack.c.l.b16 %v1538
        %v1726 = vunpack.c.h.b16 %v1538
        %v1727 = vunpack.c.l.b16 %v1539
        %v1728 = vunpack.c.h.b16 %v1539
        %v1729 = vunpack.c.l.b16 %v1540
        %v1730 = vunpack.c.h.b16 %v1540
        %v1731 = vunpack.c.l.b16 %v1541
        %v1732 = vunpack.c.h.b16 %v1541
        %v1733 = vunpack.c.l.b16 %v1542
        %v1734 = vunpack.c.h.b16 %v1542
        %v1735 = vunpack.c.l.b16 %v1543
        %v1736 = vunpack.c.h.b16 %v1543
        %v1737 = vunpack.c.l.b16 %v1544
        %v1738 = vunpack.c.h.b16 %v1544
        %v1739 = vunpack.c.l.b16 %v1545
        %v1740 = vunpack.c.h.b16 %v1545
        %v1741 = vunpack.c.l.b16 %v1546
        %v1742 = vunpack.c.h.b16 %v1546
        %v1743 = vpack.c.b16 %v1623, %v1615
        %v1744 = vpack.c.b16 %v1624, %v1616
        %v1745 = vpack.c.b16 %v1625, %v1617
        %v1746 = vpack.c.b16 %v1626, %v1618
        %v1747 = vpack.c.b16 %v1627, %v1619
        %v1748 = vpack.c.b16 %v1628, %v1620
        %v1749 = vpack.c.b16 %v1629, %v1621
        %v1750 = vpack.c.b16 %v1630, %v1622
        %v1751 = vpack.c.b16 %v1639, %v1631
        %v1752 = vpack.c.b16 %v1640, %v1632
        %v1753 = vpack.c.b16 %v1641, %v1633
        %v1754 = vpack.c.b16 %v1642, %v1634
        %v1755 = vpack.c.b16 %v1643, %v1635
        %v1756 = vpack.c.b16 %v1644, %v1636
        %v1757 = vpack.c.b16 %v1645, %v1637
        %v1758 = vpack.c.b16 %v1646, %v1638
        %v1759 = vpack.c.b16 %v1655, %v1647
        %v1760 = vpack.c.b16 %v1656, %v1648
        %v1761 = vpack.c.b16 %v1657, %v1649
        %v1762 = vpack.c.b16 %v1658, %v1650
        %v1763 = vpack.c.b16 %v1659, %v1651
        %v1764 = vpack.c.b16 %v1660, %v1652
        %v1765 = vpack.c.b16 %v1661, %v1653
        %v1766 = vpack.c.b16 %v1662, %v1654
        %v1767 = vpack.c.b16 %v1671, %v1663
        %v1768 = vpack.c.b16 %v1672, %v1664
        %v1769 = vpack.c.b16 %v1673, %v1665
        %v1770 = vpack.c.b16 %v1674, %v1666
        %v1771 = vpack.c.b16 %v1675, %v1667
        %v1772 = vpack.c.b16 %v1676, %v1668
        %v1773 = vpack.c.b16 %v1677, %v1669
        %v1774 = vpack.c.b16 %v1678, %v1670
        %v1775 = vpack.c.b16 %v1687, %v1679
        %v1776 = vpack.c.b16 %v1688, %v1680
        %v1777 = vpack.c.b16 %v1689, %v1681
        %v1778 = vpack.c.b16 %v1690, %v1682
        %v1779 = vpack.c.b16 %v1691, %v1683
        %v1780 = vpack.c.b16 %v1692, %v1684
        %v1781 = vpack.c.b16 %v1693, %v1685
        %v1782 = vpack.c.b16 %v1694, %v1686
        %v1783 = vpack.c.b16 %v1703, %v1695
        %v1784 = vpack.c.b16 %v1704, %v1696
        %v1785 = vpack.c.b16 %v1705, %v1697
        %v1786 = vpack.c.b16 %v1706, %v1698
        %v1787 = vpack.c.b16 %v1707, %v1699
        %v1788 = vpack.c.b16 %v1708, %v1700
        %v1789 = vpack.c.b16 %v1709, %v1701
        %v1790 = vpack.c.b16 %v1710, %v1702
        %v1791 = vpack.c.b16 %v1719, %v1711
        %v1792 = vpack.c.b16 %v1720, %v1712
        %v1793 = vpack.c.b16 %v1721, %v1713
        %v1794 = vpack.c.b16 %v1722, %v1714
        %v1795 = vpack.c.b16 %v1723, %v1715
        %v1796 = vpack.c.b16 %v1724, %v1716
        %v1797 = vpack.c.b16 %v1725, %v1717
        %v1798 = vpack.c.b16 %v1726, %v1718
        %v1799 = vpack.c.b16 %v1735, %v1727
        %v1800 = vpack.c.b16 %v1736, %v1728
        %v1801 = vpack.c.b16 %v1737, %v1729
        %v1802 = vpack.c.b16 %v1738, %v1730
        %v1803 = vpack.c.b16 %v1739, %v1731
        %v1804 = vpack.c.b16 %v1740, %v1732
        %v1805 = vpack.c.b16 %v1741, %v1733
        %v1806 = vpack.c.b16 %v1742, %v1734
        %1871 = vmatprep.subr.bf16.mxu0 %v1744
        %1872 = vmatpush1.bf16.msra.mxu0 %v1743
        %1873 = vmatprep.subr.bf16.mxu0 %v1752
        %1874 = vmatpush1.bf16.msra.mxu0 %v1751
        %1875 = vmatprep.subr.bf16.mxu0 %v1760
        %1876 = vmatpush1.bf16.msra.mxu0 %v1759
        %1877 = vmatprep.subr.bf16.mxu0 %v1768
        %1878 = vmatpush1.bf16.msra.mxu0 %v1767
        %1879 = vmatprep.subr.bf16.mxu0 %v1776
        %1880 = vmatpush1.bf16.msra.mxu0 %v1775
        %1881 = vmatprep.subr.bf16.mxu0 %v1784
        %1882 = vmatpush1.bf16.msra.mxu0 %v1783
        %1883 = vmatprep.subr.bf16.mxu0 %v1792
        %1884 = vmatpush1.bf16.msra.mxu0 %v1791
        %1885 = vmatprep.subr.bf16.mxu0 %v1800
        %1886 = vmatpush1.bf16.msra.mxu0 %v1799
        %1887 = vmatprep.subr.bf16.mxu0 0
        %1888 = vmatpush1.bf16.msra.mxu0 0
        %1889 = vmatprep.subr.bf16.mxu0 0
        %1890 = vmatpush1.bf16.msra.mxu0 0
        %1891 = vmatprep.subr.bf16.mxu0 0
        %1892 = vmatpush1.bf16.msra.mxu0 0
        %1893 = vmatprep.subr.bf16.mxu0 0
        %1894 = vmatpush1.bf16.msra.mxu0 0
        %1895 = vmatprep.subr.bf16.mxu0 0
        %1896 = vmatpush1.bf16.msra.mxu0 0
        %1897 = vmatprep.subr.bf16.mxu0 0
        %1898 = vmatpush1.bf16.msra.mxu0 0
        %1899 = vmatprep.subr.bf16.mxu0 0
        %1900 = vmatpush1.bf16.msra.mxu0 0
        %1901 = vmatprep.subr.bf16.mxu0 0
        %1902 = vmatpush1.bf16.msra.mxu0 0
        %1903 = vmatprep.mubr.bf16.mxu0 0
        %1904 = vmatmul.mubr.bf16.gmra.mrb[0].mxu0 %v1549
        %v1905 = vpop.f32.mrb[0].mxu0
        %v1906 = vadd.f32 0.0, %v1905
        %v1907 = vpop.f32.mrb[0].mxu0
        %v1908 = vadd.f32 0.0, %v1907
        %v1909 = vpop.f32.mrb[0].mxu0
        %v1910 = vpop.f32.mrb[0].mxu0
        %1911 = vdwg.mxu0
        %1912 = vmatprep.subr.bf16.mxu0 %v1746
        %1913 = vmatpush1.bf16.msra.mxu0 %v1745
        %1914 = vmatprep.subr.bf16.mxu0 %v1754
        %1915 = vmatpush1.bf16.msra.mxu0 %v1753
        %1916 = vmatprep.subr.bf16.mxu0 %v1762
        %1917 = vmatpush1.bf16.msra.mxu0 %v1761
        %1918 = vmatprep.subr.bf16.mxu0 %v1770
        %1919 = vmatpush1.bf16.msra.mxu0 %v1769
        %1920 = vmatprep.subr.bf16.mxu0 %v1778
        %1921 = vmatpush1.bf16.msra.mxu0 %v1777
        %1922 = vmatprep.subr.bf16.mxu0 %v1786
        %1923 = vmatpush1.bf16.msra.mxu0 %v1785
        %1924 = vmatprep.subr.bf16.mxu0 %v1794
        %1925 = vmatpush1.bf16.msra.mxu0 %v1793
        %1926 = vmatprep.subr.bf16.mxu0 %v1802
        %1927 = vmatpush1.bf16.msra.mxu0 %v1801
        %1928 = vmatprep.subr.bf16.mxu0 0
        %1929 = vmatpush1.bf16.msra.mxu0 0
        %1930 = vmatprep.subr.bf16.mxu0 0
        %1931 = vmatpush1.bf16.msra.mxu0 0
        %1932 = vmatprep.subr.bf16.mxu0 0
        %1933 = vmatpush1.bf16.msra.mxu0 0
        %1934 = vmatprep.subr.bf16.mxu0 0
        %1935 = vmatpush1.bf16.msra.mxu0 0
        %1936 = vmatprep.subr.bf16.mxu0 0
        %1937 = vmatpush1.bf16.msra.mxu0 0
        %1938 = vmatprep.subr.bf16.mxu0 0
        %1939 = vmatpush1.bf16.msra.mxu0 0
        %1940 = vmatprep.subr.bf16.mxu0 0
        %1941 = vmatpush1.bf16.msra.mxu0 0
        %1942 = vmatprep.subr.bf16.mxu0 0
        %1943 = vmatpush1.bf16.msra.mxu0 0
        %1944 = vmatprep.mubr.bf16.mxu0 0
        %1945 = vmatmul.mubr.bf16.gmra.mrb[0].mxu0 %v1549
        %v1946 = vpop.f32.mrb[0].mxu0
        %v1947 = vadd.f32 0.0, %v1946
        %v1948 = vpop.f32.mrb[0].mxu0
        %v1949 = vadd.f32 0.0, %v1948
        %v1950 = vpop.f32.mrb[0].mxu0
        %v1951 = vpop.f32.mrb[0].mxu0
        %1952 = vdwg.mxu0
        %1953 = vmatprep.subr.bf16.mxu0 %v1748
        %1954 = vmatpush1.bf16.msra.mxu0 %v1747
        %1955 = vmatprep.subr.bf16.mxu0 %v1756
        %1956 = vmatpush1.bf16.msra.mxu0 %v1755
        %1957 = vmatprep.subr.bf16.mxu0 %v1764
        %1958 = vmatpush1.bf16.msra.mxu0 %v1763
        %1959 = vmatprep.subr.bf16.mxu0 %v1772
        %1960 = vmatpush1.bf16.msra.mxu0 %v1771
        %1961 = vmatprep.subr.bf16.mxu0 %v1780
        %1962 = vmatpush1.bf16.msra.mxu0 %v1779
        %1963 = vmatprep.subr.bf16.mxu0 %v1788
        %1964 = vmatpush1.bf16.msra.mxu0 %v1787
        %1965 = vmatprep.subr.bf16.mxu0 %v1796
        %1966 = vmatpush1.bf16.msra.mxu0 %v1795
        %1967 = vmatprep.subr.bf16.mxu0 %v1804
        %1968 = vmatpush1.bf16.msra.mxu0 %v1803
        %1969 = vmatprep.subr.bf16.mxu0 0
        %1970 = vmatpush1.bf16.msra.mxu0 0
        %1971 = vmatprep.subr.bf16.mxu0 0
        %1972 = vmatpush1.bf16.msra.mxu0 0
        %1973 = vmatprep.subr.bf16.mxu0 0
        %1974 = vmatpush1.bf16.msra.mxu0 0
        %1975 = vmatprep.subr.bf16.mxu0 0
        %1976 = vmatpush1.bf16.msra.mxu0 0
        %1977 = vmatprep.subr.bf16.mxu0 0
        %1978 = vmatpush1.bf16.msra.mxu0 0
        %1979 = vmatprep.subr.bf16.mxu0 0
        %1980 = vmatpush1.bf16.msra.mxu0 0
        %1981 = vmatprep.subr.bf16.mxu0 0
        %1982 = vmatpush1.bf16.msra.mxu0 0
        %1983 = vmatprep.subr.bf16.mxu0 0
        %1984 = vmatpush1.bf16.msra.mxu0 0
        %1985 = vmatprep.mubr.bf16.mxu0 0
        %1986 = vmatmul.mubr.bf16.gmra.mrb[0].mxu0 %v1549
        %v1987 = vpop.f32.mrb[0].mxu0
        %v1988 = vadd.f32 0.0, %v1987
        %v1989 = vpop.f32.mrb[0].mxu0
        %v1990 = vadd.f32 0.0, %v1989
        %v1991 = vpop.f32.mrb[0].mxu0
        %v1992 = vpop.f32.mrb[0].mxu0
        %1993 = vdwg.mxu0
        %1994 = vmatprep.subr.bf16.mxu0 %v1750
        %1995 = vmatpush1.bf16.msra.mxu0 %v1749
        %1996 = vmatprep.subr.bf16.mxu0 %v1758
        %1997 = vmatpush1.bf16.msra.mxu0 %v1757
        %1998 = vmatprep.subr.bf16.mxu0 %v1766
        %1999 = vmatpush1.bf16.msra.mxu0 %v1765
        %2000 = vmatprep.subr.bf16.mxu0 %v1774
        %2001 = vmatpush1.bf16.msra.mxu0 %v1773
        %2002 = vmatprep.subr.bf16.mxu0 %v1782
        %2003 = vmatpush1.bf16.msra.mxu0 %v1781
        %2004 = vmatprep.subr.bf16.mxu0 %v1790
        %2005 = vmatpush1.bf16.msra.mxu0 %v1789
        %2006 = vmatprep.subr.bf16.mxu0 %v1798
        %2007 = vmatpush1.bf16.msra.mxu0 %v1797
        %2008 = vmatprep.subr.bf16.mxu0 %v1806
        %2009 = vmatpush1.bf16.msra.mxu0 %v1805
        %2010 = vmatprep.subr.bf16.mxu0 0
        %2011 = vmatpush1.bf16.msra.mxu0 0
        %2012 = vmatprep.subr.bf16.mxu0 0
        %2013 = vmatpush1.bf16.msra.mxu0 0
        %2014 = vmatprep.subr.bf16.mxu0 0
        %2015 = vmatpush1.bf16.msra.mxu0 0
        %2016 = vmatprep.subr.bf16.mxu0 0
        %2017 = vmatpush1.bf16.msra.mxu0 0
        %2018 = vmatprep.subr.bf16.mxu0 0
        %2019 = vmatpush1.bf16.msra.mxu0 0
        %2020 = vmatprep.subr.bf16.mxu0 0
        %2021 = vmatpush1.bf16.msra.mxu0 0
        %2022 = vmatprep.subr.bf16.mxu0 0
        %2023 = vmatpush1.bf16.msra.mxu0 0
        %2024 = vmatprep.subr.bf16.mxu0 0
        %2025 = vmatpush1.bf16.msra.mxu0 0
        %2026 = vmatprep.mubr.bf16.mxu0 0
        %2027 = vmatmul.mubr.bf16.gmra.mrb[0].mxu0 %v1549
        %v2028 = vpop.f32.mrb[0].mxu0
        %v2029 = vadd.f32 0.0, %v2028
        %v2030 = vpop.f32.mrb[0].mxu0
        %v2031 = vadd.f32 0.0, %v2030
        %v2032 = vpop.f32.mrb[0].mxu0
        %v2033 = vpop.f32.mrb[0].mxu0
        %2034 = vdwg.mxu0
        %v2043 = vcombine.low %v1906, %v1908
        %v2044 = vcombine.low %v1947, %v1949
        %v2046 = vunpack.c.l.s4 1983009808
        %v2047 = vunpack.c.0.s8 %v2046
        %v2048 = vlaneseq
        %v2049 = vshrl.u32 %v2048, 7
        %v2050 = vsub.s32 %v2047, %v2049
        %v2051 = vrot.slane %v2043, %v2050
        %v2053 = vunpack.c.l.s4 1983009808
        %v2054 = vunpack.c.0.s8 %v2053
        %v2055 = vlaneseq
        %v2056 = vshrl.u32 %v2055, 7
        %v2057 = vsub.s32 %v2054, %v2056
        %v2058 = vrot.slane %v2044, %v2057
        %v2059 = vcombine.low %v2051, %v2058
        %v2060 = vcombine.low %v1988, %v1990
        %v2061 = vcombine.low %v2029, %v2031
        %v2063 = vunpack.c.l.s4 1983009808
        %v2064 = vunpack.c.0.s8 %v2063
        %v2065 = vlaneseq
        %v2066 = vshrl.u32 %v2065, 7
        %v2067 = vsub.s32 %v2064, %v2066
        %v2068 = vrot.slane %v2060, %v2067
        %v2070 = vunpack.c.l.s4 1983009808
        %v2071 = vunpack.c.0.s8 %v2070
        %v2072 = vlaneseq
        %v2073 = vshrl.u32 %v2072, 7
        %v2074 = vsub.s32 %v2071, %v2073
        %v2075 = vrot.slane %v2061, %v2074
        %v2076 = vcombine.low %v2068, %v2075
        %v2079 = vadd.f32 %v1480, %v2059
        %v2080 = vadd.f32 %v1481, %v2076
        %s2081 = scalar_lea.vmem %s344, 1024 [#allocation10]
        %v2082 = vld [vmem:[%s2081] sm:$0xff]
        %v2083 = vld [vmem:[%s2081 + $0x8] sm:$0xff]
        %v2084 = vld [vmem:[%s2081 + $0x10] sm:$0xff]
        %v2085 = vld [vmem:[%s2081 + $0x18] sm:$0xff]
        %v2086 = vld [vmem:[%s2081 + $0x20] sm:$0xff]
        %v2087 = vld [vmem:[%s2081 + $0x28] sm:$0xff]
        %v2088 = vld [vmem:[%s2081 + $0x30] sm:$0xff]
        %v2089 = vld [vmem:[%s2081 + $0x38] sm:$0xff]
        %v2090 = vld [vmem:[%s2081 + $0x40] sm:$0xff]
        %v2091 = vld [vmem:[%s2081 + $0x48] sm:$0xff]
        %v2092 = vld [vmem:[%s2081 + $0x50] sm:$0xff]
        %v2093 = vld [vmem:[%s2081 + $0x58] sm:$0xff]
        %v2094 = vld [vmem:[%s2081 + $0x60] sm:$0xff]
        %v2095 = vld [vmem:[%s2081 + $0x68] sm:$0xff]
        %v2096 = vld [vmem:[%s2081 + $0x70] sm:$0xff]
        %v2097 = vld [vmem:[%s2081 + $0x78] sm:$0xff]
        %v2098 = vld [vmem:[%s2081 + $0x80] sm:$0xff]
        %v2099 = vld [vmem:[%s2081 + $0x88] sm:$0xff]
        %v2100 = vld [vmem:[%s2081 + $0x90] sm:$0xff]
        %v2101 = vld [vmem:[%s2081 + $0x98] sm:$0xff]
        %v2102 = vld [vmem:[%s2081 + $0xa0] sm:$0xff]
        %v2103 = vld [vmem:[%s2081 + $0xa8] sm:$0xff]
        %v2104 = vld [vmem:[%s2081 + $0xb0] sm:$0xff]
        %v2105 = vld [vmem:[%s2081 + $0xb8] sm:$0xff]
        %v2106 = vld [vmem:[%s2081 + $0xc0] sm:$0xff]
        %v2107 = vld [vmem:[%s2081 + $0xc8] sm:$0xff]
        %v2108 = vld [vmem:[%s2081 + $0xd0] sm:$0xff]
        %v2109 = vld [vmem:[%s2081 + $0xd8] sm:$0xff]
        %v2110 = vld [vmem:[%s2081 + $0xe0] sm:$0xff]
        %v2111 = vld [vmem:[%s2081 + $0xe8] sm:$0xff]
        %v2112 = vld [vmem:[%s2081 + $0xf0] sm:$0xff]
        %v2113 = vld [vmem:[%s2081 + $0xf8] sm:$0xff]
        %v2114 = vld [vmem:[%s2081 + $0x100] sm:$0xff]
        %v2115 = vld [vmem:[%s2081 + $0x108] sm:$0xff]
        %v2116 = vld [vmem:[%s2081 + $0x110] sm:$0xff]
        %v2117 = vld [vmem:[%s2081 + $0x118] sm:$0xff]
        %v2118 = vld [vmem:[%s2081 + $0x120] sm:$0xff]
        %v2119 = vld [vmem:[%s2081 + $0x128] sm:$0xff]
        %v2120 = vld [vmem:[%s2081 + $0x130] sm:$0xff]
        %v2121 = vld [vmem:[%s2081 + $0x138] sm:$0xff]
        %v2122 = vld [vmem:[%s2081 + $0x140] sm:$0xff]
        %v2123 = vld [vmem:[%s2081 + $0x148] sm:$0xff]
        %v2124 = vld [vmem:[%s2081 + $0x150] sm:$0xff]
        %v2125 = vld [vmem:[%s2081 + $0x158] sm:$0xff]
        %v2126 = vld [vmem:[%s2081 + $0x160] sm:$0xff]
        %v2127 = vld [vmem:[%s2081 + $0x168] sm:$0xff]
        %v2128 = vld [vmem:[%s2081 + $0x170] sm:$0xff]
        %v2129 = vld [vmem:[%s2081 + $0x178] sm:$0xff]
        %v2130 = vld [vmem:[%s2081 + $0x180] sm:$0xff]
        %v2131 = vld [vmem:[%s2081 + $0x188] sm:$0xff]
        %v2132 = vld [vmem:[%s2081 + $0x190] sm:$0xff]
        %v2133 = vld [vmem:[%s2081 + $0x198] sm:$0xff]
        %v2134 = vld [vmem:[%s2081 + $0x1a0] sm:$0xff]
        %v2135 = vld [vmem:[%s2081 + $0x1a8] sm:$0xff]
        %v2136 = vld [vmem:[%s2081 + $0x1b0] sm:$0xff]
        %v2137 = vld [vmem:[%s2081 + $0x1b8] sm:$0xff]
        %v2138 = vld [vmem:[%s2081 + $0x1c0] sm:$0xff]
        %v2139 = vld [vmem:[%s2081 + $0x1c8] sm:$0xff]
        %v2140 = vld [vmem:[%s2081 + $0x1d0] sm:$0xff]
        %v2141 = vld [vmem:[%s2081 + $0x1d8] sm:$0xff]
        %v2142 = vld [vmem:[%s2081 + $0x1e0] sm:$0xff]
        %v2143 = vld [vmem:[%s2081 + $0x1e8] sm:$0xff]
        %v2144 = vld [vmem:[%s2081 + $0x1f0] sm:$0xff]
        %v2145 = vld [vmem:[%s2081 + $0x1f8] sm:$0xff]
        %v2146 = vrot.slane %v945, 2
        %v2147 = vrot.slane %v946, 1
        %v2148 = vsel %vm948, %v2147, %v2146
        %v2149 = vpack.c.b16 %v2148, %v2148
        %v2215 = vunpack.c.l.b16 %v2082
        %v2216 = vunpack.c.h.b16 %v2082
        %v2217 = vunpack.c.l.b16 %v2083
        %v2218 = vunpack.c.h.b16 %v2083
        %v2219 = vunpack.c.l.b16 %v2084
        %v2220 = vunpack.c.h.b16 %v2084
        %v2221 = vunpack.c.l.b16 %v2085
        %v2222 = vunpack.c.h.b16 %v2085
        %v2223 = vunpack.c.l.b16 %v2086
        %v2224 = vunpack.c.h.b16 %v2086
        %v2225 = vunpack.c.l.b16 %v2087
        %v2226 = vunpack.c.h.b16 %v2087
        %v2227 = vunpack.c.l.b16 %v2088
        %v2228 = vunpack.c.h.b16 %v2088
        %v2229 = vunpack.c.l.b16 %v2089
        %v2230 = vunpack.c.h.b16 %v2089
        %v2231 = vunpack.c.l.b16 %v2090
        %v2232 = vunpack.c.h.b16 %v2090
        %v2233 = vunpack.c.l.b16 %v2091
        %v2234 = vunpack.c.h.b16 %v2091
        %v2235 = vunpack.c.l.b16 %v2092
        %v2236 = vunpack.c.h.b16 %v2092
        %v2237 = vunpack.c.l.b16 %v2093
        %v2238 = vunpack.c.h.b16 %v2093
        %v2239 = vunpack.c.l.b16 %v2094
        %v2240 = vunpack.c.h.b16 %v2094
        %v2241 = vunpack.c.l.b16 %v2095
        %v2242 = vunpack.c.h.b16 %v2095
        %v2243 = vunpack.c.l.b16 %v2096
        %v2244 = vunpack.c.h.b16 %v2096
        %v2245 = vunpack.c.l.b16 %v2097
        %v2246 = vunpack.c.h.b16 %v2097
        %v2247 = vunpack.c.l.b16 %v2098
        %v2248 = vunpack.c.h.b16 %v2098
        %v2249 = vunpack.c.l.b16 %v2099
        %v2250 = vunpack.c.h.b16 %v2099
        %v2251 = vunpack.c.l.b16 %v2100
        %v2252 = vunpack.c.h.b16 %v2100
        %v2253 = vunpack.c.l.b16 %v2101
        %v2254 = vunpack.c.h.b16 %v2101
        %v2255 = vunpack.c.l.b16 %v2102
        %v2256 = vunpack.c.h.b16 %v2102
        %v2257 = vunpack.c.l.b16 %v2103
        %v2258 = vunpack.c.h.b16 %v2103
        %v2259 = vunpack.c.l.b16 %v2104
        %v2260 = vunpack.c.h.b16 %v2104
        %v2261 = vunpack.c.l.b16 %v2105
        %v2262 = vunpack.c.h.b16 %v2105
        %v2263 = vunpack.c.l.b16 %v2106
        %v2264 = vunpack.c.h.b16 %v2106
        %v2265 = vunpack.c.l.b16 %v2107
        %v2266 = vunpack.c.h.b16 %v2107
        %v2267 = vunpack.c.l.b16 %v2108
        %v2268 = vunpack.c.h.b16 %v2108
        %v2269 = vunpack.c.l.b16 %v2109
        %v2270 = vunpack.c.h.b16 %v2109
        %v2271 = vunpack.c.l.b16 %v2110
        %v2272 = vunpack.c.h.b16 %v2110
        %v2273 = vunpack.c.l.b16 %v2111
        %v2274 = vunpack.c.h.b16 %v2111
        %v2275 = vunpack.c.l.b16 %v2112
        %v2276 = vunpack.c.h.b16 %v2112
        %v2277 = vunpack.c.l.b16 %v2113
        %v2278 = vunpack.c.h.b16 %v2113
        %v2279 = vunpack.c.l.b16 %v2114
        %v2280 = vunpack.c.h.b16 %v2114
        %v2281 = vunpack.c.l.b16 %v2115
        %v2282 = vunpack.c.h.b16 %v2115
        %v2283 = vunpack.c.l.b16 %v2116
        %v2284 = vunpack.c.h.b16 %v2116
        %v2285 = vunpack.c.l.b16 %v2117
        %v2286 = vunpack.c.h.b16 %v2117
        %v2287 = vunpack.c.l.b16 %v2118
        %v2288 = vunpack.c.h.b16 %v2118
        %v2289 = vunpack.c.l.b16 %v2119
        %v2290 = vunpack.c.h.b16 %v2119
        %v2291 = vunpack.c.l.b16 %v2120
        %v2292 = vunpack.c.h.b16 %v2120
        %v2293 = vunpack.c.l.b16 %v2121
        %v2294 = vunpack.c.h.b16 %v2121
        %v2295 = vunpack.c.l.b16 %v2122
        %v2296 = vunpack.c.h.b16 %v2122
        %v2297 = vunpack.c.l.b16 %v2123
        %v2298 = vunpack.c.h.b16 %v2123
        %v2299 = vunpack.c.l.b16 %v2124
        %v2300 = vunpack.c.h.b16 %v2124
        %v2301 = vunpack.c.l.b16 %v2125
        %v2302 = vunpack.c.h.b16 %v2125
        %v2303 = vunpack.c.l.b16 %v2126
        %v2304 = vunpack.c.h.b16 %v2126
        %v2305 = vunpack.c.l.b16 %v2127
        %v2306 = vunpack.c.h.b16 %v2127
        %v2307 = vunpack.c.l.b16 %v2128
        %v2308 = vunpack.c.h.b16 %v2128
        %v2309 = vunpack.c.l.b16 %v2129
        %v2310 = vunpack.c.h.b16 %v2129
        %v2311 = vunpack.c.l.b16 %v2130
        %v2312 = vunpack.c.h.b16 %v2130
        %v2313 = vunpack.c.l.b16 %v2131
        %v2314 = vunpack.c.h.b16 %v2131
        %v2315 = vunpack.c.l.b16 %v2132
        %v2316 = vunpack.c.h.b16 %v2132
        %v2317 = vunpack.c.l.b16 %v2133
        %v2318 = vunpack.c.h.b16 %v2133
        %v2319 = vunpack.c.l.b16 %v2134
        %v2320 = vunpack.c.h.b16 %v2134
        %v2321 = vunpack.c.l.b16 %v2135
        %v2322 = vunpack.c.h.b16 %v2135
        %v2323 = vunpack.c.l.b16 %v2136
        %v2324 = vunpack.c.h.b16 %v2136
        %v2325 = vunpack.c.l.b16 %v2137
        %v2326 = vunpack.c.h.b16 %v2137
        %v2327 = vunpack.c.l.b16 %v2138
        %v2328 = vunpack.c.h.b16 %v2138
        %v2329 = vunpack.c.l.b16 %v2139
        %v2330 = vunpack.c.h.b16 %v2139
        %v2331 = vunpack.c.l.b16 %v2140
        %v2332 = vunpack.c.h.b16 %v2140
        %v2333 = vunpack.c.l.b16 %v2141
        %v2334 = vunpack.c.h.b16 %v2141
        %v2335 = vunpack.c.l.b16 %v2142
        %v2336 = vunpack.c.h.b16 %v2142
        %v2337 = vunpack.c.l.b16 %v2143
        %v2338 = vunpack.c.h.b16 %v2143
        %v2339 = vunpack.c.l.b16 %v2144
        %v2340 = vunpack.c.h.b16 %v2144
        %v2341 = vunpack.c.l.b16 %v2145
        %v2342 = vunpack.c.h.b16 %v2145
        %v2343 = vpack.c.b16 %v2223, %v2215
        %v2344 = vpack.c.b16 %v2224, %v2216
        %v2345 = vpack.c.b16 %v2225, %v2217
        %v2346 = vpack.c.b16 %v2226, %v2218
        %v2347 = vpack.c.b16 %v2227, %v2219
        %v2348 = vpack.c.b16 %v2228, %v2220
        %v2349 = vpack.c.b16 %v2229, %v2221
        %v2350 = vpack.c.b16 %v2230, %v2222
        %v2351 = vpack.c.b16 %v2239, %v2231
        %v2352 = vpack.c.b16 %v2240, %v2232
        %v2353 = vpack.c.b16 %v2241, %v2233
        %v2354 = vpack.c.b16 %v2242, %v2234
        %v2355 = vpack.c.b16 %v2243, %v2235
        %v2356 = vpack.c.b16 %v2244, %v2236
        %v2357 = vpack.c.b16 %v2245, %v2237
        %v2358 = vpack.c.b16 %v2246, %v2238
        %v2359 = vpack.c.b16 %v2255, %v2247
        %v2360 = vpack.c.b16 %v2256, %v2248
        %v2361 = vpack.c.b16 %v2257, %v2249
        %v2362 = vpack.c.b16 %v2258, %v2250
        %v2363 = vpack.c.b16 %v2259, %v2251
        %v2364 = vpack.c.b16 %v2260, %v2252
        %v2365 = vpack.c.b16 %v2261, %v2253
        %v2366 = vpack.c.b16 %v2262, %v2254
        %v2367 = vpack.c.b16 %v2271, %v2263
        %v2368 = vpack.c.b16 %v2272, %v2264
        %v2369 = vpack.c.b16 %v2273, %v2265
        %v2370 = vpack.c.b16 %v2274, %v2266
        %v2371 = vpack.c.b16 %v2275, %v2267
        %v2372 = vpack.c.b16 %v2276, %v2268
        %v2373 = vpack.c.b16 %v2277, %v2269
        %v2374 = vpack.c.b16 %v2278, %v2270
        %v2375 = vpack.c.b16 %v2287, %v2279
        %v2376 = vpack.c.b16 %v2288, %v2280
        %v2377 = vpack.c.b16 %v2289, %v2281
        %v2378 = vpack.c.b16 %v2290, %v2282
        %v2379 = vpack.c.b16 %v2291, %v2283
        %v2380 = vpack.c.b16 %v2292, %v2284
        %v2381 = vpack.c.b16 %v2293, %v2285
        %v2382 = vpack.c.b16 %v2294, %v2286
        %v2383 = vpack.c.b16 %v2303, %v2295
        %v2384 = vpack.c.b16 %v2304, %v2296
        %v2385 = vpack.c.b16 %v2305, %v2297
        %v2386 = vpack.c.b16 %v2306, %v2298
        %v2387 = vpack.c.b16 %v2307, %v2299
        %v2388 = vpack.c.b16 %v2308, %v2300
        %v2389 = vpack.c.b16 %v2309, %v2301
        %v2390 = vpack.c.b16 %v2310, %v2302
        %v2391 = vpack.c.b16 %v2319, %v2311
        %v2392 = vpack.c.b16 %v2320, %v2312
        %v2393 = vpack.c.b16 %v2321, %v2313
        %v2394 = vpack.c.b16 %v2322, %v2314
        %v2395 = vpack.c.b16 %v2323, %v2315
        %v2396 = vpack.c.b16 %v2324, %v2316
        %v2397 = vpack.c.b16 %v2325, %v2317
        %v2398 = vpack.c.b16 %v2326, %v2318
        %v2399 = vpack.c.b16 %v2335, %v2327
        %v2400 = vpack.c.b16 %v2336, %v2328
        %v2401 = vpack.c.b16 %v2337, %v2329
        %v2402 = vpack.c.b16 %v2338, %v2330
        %v2403 = vpack.c.b16 %v2339, %v2331
        %v2404 = vpack.c.b16 %v2340, %v2332
        %v2405 = vpack.c.b16 %v2341, %v2333
        %v2406 = vpack.c.b16 %v2342, %v2334
        %2471 = vmatprep.subr.bf16.mxu0 %v2344
        %2472 = vmatpush1.bf16.msra.mxu0 %v2343
        %2473 = vmatprep.subr.bf16.mxu0 %v2352
        %2474 = vmatpush1.bf16.msra.mxu0 %v2351
        %2475 = vmatprep.subr.bf16.mxu0 %v2360
        %2476 = vmatpush1.bf16.msra.mxu0 %v2359
        %2477 = vmatprep.subr.bf16.mxu0 %v2368
        %2478 = vmatpush1.bf16.msra.mxu0 %v2367
        %2479 = vmatprep.subr.bf16.mxu0 %v2376
        %2480 = vmatpush1.bf16.msra.mxu0 %v2375
        %2481 = vmatprep.subr.bf16.mxu0 %v2384
        %2482 = vmatpush1.bf16.msra.mxu0 %v2383
        %2483 = vmatprep.subr.bf16.mxu0 %v2392
        %2484 = vmatpush1.bf16.msra.mxu0 %v2391
        %2485 = vmatprep.subr.bf16.mxu0 %v2400
        %2486 = vmatpush1.bf16.msra.mxu0 %v2399
        %2487 = vmatprep.subr.bf16.mxu0 0
        %2488 = vmatpush1.bf16.msra.mxu0 0
        %2489 = vmatprep.subr.bf16.mxu0 0
        %2490 = vmatpush1.bf16.msra.mxu0 0
        %2491 = vmatprep.subr.bf16.mxu0 0
        %2492 = vmatpush1.bf16.msra.mxu0 0
        %2493 = vmatprep.subr.bf16.mxu0 0
        %2494 = vmatpush1.bf16.msra.mxu0 0
        %2495 = vmatprep.subr.bf16.mxu0 0
        %2496 = vmatpush1.bf16.msra.mxu0 0
        %2497 = vmatprep.subr.bf16.mxu0 0
        %2498 = vmatpush1.bf16.msra.mxu0 0
        %2499 = vmatprep.subr.bf16.mxu0 0
        %2500 = vmatpush1.bf16.msra.mxu0 0
        %2501 = vmatprep.subr.bf16.mxu0 0
        %2502 = vmatpush1.bf16.msra.mxu0 0
        %2503 = vmatprep.mubr.bf16.mxu0 0
        %2504 = vmatmul.mubr.bf16.gmra.mrb[0].mxu0 %v2149
        %v2505 = vpop.f32.mrb[0].mxu0
        %v2506 = vadd.f32 0.0, %v2505
        %v2507 = vpop.f32.mrb[0].mxu0
        %v2508 = vadd.f32 0.0, %v2507
        %v2509 = vpop.f32.mrb[0].mxu0
        %v2510 = vpop.f32.mrb[0].mxu0
        %2511 = vdwg.mxu0
        %2512 = vmatprep.subr.bf16.mxu0 %v2346
        %2513 = vmatpush1.bf16.msra.mxu0 %v2345
        %2514 = vmatprep.subr.bf16.mxu0 %v2354
        %2515 = vmatpush1.bf16.msra.mxu0 %v2353
        %2516 = vmatprep.subr.bf16.mxu0 %v2362
        %2517 = vmatpush1.bf16.msra.mxu0 %v2361
        %2518 = vmatprep.subr.bf16.mxu0 %v2370
        %2519 = vmatpush1.bf16.msra.mxu0 %v2369
        %2520 = vmatprep.subr.bf16.mxu0 %v2378
        %2521 = vmatpush1.bf16.msra.mxu0 %v2377
        %2522 = vmatprep.subr.bf16.mxu0 %v2386
        %2523 = vmatpush1.bf16.msra.mxu0 %v2385
        %2524 = vmatprep.subr.bf16.mxu0 %v2394
        %2525 = vmatpush1.bf16.msra.mxu0 %v2393
        %2526 = vmatprep.subr.bf16.mxu0 %v2402
        %2527 = vmatpush1.bf16.msra.mxu0 %v2401
        %2528 = vmatprep.subr.bf16.mxu0 0
        %2529 = vmatpush1.bf16.msra.mxu0 0
        %2530 = vmatprep.subr.bf16.mxu0 0
        %2531 = vmatpush1.bf16.msra.mxu0 0
        %2532 = vmatprep.subr.bf16.mxu0 0
        %2533 = vmatpush1.bf16.msra.mxu0 0
        %2534 = vmatprep.subr.bf16.mxu0 0
        %2535 = vmatpush1.bf16.msra.mxu0 0
        %2536 = vmatprep.subr.bf16.mxu0 0
        %2537 = vmatpush1.bf16.msra.mxu0 0
        %2538 = vmatprep.subr.bf16.mxu0 0
        %2539 = vmatpush1.bf16.msra.mxu0 0
        %2540 = vmatprep.subr.bf16.mxu0 0
        %2541 = vmatpush1.bf16.msra.mxu0 0
        %2542 = vmatprep.subr.bf16.mxu0 0
        %2543 = vmatpush1.bf16.msra.mxu0 0
        %2544 = vmatprep.mubr.bf16.mxu0 0
        %2545 = vmatmul.mubr.bf16.gmra.mrb[0].mxu0 %v2149
        %v2546 = vpop.f32.mrb[0].mxu0
        %v2547 = vadd.f32 0.0, %v2546
        %v2548 = vpop.f32.mrb[0].mxu0
        %v2549 = vadd.f32 0.0, %v2548
        %v2550 = vpop.f32.mrb[0].mxu0
        %v2551 = vpop.f32.mrb[0].mxu0
        %2552 = vdwg.mxu0
        %2553 = vmatprep.subr.bf16.mxu0 %v2348
        %2554 = vmatpush1.bf16.msra.mxu0 %v2347
        %2555 = vmatprep.subr.bf16.mxu0 %v2356
        %2556 = vmatpush1.bf16.msra.mxu0 %v2355
        %2557 = vmatprep.subr.bf16.mxu0 %v2364
        %2558 = vmatpush1.bf16.msra.mxu0 %v2363
        %2559 = vmatprep.subr.bf16.mxu0 %v2372
        %2560 = vmatpush1.bf16.msra.mxu0 %v2371
        %2561 = vmatprep.subr.bf16.mxu0 %v2380
        %2562 = vmatpush1.bf16.msra.mxu0 %v2379
        %2563 = vmatprep.subr.bf16.mxu0 %v2388
        %2564 = vmatpush1.bf16.msra.mxu0 %v2387
        %2565 = vmatprep.subr.bf16.mxu0 %v2396
        %2566 = vmatpush1.bf16.msra.mxu0 %v2395
        %2567 = vmatprep.subr.bf16.mxu0 %v2404
        %2568 = vmatpush1.bf16.msra.mxu0 %v2403
        %2569 = vmatprep.subr.bf16.mxu0 0
        %2570 = vmatpush1.bf16.msra.mxu0 0
        %2571 = vmatprep.subr.bf16.mxu0 0
        %2572 = vmatpush1.bf16.msra.mxu0 0
        %2573 = vmatprep.subr.bf16.mxu0 0
        %2574 = vmatpush1.bf16.msra.mxu0 0
        %2575 = vmatprep.subr.bf16.mxu0 0
        %2576 = vmatpush1.bf16.msra.mxu0 0
        %2577 = vmatprep.subr.bf16.mxu0 0
        %2578 = vmatpush1.bf16.msra.mxu0 0
        %2579 = vmatprep.subr.bf16.mxu0 0
        %2580 = vmatpush1.bf16.msra.mxu0 0
        %2581 = vmatprep.subr.bf16.mxu0 0
        %2582 = vmatpush1.bf16.msra.mxu0 0
        %2583 = vmatprep.subr.bf16.mxu0 0
        %2584 = vmatpush1.bf16.msra.mxu0 0
        %2585 = vmatprep.mubr.bf16.mxu0 0
        %2586 = vmatmul.mubr.bf16.gmra.mrb[0].mxu0 %v2149
        %v2587 = vpop.f32.mrb[0].mxu0
        %v2588 = vadd.f32 0.0, %v2587
        %v2589 = vpop.f32.mrb[0].mxu0
        %v2590 = vadd.f32 0.0, %v2589
        %v2591 = vpop.f32.mrb[0].mxu0
        %v2592 = vpop.f32.mrb[0].mxu0
        %2593 = vdwg.mxu0
        %2594 = vmatprep.subr.bf16.mxu0 %v2350
        %2595 = vmatpush1.bf16.msra.mxu0 %v2349
        %2596 = vmatprep.subr.bf16.mxu0 %v2358
        %2597 = vmatpush1.bf16.msra.mxu0 %v2357
        %2598 = vmatprep.subr.bf16.mxu0 %v2366
        %2599 = vmatpush1.bf16.msra.mxu0 %v2365
        %2600 = vmatprep.subr.bf16.mxu0 %v2374
        %2601 = vmatpush1.bf16.msra.mxu0 %v2373
        %2602 = vmatprep.subr.bf16.mxu0 %v2382
        %2603 = vmatpush1.bf16.msra.mxu0 %v2381
        %2604 = vmatprep.subr.bf16.mxu0 %v2390
        %2605 = vmatpush1.bf16.msra.mxu0 %v2389
        %2606 = vmatprep.subr.bf16.mxu0 %v2398
        %2607 = vmatpush1.bf16.msra.mxu0 %v2397
        %2608 = vmatprep.subr.bf16.mxu0 %v2406
        %2609 = vmatpush1.bf16.msra.mxu0 %v2405
        %2610 = vmatprep.subr.bf16.mxu0 0
        %2611 = vmatpush1.bf16.msra.mxu0 0
        %2612 = vmatprep.subr.bf16.mxu0 0
        %2613 = vmatpush1.bf16.msra.mxu0 0
        %2614 = vmatprep.subr.bf16.mxu0 0
        %2615 = vmatpush1.bf16.msra.mxu0 0
        %2616 = vmatprep.subr.bf16.mxu0 0
        %2617 = vmatpush1.bf16.msra.mxu0 0
        %2618 = vmatprep.subr.bf16.mxu0 0
        %2619 = vmatpush1.bf16.msra.mxu0 0
        %2620 = vmatprep.subr.bf16.mxu0 0
        %2621 = vmatpush1.bf16.msra.mxu0 0
        %2622 = vmatprep.subr.bf16.mxu0 0
        %2623 = vmatpush1.bf16.msra.mxu0 0
        %2624 = vmatprep.subr.bf16.mxu0 0
        %2625 = vmatpush1.bf16.msra.mxu0 0
        %2626 = vmatprep.mubr.bf16.mxu0 0
        %2627 = vmatmul.mubr.bf16.gmra.mrb[0].mxu0 %v2149
        %v2628 = vpop.f32.mrb[0].mxu0
        %v2629 = vadd.f32 0.0, %v2628
        %v2630 = vpop.f32.mrb[0].mxu0
        %v2631 = vadd.f32 0.0, %v2630
        %v2632 = vpop.f32.mrb[0].mxu0
        %v2633 = vpop.f32.mrb[0].mxu0
        %2634 = vdwg.mxu0
        %v2643 = vcombine.low %v2506, %v2508
        %v2644 = vcombine.low %v2547, %v2549
        %v2646 = vunpack.c.l.s4 1983009808
        %v2647 = vunpack.c.0.s8 %v2646
        %v2648 = vlaneseq
        %v2649 = vshrl.u32 %v2648, 7
        %v2650 = vsub.s32 %v2647, %v2649
        %v2651 = vrot.slane %v2643, %v2650
        %v2653 = vunpack.c.l.s4 1983009808
        %v2654 = vunpack.c.0.s8 %v2653
        %v2655 = vlaneseq
        %v2656 = vshrl.u32 %v2655, 7
        %v2657 = vsub.s32 %v2654, %v2656
        %v2658 = vrot.slane %v2644, %v2657
        %v2659 = vcombine.low %v2651, %v2658
        %v2660 = vcombine.low %v2588, %v2590
        %v2661 = vcombine.low %v2629, %v2631
        %v2663 = vunpack.c.l.s4 1983009808
        %v2664 = vunpack.c.0.s8 %v2663
        %v2665 = vlaneseq
        %v2666 = vshrl.u32 %v2665, 7
        %v2667 = vsub.s32 %v2664, %v2666
        %v2668 = vrot.slane %v2660, %v2667
        %v2670 = vunpack.c.l.s4 1983009808
        %v2671 = vunpack.c.0.s8 %v2670
        %v2672 = vlaneseq
        %v2673 = vshrl.u32 %v2672, 7
        %v2674 = vsub.s32 %v2671, %v2673
        %v2675 = vrot.slane %v2661, %v2674
        %v2676 = vcombine.low %v2668, %v2675
        %v2679 = vadd.f32 %v2079, %v2659
        %v2680 = vadd.f32 %v2080, %v2676
        %s2681 = scalar_lea.vmem %s344, 1536 [#allocation10]
        %v2682 = vld [vmem:[%s2681] sm:$0xff]
        %v2683 = vld [vmem:[%s2681 + $0x8] sm:$0xff]
        %v2684 = vld [vmem:[%s2681 + $0x10] sm:$0xff]
        %v2685 = vld [vmem:[%s2681 + $0x18] sm:$0xff]
        %v2686 = vld [vmem:[%s2681 + $0x20] sm:$0xff]
        %v2687 = vld [vmem:[%s2681 + $0x28] sm:$0xff]
        %v2688 = vld [vmem:[%s2681 + $0x30] sm:$0xff]
        %v2689 = vld [vmem:[%s2681 + $0x38] sm:$0xff]
        %v2690 = vld [vmem:[%s2681 + $0x40] sm:$0xff]
        %v2691 = vld [vmem:[%s2681 + $0x48] sm:$0xff]
        %v2692 = vld [vmem:[%s2681 + $0x50] sm:$0xff]
        %v2693 = vld [vmem:[%s2681 + $0x58] sm:$0xff]
        %v2694 = vld [vmem:[%s2681 + $0x60] sm:$0xff]
        %v2695 = vld [vmem:[%s2681 + $0x68] sm:$0xff]
        %v2696 = vld [vmem:[%s2681 + $0x70] sm:$0xff]
        %v2697 = vld [vmem:[%s2681 + $0x78] sm:$0xff]
        %v2698 = vld [vmem:[%s2681 + $0x80] sm:$0xff]
        %v2699 = vld [vmem:[%s2681 + $0x88] sm:$0xff]
        %v2700 = vld [vmem:[%s2681 + $0x90] sm:$0xff]
        %v2701 = vld [vmem:[%s2681 + $0x98] sm:$0xff]
        %v2702 = vld [vmem:[%s2681 + $0xa0] sm:$0xff]
        %v2703 = vld [vmem:[%s2681 + $0xa8] sm:$0xff]
        %v2704 = vld [vmem:[%s2681 + $0xb0] sm:$0xff]
        %v2705 = vld [vmem:[%s2681 + $0xb8] sm:$0xff]
        %v2706 = vld [vmem:[%s2681 + $0xc0] sm:$0xff]
        %v2707 = vld [vmem:[%s2681 + $0xc8] sm:$0xff]
        %v2708 = vld [vmem:[%s2681 + $0xd0] sm:$0xff]
        %v2709 = vld [vmem:[%s2681 + $0xd8] sm:$0xff]
        %v2710 = vld [vmem:[%s2681 + $0xe0] sm:$0xff]
        %v2711 = vld [vmem:[%s2681 + $0xe8] sm:$0xff]
        %v2712 = vld [vmem:[%s2681 + $0xf0] sm:$0xff]
        %v2713 = vld [vmem:[%s2681 + $0xf8] sm:$0xff]
        %v2714 = vld [vmem:[%s2681 + $0x100] sm:$0xff]
        %v2715 = vld [vmem:[%s2681 + $0x108] sm:$0xff]
        %v2716 = vld [vmem:[%s2681 + $0x110] sm:$0xff]
        %v2717 = vld [vmem:[%s2681 + $0x118] sm:$0xff]
        %v2718 = vld [vmem:[%s2681 + $0x120] sm:$0xff]
        %v2719 = vld [vmem:[%s2681 + $0x128] sm:$0xff]
        %v2720 = vld [vmem:[%s2681 + $0x130] sm:$0xff]
        %v2721 = vld [vmem:[%s2681 + $0x138] sm:$0xff]
        %v2722 = vld [vmem:[%s2681 + $0x140] sm:$0xff]
        %v2723 = vld [vmem:[%s2681 + $0x148] sm:$0xff]
        %v2724 = vld [vmem:[%s2681 + $0x150] sm:$0xff]
        %v2725 = vld [vmem:[%s2681 + $0x158] sm:$0xff]
        %v2726 = vld [vmem:[%s2681 + $0x160] sm:$0xff]
        %v2727 = vld [vmem:[%s2681 + $0x168] sm:$0xff]
        %v2728 = vld [vmem:[%s2681 + $0x170] sm:$0xff]
        %v2729 = vld [vmem:[%s2681 + $0x178] sm:$0xff]
        %v2730 = vld [vmem:[%s2681 + $0x180] sm:$0xff]
        %v2731 = vld [vmem:[%s2681 + $0x188] sm:$0xff]
        %v2732 = vld [vmem:[%s2681 + $0x190] sm:$0xff]
        %v2733 = vld [vmem:[%s2681 + $0x198] sm:$0xff]
        %v2734 = vld [vmem:[%s2681 + $0x1a0] sm:$0xff]
        %v2735 = vld [vmem:[%s2681 + $0x1a8] sm:$0xff]
        %v2736 = vld [vmem:[%s2681 + $0x1b0] sm:$0xff]
        %v2737 = vld [vmem:[%s2681 + $0x1b8] sm:$0xff]
        %v2738 = vld [vmem:[%s2681 + $0x1c0] sm:$0xff]
        %v2739 = vld [vmem:[%s2681 + $0x1c8] sm:$0xff]
        %v2740 = vld [vmem:[%s2681 + $0x1d0] sm:$0xff]
        %v2741 = vld [vmem:[%s2681 + $0x1d8] sm:$0xff]
        %v2742 = vld [vmem:[%s2681 + $0x1e0] sm:$0xff]
        %v2743 = vld [vmem:[%s2681 + $0x1e8] sm:$0xff]
        %v2744 = vld [vmem:[%s2681 + $0x1f0] sm:$0xff]
        %v2745 = vld [vmem:[%s2681 + $0x1f8] sm:$0xff]
        %v2746 = vrot.slane %v945, 3
        %v2747 = vrot.slane %v946, 2
        %v2748 = vsel %vm948, %v2747, %v2746
        %v2749 = vpack.c.b16 %v2748, %v2748
        %v2815 = vunpack.c.l.b16 %v2682
        %v2816 = vunpack.c.h.b16 %v2682
        %v2817 = vunpack.c.l.b16 %v2683
        %v2818 = vunpack.c.h.b16 %v2683
        %v2819 = vunpack.c.l.b16 %v2684
        %v2820 = vunpack.c.h.b16 %v2684
        %v2821 = vunpack.c.l.b16 %v2685
        %v2822 = vunpack.c.h.b16 %v2685
        %v2823 = vunpack.c.l.b16 %v2686
        %v2824 = vunpack.c.h.b16 %v2686
        %v2825 = vunpack.c.l.b16 %v2687
        %v2826 = vunpack.c.h.b16 %v2687
        %v2827 = vunpack.c.l.b16 %v2688
        %v2828 = vunpack.c.h.b16 %v2688
        %v2829 = vunpack.c.l.b16 %v2689
        %v2830 = vunpack.c.h.b16 %v2689
        %v2831 = vunpack.c.l.b16 %v2690
        %v2832 = vunpack.c.h.b16 %v2690
        %v2833 = vunpack.c.l.b16 %v2691
        %v2834 = vunpack.c.h.b16 %v2691
        %v2835 = vunpack.c.l.b16 %v2692
        %v2836 = vunpack.c.h.b16 %v2692
        %v2837 = vunpack.c.l.b16 %v2693
        %v2838 = vunpack.c.h.b16 %v2693
        %v2839 = vunpack.c.l.b16 %v2694
        %v2840 = vunpack.c.h.b16 %v2694
        %v2841 = vunpack.c.l.b16 %v2695
        %v2842 = vunpack.c.h.b16 %v2695
        %v2843 = vunpack.c.l.b16 %v2696
        %v2844 = vunpack.c.h.b16 %v2696
        %v2845 = vunpack.c.l.b16 %v2697
        %v2846 = vunpack.c.h.b16 %v2697
        %v2847 = vunpack.c.l.b16 %v2698
        %v2848 = vunpack.c.h.b16 %v2698
        %v2849 = vunpack.c.l.b16 %v2699
        %v2850 = vunpack.c.h.b16 %v2699
        %v2851 = vunpack.c.l.b16 %v2700
        %v2852 = vunpack.c.h.b16 %v2700
        %v2853 = vunpack.c.l.b16 %v2701
        %v2854 = vunpack.c.h.b16 %v2701
        %v2855 = vunpack.c.l.b16 %v2702
        %v2856 = vunpack.c.h.b16 %v2702
        %v2857 = vunpack.c.l.b16 %v2703
        %v2858 = vunpack.c.h.b16 %v2703
        %v2859 = vunpack.c.l.b16 %v2704
        %v2860 = vunpack.c.h.b16 %v2704
        %v2861 = vunpack.c.l.b16 %v2705
        %v2862 = vunpack.c.h.b16 %v2705
        %v2863 = vunpack.c.l.b16 %v2706
        %v2864 = vunpack.c.h.b16 %v2706
        %v2865 = vunpack.c.l.b16 %v2707
        %v2866 = vunpack.c.h.b16 %v2707
        %v2867 = vunpack.c.l.b16 %v2708
        %v2868 = vunpack.c.h.b16 %v2708
        %v2869 = vunpack.c.l.b16 %v2709
        %v2870 = vunpack.c.h.b16 %v2709
        %v2871 = vunpack.c.l.b16 %v2710
        %v2872 = vunpack.c.h.b16 %v2710
        %v2873 = vunpack.c.l.b16 %v2711
        %v2874 = vunpack.c.h.b16 %v2711
        %v2875 = vunpack.c.l.b16 %v2712
        %v2876 = vunpack.c.h.b16 %v2712
        %v2877 = vunpack.c.l.b16 %v2713
        %v2878 = vunpack.c.h.b16 %v2713
        %v2879 = vunpack.c.l.b16 %v2714
        %v2880 = vunpack.c.h.b16 %v2714
        %v2881 = vunpack.c.l.b16 %v2715
        %v2882 = vunpack.c.h.b16 %v2715
        %v2883 = vunpack.c.l.b16 %v2716
        %v2884 = vunpack.c.h.b16 %v2716
        %v2885 = vunpack.c.l.b16 %v2717
        %v2886 = vunpack.c.h.b16 %v2717
        %v2887 = vunpack.c.l.b16 %v2718
        %v2888 = vunpack.c.h.b16 %v2718
        %v2889 = vunpack.c.l.b16 %v2719
        %v2890 = vunpack.c.h.b16 %v2719
        %v2891 = vunpack.c.l.b16 %v2720
        %v2892 = vunpack.c.h.b16 %v2720
        %v2893 = vunpack.c.l.b16 %v2721
        %v2894 = vunpack.c.h.b16 %v2721
        %v2895 = vunpack.c.l.b16 %v2722
        %v2896 = vunpack.c.h.b16 %v2722
        %v2897 = vunpack.c.l.b16 %v2723
        %v2898 = vunpack.c.h.b16 %v2723
        %v2899 = vunpack.c.l.b16 %v2724
        %v2900 = vunpack.c.h.b16 %v2724
        %v2901 = vunpack.c.l.b16 %v2725
        %v2902 = vunpack.c.h.b16 %v2725
        %v2903 = vunpack.c.l.b16 %v2726
        %v2904 = vunpack.c.h.b16 %v2726
        %v2905 = vunpack.c.l.b16 %v2727
        %v2906 = vunpack.c.h.b16 %v2727
        %v2907 = vunpack.c.l.b16 %v2728
        %v2908 = vunpack.c.h.b16 %v2728
        %v2909 = vunpack.c.l.b16 %v2729
        %v2910 = vunpack.c.h.b16 %v2729
        %v2911 = vunpack.c.l.b16 %v2730
        %v2912 = vunpack.c.h.b16 %v2730
        %v2913 = vunpack.c.l.b16 %v2731
        %v2914 = vunpack.c.h.b16 %v2731
        %v2915 = vunpack.c.l.b16 %v2732
        %v2916 = vunpack.c.h.b16 %v2732
        %v2917 = vunpack.c.l.b16 %v2733
        %v2918 = vunpack.c.h.b16 %v2733
        %v2919 = vunpack.c.l.b16 %v2734
        %v2920 = vunpack.c.h.b16 %v2734
        %v2921 = vunpack.c.l.b16 %v2735
        %v2922 = vunpack.c.h.b16 %v2735
        %v2923 = vunpack.c.l.b16 %v2736
        %v2924 = vunpack.c.h.b16 %v2736
        %v2925 = vunpack.c.l.b16 %v2737
        %v2926 = vunpack.c.h.b16 %v2737
        %v2927 = vunpack.c.l.b16 %v2738
        %v2928 = vunpack.c.h.b16 %v2738
        %v2929 = vunpack.c.l.b16 %v2739
        %v2930 = vunpack.c.h.b16 %v2739
        %v2931 = vunpack.c.l.b16 %v2740
        %v2932 = vunpack.c.h.b16 %v2740
        %v2933 = vunpack.c.l.b16 %v2741
        %v2934 = vunpack.c.h.b16 %v2741
        %v2935 = vunpack.c.l.b16 %v2742
        %v2936 = vunpack.c.h.b16 %v2742
        %v2937 = vunpack.c.l.b16 %v2743
        %v2938 = vunpack.c.h.b16 %v2743
        %v2939 = vunpack.c.l.b16 %v2744
        %v2940 = vunpack.c.h.b16 %v2744
        %v2941 = vunpack.c.l.b16 %v2745
        %v2942 = vunpack.c.h.b16 %v2745
        %v2943 = vpack.c.b16 %v2823, %v2815
        %v2944 = vpack.c.b16 %v2824, %v2816
        %v2945 = vpack.c.b16 %v2825, %v2817
        %v2946 = vpack.c.b16 %v2826, %v2818
        %v2947 = vpack.c.b16 %v2827, %v2819
        %v2948 = vpack.c.b16 %v2828, %v2820
        %v2949 = vpack.c.b16 %v2829, %v2821
        %v2950 = vpack.c.b16 %v2830, %v2822
        %v2951 = vpack.c.b16 %v2839, %v2831
        %v2952 = vpack.c.b16 %v2840, %v2832
        %v2953 = vpack.c.b16 %v2841, %v2833
        %v2954 = vpack.c.b16 %v2842, %v2834
        %v2955 = vpack.c.b16 %v2843, %v2835
        %v2956 = vpack.c.b16 %v2844, %v2836
        %v2957 = vpack.c.b16 %v2845, %v2837
        %v2958 = vpack.c.b16 %v2846, %v2838
        %v2959 = vpack.c.b16 %v2855, %v2847
        %v2960 = vpack.c.b16 %v2856, %v2848
        %v2961 = vpack.c.b16 %v2857, %v2849
        %v2962 = vpack.c.b16 %v2858, %v2850
        %v2963 = vpack.c.b16 %v2859, %v2851
        %v2964 = vpack.c.b16 %v2860, %v2852
        %v2965 = vpack.c.b16 %v2861, %v2853
        %v2966 = vpack.c.b16 %v2862, %v2854
        %v2967 = vpack.c.b16 %v2871, %v2863
        %v2968 = vpack.c.b16 %v2872, %v2864
        %v2969 = vpack.c.b16 %v2873, %v2865
        %v2970 = vpack.c.b16 %v2874, %v2866
        %v2971 = vpack.c.b16 %v2875, %v2867
        %v2972 = vpack.c.b16 %v2876, %v2868
        %v2973 = vpack.c.b16 %v2877, %v2869
        %v2974 = vpack.c.b16 %v2878, %v2870
        %v2975 = vpack.c.b16 %v2887, %v2879
        %v2976 = vpack.c.b16 %v2888, %v2880
        %v2977 = vpack.c.b16 %v2889, %v2881
        %v2978 = vpack.c.b16 %v2890, %v2882
        %v2979 = vpack.c.b16 %v2891, %v2883
        %v2980 = vpack.c.b16 %v2892, %v2884
        %v2981 = vpack.c.b16 %v2893, %v2885
        %v2982 = vpack.c.b16 %v2894, %v2886
        %v2983 = vpack.c.b16 %v2903, %v2895
        %v2984 = vpack.c.b16 %v2904, %v2896
        %v2985 = vpack.c.b16 %v2905, %v2897
        %v2986 = vpack.c.b16 %v2906, %v2898
        %v2987 = vpack.c.b16 %v2907, %v2899
        %v2988 = vpack.c.b16 %v2908, %v2900
        %v2989 = vpack.c.b16 %v2909, %v2901
        %v2990 = vpack.c.b16 %v2910, %v2902
        %v2991 = vpack.c.b16 %v2919, %v2911
        %v2992 = vpack.c.b16 %v2920, %v2912
        %v2993 = vpack.c.b16 %v2921, %v2913
        %v2994 = vpack.c.b16 %v2922, %v2914
        %v2995 = vpack.c.b16 %v2923, %v2915
        %v2996 = vpack.c.b16 %v2924, %v2916
        %v2997 = vpack.c.b16 %v2925, %v2917
        %v2998 = vpack.c.b16 %v2926, %v2918
        %v2999 = vpack.c.b16 %v2935, %v2927
        %v3000 = vpack.c.b16 %v2936, %v2928
        %v3001 = vpack.c.b16 %v2937, %v2929
        %v3002 = vpack.c.b16 %v2938, %v2930
        %v3003 = vpack.c.b16 %v2939, %v2931
        %v3004 = vpack.c.b16 %v2940, %v2932
        %v3005 = vpack.c.b16 %v2941, %v2933
        %v3006 = vpack.c.b16 %v2942, %v2934
        %3071 = vmatprep.subr.bf16.mxu0 %v2944
        %3072 = vmatpush1.bf16.msra.mxu0 %v2943
        %3073 = vmatprep.subr.bf16.mxu0 %v2952
        %3074 = vmatpush1.bf16.msra.mxu0 %v2951
        %3075 = vmatprep.subr.bf16.mxu0 %v2960
        %3076 = vmatpush1.bf16.msra.mxu0 %v2959
        %3077 = vmatprep.subr.bf16.mxu0 %v2968
        %3078 = vmatpush1.bf16.msra.mxu0 %v2967
        %3079 = vmatprep.subr.bf16.mxu0 %v2976
        %3080 = vmatpush1.bf16.msra.mxu0 %v2975
        %3081 = vmatprep.subr.bf16.mxu0 %v2984
        %3082 = vmatpush1.bf16.msra.mxu0 %v2983
        %3083 = vmatprep.subr.bf16.mxu0 %v2992
        %3084 = vmatpush1.bf16.msra.mxu0 %v2991
        %3085 = vmatprep.subr.bf16.mxu0 %v3000
        %3086 = vmatpush1.bf16.msra.mxu0 %v2999
        %3087 = vmatprep.subr.bf16.mxu0 0
        %3088 = vmatpush1.bf16.msra.mxu0 0
        %3089 = vmatprep.subr.bf16.mxu0 0
        %3090 = vmatpush1.bf16.msra.mxu0 0
        %3091 = vmatprep.subr.bf16.mxu0 0
        %3092 = vmatpush1.bf16.msra.mxu0 0
        %3093 = vmatprep.subr.bf16.mxu0 0
        %3094 = vmatpush1.bf16.msra.mxu0 0
        %3095 = vmatprep.subr.bf16.mxu0 0
        %3096 = vmatpush1.bf16.msra.mxu0 0
        %3097 = vmatprep.subr.bf16.mxu0 0
        %3098 = vmatpush1.bf16.msra.mxu0 0
        %3099 = vmatprep.subr.bf16.mxu0 0
        %3100 = vmatpush1.bf16.msra.mxu0 0
        %3101 = vmatprep.subr.bf16.mxu0 0
        %3102 = vmatpush1.bf16.msra.mxu0 0
        %3103 = vmatprep.mubr.bf16.mxu0 0
        %3104 = vmatmul.mubr.bf16.gmra.mrb[0].mxu0 %v2749
        %v3105 = vpop.f32.mrb[0].mxu0
        %v3106 = vadd.f32 0.0, %v3105
        %v3107 = vpop.f32.mrb[0].mxu0
        %v3108 = vadd.f32 0.0, %v3107
        %v3109 = vpop.f32.mrb[0].mxu0
        %v3110 = vpop.f32.mrb[0].mxu0
        %3111 = vdwg.mxu0
        %3112 = vmatprep.subr.bf16.mxu0 %v2946
        %3113 = vmatpush1.bf16.msra.mxu0 %v2945
        %3114 = vmatprep.subr.bf16.mxu0 %v2954
        %3115 = vmatpush1.bf16.msra.mxu0 %v2953
        %3116 = vmatprep.subr.bf16.mxu0 %v2962
        %3117 = vmatpush1.bf16.msra.mxu0 %v2961
        %3118 = vmatprep.subr.bf16.mxu0 %v2970
        %3119 = vmatpush1.bf16.msra.mxu0 %v2969
        %3120 = vmatprep.subr.bf16.mxu0 %v2978
        %3121 = vmatpush1.bf16.msra.mxu0 %v2977
        %3122 = vmatprep.subr.bf16.mxu0 %v2986
        %3123 = vmatpush1.bf16.msra.mxu0 %v2985
        %3124 = vmatprep.subr.bf16.mxu0 %v2994
        %3125 = vmatpush1.bf16.msra.mxu0 %v2993
        %3126 = vmatprep.subr.bf16.mxu0 %v3002
        %3127 = vmatpush1.bf16.msra.mxu0 %v3001
        %3128 = vmatprep.subr.bf16.mxu0 0
        %3129 = vmatpush1.bf16.msra.mxu0 0
        %3130 = vmatprep.subr.bf16.mxu0 0
        %3131 = vmatpush1.bf16.msra.mxu0 0
        %3132 = vmatprep.subr.bf16.mxu0 0
        %3133 = vmatpush1.bf16.msra.mxu0 0
        %3134 = vmatprep.subr.bf16.mxu0 0
        %3135 = vmatpush1.bf16.msra.mxu0 0
        %3136 = vmatprep.subr.bf16.mxu0 0
        %3137 = vmatpush1.bf16.msra.mxu0 0
        %3138 = vmatprep.subr.bf16.mxu0 0
        %3139 = vmatpush1.bf16.msra.mxu0 0
        %3140 = vmatprep.subr.bf16.mxu0 0
        %3141 = vmatpush1.bf16.msra.mxu0 0
        %3142 = vmatprep.subr.bf16.mxu0 0
        %3143 = vmatpush1.bf16.msra.mxu0 0
        %3144 = vmatprep.mubr.bf16.mxu0 0
        %3145 = vmatmul.mubr.bf16.gmra.mrb[0].mxu0 %v2749
        %v3146 = vpop.f32.mrb[0].mxu0
        %v3147 = vadd.f32 0.0, %v3146
        %v3148 = vpop.f32.mrb[0].mxu0
        %v3149 = vadd.f32 0.0, %v3148
        %v3150 = vpop.f32.mrb[0].mxu0
        %v3151 = vpop.f32.mrb[0].mxu0
        %3152 = vdwg.mxu0
        %3153 = vmatprep.subr.bf16.mxu0 %v2948
        %3154 = vmatpush1.bf16.msra.mxu0 %v2947
        %3155 = vmatprep.subr.bf16.mxu0 %v2956
        %3156 = vmatpush1.bf16.msra.mxu0 %v2955
        %3157 = vmatprep.subr.bf16.mxu0 %v2964
        %3158 = vmatpush1.bf16.msra.mxu0 %v2963
        %3159 = vmatprep.subr.bf16.mxu0 %v2972
        %3160 = vmatpush1.bf16.msra.mxu0 %v2971
        %3161 = vmatprep.subr.bf16.mxu0 %v2980
        %3162 = vmatpush1.bf16.msra.mxu0 %v2979
        %3163 = vmatprep.subr.bf16.mxu0 %v2988
        %3164 = vmatpush1.bf16.msra.mxu0 %v2987
        %3165 = vmatprep.subr.bf16.mxu0 %v2996
        %3166 = vmatpush1.bf16.msra.mxu0 %v2995
        %3167 = vmatprep.subr.bf16.mxu0 %v3004
        %3168 = vmatpush1.bf16.msra.mxu0 %v3003
        %3169 = vmatprep.subr.bf16.mxu0 0
        %3170 = vmatpush1.bf16.msra.mxu0 0
        %3171 = vmatprep.subr.bf16.mxu0 0
        %3172 = vmatpush1.bf16.msra.mxu0 0
        %3173 = vmatprep.subr.bf16.mxu0 0
        %3174 = vmatpush1.bf16.msra.mxu0 0
        %3175 = vmatprep.subr.bf16.mxu0 0
        %3176 = vmatpush1.bf16.msra.mxu0 0
        %3177 = vmatprep.subr.bf16.mxu0 0
        %3178 = vmatpush1.bf16.msra.mxu0 0
        %3179 = vmatprep.subr.bf16.mxu0 0
        %3180 = vmatpush1.bf16.msra.mxu0 0
        %3181 = vmatprep.subr.bf16.mxu0 0
        %3182 = vmatpush1.bf16.msra.mxu0 0
        %3183 = vmatprep.subr.bf16.mxu0 0
        %3184 = vmatpush1.bf16.msra.mxu0 0
        %3185 = vmatprep.mubr.bf16.mxu0 0
        %3186 = vmatmul.mubr.bf16.gmra.mrb[0].mxu0 %v2749
        %v3187 = vpop.f32.mrb[0].mxu0
        %v3188 = vadd.f32 0.0, %v3187
        %v3189 = vpop.f32.mrb[0].mxu0
        %v3190 = vadd.f32 0.0, %v3189
        %v3191 = vpop.f32.mrb[0].mxu0
        %v3192 = vpop.f32.mrb[0].mxu0
        %3193 = vdwg.mxu0
        %3194 = vmatprep.subr.bf16.mxu0 %v2950
        %3195 = vmatpush1.bf16.msra.mxu0 %v2949
        %3196 = vmatprep.subr.bf16.mxu0 %v2958
        %3197 = vmatpush1.bf16.msra.mxu0 %v2957
        %3198 = vmatprep.subr.bf16.mxu0 %v2966
        %3199 = vmatpush1.bf16.msra.mxu0 %v2965
        %3200 = vmatprep.subr.bf16.mxu0 %v2974
        %3201 = vmatpush1.bf16.msra.mxu0 %v2973
        %3202 = vmatprep.subr.bf16.mxu0 %v2982
        %3203 = vmatpush1.bf16.msra.mxu0 %v2981
        %3204 = vmatprep.subr.bf16.mxu0 %v2990
        %3205 = vmatpush1.bf16.msra.mxu0 %v2989
        %3206 = vmatprep.subr.bf16.mxu0 %v2998
        %3207 = vmatpush1.bf16.msra.mxu0 %v2997
        %3208 = vmatprep.subr.bf16.mxu0 %v3006
        %3209 = vmatpush1.bf16.msra.mxu0 %v3005
        %3210 = vmatprep.subr.bf16.mxu0 0
        %3211 = vmatpush1.bf16.msra.mxu0 0
        %3212 = vmatprep.subr.bf16.mxu0 0
        %3213 = vmatpush1.bf16.msra.mxu0 0
        %3214 = vmatprep.subr.bf16.mxu0 0
        %3215 = vmatpush1.bf16.msra.mxu0 0
        %3216 = vmatprep.subr.bf16.mxu0 0
        %3217 = vmatpush1.bf16.msra.mxu0 0
        %3218 = vmatprep.subr.bf16.mxu0 0
        %3219 = vmatpush1.bf16.msra.mxu0 0
        %3220 = vmatprep.subr.bf16.mxu0 0
        %3221 = vmatpush1.bf16.msra.mxu0 0
        %3222 = vmatprep.subr.bf16.mxu0 0
        %3223 = vmatpush1.bf16.msra.mxu0 0
        %3224 = vmatprep.subr.bf16.mxu0 0
        %3225 = vmatpush1.bf16.msra.mxu0 0
        %3226 = vmatprep.mubr.bf16.mxu0 0
        %3227 = vmatmul.mubr.bf16.gmra.mrb[0].mxu0 %v2749
        %v3228 = vpop.f32.mrb[0].mxu0
        %v3229 = vadd.f32 0.0, %v3228
        %v3230 = vpop.f32.mrb[0].mxu0
        %v3231 = vadd.f32 0.0, %v3230
        %v3232 = vpop.f32.mrb[0].mxu0
        %v3233 = vpop.f32.mrb[0].mxu0
        %3234 = vdwg.mxu0
        %v3243 = vcombine.low %v3106, %v3108
        %v3244 = vcombine.low %v3147, %v3149
        %v3246 = vunpack.c.l.s4 1983009808
        %v3247 = vunpack.c.0.s8 %v3246
        %v3248 = vlaneseq
        %v3249 = vshrl.u32 %v3248, 7
        %v3250 = vsub.s32 %v3247, %v3249
        %v3251 = vrot.slane %v3243, %v3250
        %v3253 = vunpack.c.l.s4 1983009808
        %v3254 = vunpack.c.0.s8 %v3253
        %v3255 = vlaneseq
        %v3256 = vshrl.u32 %v3255, 7
        %v3257 = vsub.s32 %v3254, %v3256
        %v3258 = vrot.slane %v3244, %v3257
        %v3259 = vcombine.low %v3251, %v3258
        %v3260 = vcombine.low %v3188, %v3190
        %v3261 = vcombine.low %v3229, %v3231
        %v3263 = vunpack.c.l.s4 1983009808
        %v3264 = vunpack.c.0.s8 %v3263
        %v3265 = vlaneseq
        %v3266 = vshrl.u32 %v3265, 7
        %v3267 = vsub.s32 %v3264, %v3266
        %v3268 = vrot.slane %v3260, %v3267
        %v3270 = vunpack.c.l.s4 1983009808
        %v3271 = vunpack.c.0.s8 %v3270
        %v3272 = vlaneseq
        %v3273 = vshrl.u32 %v3272, 7
        %v3274 = vsub.s32 %v3271, %v3273
        %v3275 = vrot.slane %v3261, %v3274
        %v3276 = vcombine.low %v3268, %v3275
        %v3279 = vadd.f32 %v2679, %v3259
        %v3280 = vadd.f32 %v2680, %v3276
        %s3281 = scalar_lea.vmem %s344, 2048 [#allocation10]
        %v3282 = vld [vmem:[%s3281] sm:$0xff]
        %v3283 = vld [vmem:[%s3281 + $0x8] sm:$0xff]
        %v3284 = vld [vmem:[%s3281 + $0x10] sm:$0xff]
        %v3285 = vld [vmem:[%s3281 + $0x18] sm:$0xff]
        %v3286 = vld [vmem:[%s3281 + $0x20] sm:$0xff]
        %v3287 = vld [vmem:[%s3281 + $0x28] sm:$0xff]
        %v3288 = vld [vmem:[%s3281 + $0x30] sm:$0xff]
        %v3289 = vld [vmem:[%s3281 + $0x38] sm:$0xff]
        %v3290 = vld [vmem:[%s3281 + $0x40] sm:$0xff]
        %v3291 = vld [vmem:[%s3281 + $0x48] sm:$0xff]
        %v3292 = vld [vmem:[%s3281 + $0x50] sm:$0xff]
        %v3293 = vld [vmem:[%s3281 + $0x58] sm:$0xff]
        %v3294 = vld [vmem:[%s3281 + $0x60] sm:$0xff]
        %v3295 = vld [vmem:[%s3281 + $0x68] sm:$0xff]
        %v3296 = vld [vmem:[%s3281 + $0x70] sm:$0xff]
        %v3297 = vld [vmem:[%s3281 + $0x78] sm:$0xff]
        %v3298 = vld [vmem:[%s3281 + $0x80] sm:$0xff]
        %v3299 = vld [vmem:[%s3281 + $0x88] sm:$0xff]
        %v3300 = vld [vmem:[%s3281 + $0x90] sm:$0xff]
        %v3301 = vld [vmem:[%s3281 + $0x98] sm:$0xff]
        %v3302 = vld [vmem:[%s3281 + $0xa0] sm:$0xff]
        %v3303 = vld [vmem:[%s3281 + $0xa8] sm:$0xff]
        %v3304 = vld [vmem:[%s3281 + $0xb0] sm:$0xff]
        %v3305 = vld [vmem:[%s3281 + $0xb8] sm:$0xff]
        %v3306 = vld [vmem:[%s3281 + $0xc0] sm:$0xff]
        %v3307 = vld [vmem:[%s3281 + $0xc8] sm:$0xff]
        %v3308 = vld [vmem:[%s3281 + $0xd0] sm:$0xff]
        %v3309 = vld [vmem:[%s3281 + $0xd8] sm:$0xff]
        %v3310 = vld [vmem:[%s3281 + $0xe0] sm:$0xff]
        %v3311 = vld [vmem:[%s3281 + $0xe8] sm:$0xff]
        %v3312 = vld [vmem:[%s3281 + $0xf0] sm:$0xff]
        %v3313 = vld [vmem:[%s3281 + $0xf8] sm:$0xff]
        %v3314 = vld [vmem:[%s3281 + $0x100] sm:$0xff]
        %v3315 = vld [vmem:[%s3281 + $0x108] sm:$0xff]
        %v3316 = vld [vmem:[%s3281 + $0x110] sm:$0xff]
        %v3317 = vld [vmem:[%s3281 + $0x118] sm:$0xff]
        %v3318 = vld [vmem:[%s3281 + $0x120] sm:$0xff]
        %v3319 = vld [vmem:[%s3281 + $0x128] sm:$0xff]
        %v3320 = vld [vmem:[%s3281 + $0x130] sm:$0xff]
        %v3321 = vld [vmem:[%s3281 + $0x138] sm:$0xff]
        %v3322 = vld [vmem:[%s3281 + $0x140] sm:$0xff]
        %v3323 = vld [vmem:[%s3281 + $0x148] sm:$0xff]
        %v3324 = vld [vmem:[%s3281 + $0x150] sm:$0xff]
        %v3325 = vld [vmem:[%s3281 + $0x158] sm:$0xff]
        %v3326 = vld [vmem:[%s3281 + $0x160] sm:$0xff]
        %v3327 = vld [vmem:[%s3281 + $0x168] sm:$0xff]
        %v3328 = vld [vmem:[%s3281 + $0x170] sm:$0xff]
        %v3329 = vld [vmem:[%s3281 + $0x178] sm:$0xff]
        %v3330 = vld [vmem:[%s3281 + $0x180] sm:$0xff]
        %v3331 = vld [vmem:[%s3281 + $0x188] sm:$0xff]
        %v3332 = vld [vmem:[%s3281 + $0x190] sm:$0xff]
        %v3333 = vld [vmem:[%s3281 + $0x198] sm:$0xff]
        %v3334 = vld [vmem:[%s3281 + $0x1a0] sm:$0xff]
        %v3335 = vld [vmem:[%s3281 + $0x1a8] sm:$0xff]
        %v3336 = vld [vmem:[%s3281 + $0x1b0] sm:$0xff]
        %v3337 = vld [vmem:[%s3281 + $0x1b8] sm:$0xff]
        %v3338 = vld [vmem:[%s3281 + $0x1c0] sm:$0xff]
        %v3339 = vld [vmem:[%s3281 + $0x1c8] sm:$0xff]
        %v3340 = vld [vmem:[%s3281 + $0x1d0] sm:$0xff]
        %v3341 = vld [vmem:[%s3281 + $0x1d8] sm:$0xff]
        %v3342 = vld [vmem:[%s3281 + $0x1e0] sm:$0xff]
        %v3343 = vld [vmem:[%s3281 + $0x1e8] sm:$0xff]
        %v3344 = vld [vmem:[%s3281 + $0x1f0] sm:$0xff]
        %v3345 = vld [vmem:[%s3281 + $0x1f8] sm:$0xff]
        %v3346 = vrot.slane %v945, 4
        %v3347 = vrot.slane %v946, 3
        %v3348 = vsel %vm948, %v3347, %v3346
        %v3349 = vpack.c.b16 %v3348, %v3348
        %v3415 = vunpack.c.l.b16 %v3282
        %v3416 = vunpack.c.h.b16 %v3282
        %v3417 = vunpack.c.l.b16 %v3283
        %v3418 = vunpack.c.h.b16 %v3283
        %v3419 = vunpack.c.l.b16 %v3284
        %v3420 = vunpack.c.h.b16 %v3284
        %v3421 = vunpack.c.l.b16 %v3285
        %v3422 = vunpack.c.h.b16 %v3285
        %v3423 = vunpack.c.l.b16 %v3286
        %v3424 = vunpack.c.h.b16 %v3286
        %v3425 = vunpack.c.l.b16 %v3287
        %v3426 = vunpack.c.h.b16 %v3287
        %v3427 = vunpack.c.l.b16 %v3288
        %v3428 = vunpack.c.h.b16 %v3288
        %v3429 = vunpack.c.l.b16 %v3289
        %v3430 = vunpack.c.h.b16 %v3289
        %v3431 = vunpack.c.l.b16 %v3290
        %v3432 = vunpack.c.h.b16 %v3290
        %v3433 = vunpack.c.l.b16 %v3291
        %v3434 = vunpack.c.h.b16 %v3291
        %v3435 = vunpack.c.l.b16 %v3292
        %v3436 = vunpack.c.h.b16 %v3292
        %v3437 = vunpack.c.l.b16 %v3293
        %v3438 = vunpack.c.h.b16 %v3293
        %v3439 = vunpack.c.l.b16 %v3294
        %v3440 = vunpack.c.h.b16 %v3294
        %v3441 = vunpack.c.l.b16 %v3295
        %v3442 = vunpack.c.h.b16 %v3295
        %v3443 = vunpack.c.l.b16 %v3296
        %v3444 = vunpack.c.h.b16 %v3296
        %v3445 = vunpack.c.l.b16 %v3297
        %v3446 = vunpack.c.h.b16 %v3297
        %v3447 = vunpack.c.l.b16 %v3298
        %v3448 = vunpack.c.h.b16 %v3298
        %v3449 = vunpack.c.l.b16 %v3299
        %v3450 = vunpack.c.h.b16 %v3299
        %v3451 = vunpack.c.l.b16 %v3300
        %v3452 = vunpack.c.h.b16 %v3300
        %v3453 = vunpack.c.l.b16 %v3301
        %v3454 = vunpack.c.h.b16 %v3301
        %v3455 = vunpack.c.l.b16 %v3302
        %v3456 = vunpack.c.h.b16 %v3302
        %v3457 = vunpack.c.l.b16 %v3303
        %v3458 = vunpack.c.h.b16 %v3303
        %v3459 = vunpack.c.l.b16 %v3304
        %v3460 = vunpack.c.h.b16 %v3304
        %v3461 = vunpack.c.l.b16 %v3305
        %v3462 = vunpack.c.h.b16 %v3305
        %v3463 = vunpack.c.l.b16 %v3306
        %v3464 = vunpack.c.h.b16 %v3306
        %v3465 = vunpack.c.l.b16 %v3307
        %v3466 = vunpack.c.h.b16 %v3307
        %v3467 = vunpack.c.l.b16 %v3308
        %v3468 = vunpack.c.h.b16 %v3308
        %v3469 = vunpack.c.l.b16 %v3309
        %v3470 = vunpack.c.h.b16 %v3309
        %v3471 = vunpack.c.l.b16 %v3310
        %v3472 = vunpack.c.h.b16 %v3310
        %v3473 = vunpack.c.l.b16 %v3311
        %v3474 = vunpack.c.h.b16 %v3311
        %v3475 = vunpack.c.l.b16 %v3312
        %v3476 = vunpack.c.h.b16 %v3312
        %v3477 = vunpack.c.l.b16 %v3313
        %v3478 = vunpack.c.h.b16 %v3313
        %v3479 = vunpack.c.l.b16 %v3314
        %v3480 = vunpack.c.h.b16 %v3314
        %v3481 = vunpack.c.l.b16 %v3315
        %v3482 = vunpack.c.h.b16 %v3315
        %v3483 = vunpack.c.l.b16 %v3316
        %v3484 = vunpack.c.h.b16 %v3316
        %v3485 = vunpack.c.l.b16 %v3317
        %v3486 = vunpack.c.h.b16 %v3317
        %v3487 = vunpack.c.l.b16 %v3318
        %v3488 = vunpack.c.h.b16 %v3318
        %v3489 = vunpack.c.l.b16 %v3319
        %v3490 = vunpack.c.h.b16 %v3319
        %v3491 = vunpack.c.l.b16 %v3320
        %v3492 = vunpack.c.h.b16 %v3320
        %v3493 = vunpack.c.l.b16 %v3321
        %v3494 = vunpack.c.h.b16 %v3321
        %v3495 = vunpack.c.l.b16 %v3322
        %v3496 = vunpack.c.h.b16 %v3322
        %v3497 = vunpack.c.l.b16 %v3323
        %v3498 = vunpack.c.h.b16 %v3323
        %v3499 = vunpack.c.l.b16 %v3324
        %v3500 = vunpack.c.h.b16 %v3324
        %v3501 = vunpack.c.l.b16 %v3325
        %v3502 = vunpack.c.h.b16 %v3325
        %v3503 = vunpack.c.l.b16 %v3326
        %v3504 = vunpack.c.h.b16 %v3326
        %v3505 = vunpack.c.l.b16 %v3327
        %v3506 = vunpack.c.h.b16 %v3327
        %v3507 = vunpack.c.l.b16 %v3328
        %v3508 = vunpack.c.h.b16 %v3328
        %v3509 = vunpack.c.l.b16 %v3329
        %v3510 = vunpack.c.h.b16 %v3329
        %v3511 = vunpack.c.l.b16 %v3330
        %v3512 = vunpack.c.h.b16 %v3330
        %v3513 = vunpack.c.l.b16 %v3331
        %v3514 = vunpack.c.h.b16 %v3331
        %v3515 = vunpack.c.l.b16 %v3332
        %v3516 = vunpack.c.h.b16 %v3332
        %v3517 = vunpack.c.l.b16 %v3333
        %v3518 = vunpack.c.h.b16 %v3333
        %v3519 = vunpack.c.l.b16 %v3334
        %v3520 = vunpack.c.h.b16 %v3334
        %v3521 = vunpack.c.l.b16 %v3335
        %v3522 = vunpack.c.h.b16 %v3335
        %v3523 = vunpack.c.l.b16 %v3336
        %v3524 = vunpack.c.h.b16 %v3336
        %v3525 = vunpack.c.l.b16 %v3337
        %v3526 = vunpack.c.h.b16 %v3337
        %v3527 = vunpack.c.l.b16 %v3338
        %v3528 = vunpack.c.h.b16 %v3338
        %v3529 = vunpack.c.l.b16 %v3339
        %v3530 = vunpack.c.h.b16 %v3339
        %v3531 = vunpack.c.l.b16 %v3340
        %v3532 = vunpack.c.h.b16 %v3340
        %v3533 = vunpack.c.l.b16 %v3341
        %v3534 = vunpack.c.h.b16 %v3341
        %v3535 = vunpack.c.l.b16 %v3342
        %v3536 = vunpack.c.h.b16 %v3342
        %v3537 = vunpack.c.l.b16 %v3343
        %v3538 = vunpack.c.h.b16 %v3343
        %v3539 = vunpack.c.l.b16 %v3344
        %v3540 = vunpack.c.h.b16 %v3344
        %v3541 = vunpack.c.l.b16 %v3345
        %v3542 = vunpack.c.h.b16 %v3345
        %v3543 = vpack.c.b16 %v3423, %v3415
        %v3544 = vpack.c.b16 %v3424, %v3416
        %v3545 = vpack.c.b16 %v3425, %v3417
        %v3546 = vpack.c.b16 %v3426, %v3418
        %v3547 = vpack.c.b16 %v3427, %v3419
        %v3548 = vpack.c.b16 %v3428, %v3420
        %v3549 = vpack.c.b16 %v3429, %v3421
        %v3550 = vpack.c.b16 %v3430, %v3422
        %v3551 = vpack.c.b16 %v3439, %v3431
        %v3552 = vpack.c.b16 %v3440, %v3432
        %v3553 = vpack.c.b16 %v3441, %v3433
        %v3554 = vpack.c.b16 %v3442, %v3434
        %v3555 = vpack.c.b16 %v3443, %v3435
        %v3556 = vpack.c.b16 %v3444, %v3436
        %v3557 = vpack.c.b16 %v3445, %v3437
        %v3558 = vpack.c.b16 %v3446, %v3438
        %v3559 = vpack.c.b16 %v3455, %v3447
        %v3560 = vpack.c.b16 %v3456, %v3448
        %v3561 = vpack.c.b16 %v3457, %v3449
        %v3562 = vpack.c.b16 %v3458, %v3450
        %v3563 = vpack.c.b16 %v3459, %v3451
        %v3564 = vpack.c.b16 %v3460, %v3452
        %v3565 = vpack.c.b16 %v3461, %v3453
        %v3566 = vpack.c.b16 %v3462, %v3454
        %v3567 = vpack.c.b16 %v3471, %v3463
        %v3568 = vpack.c.b16 %v3472, %v3464
        %v3569 = vpack.c.b16 %v3473, %v3465
        %v3570 = vpack.c.b16 %v3474, %v3466
        %v3571 = vpack.c.b16 %v3475, %v3467
        %v3572 = vpack.c.b16 %v3476, %v3468
        %v3573 = vpack.c.b16 %v3477, %v3469
        %v3574 = vpack.c.b16 %v3478, %v3470
        %v3575 = vpack.c.b16 %v3487, %v3479
        %v3576 = vpack.c.b16 %v3488, %v3480
        %v3577 = vpack.c.b16 %v3489, %v3481
        %v3578 = vpack.c.b16 %v3490, %v3482
        %v3579 = vpack.c.b16 %v3491, %v3483
        %v3580 = vpack.c.b16 %v3492, %v3484
        %v3581 = vpack.c.b16 %v3493, %v3485
        %v3582 = vpack.c.b16 %v3494, %v3486
        %v3583 = vpack.c.b16 %v3503, %v3495
        %v3584 = vpack.c.b16 %v3504, %v3496
        %v3585 = vpack.c.b16 %v3505, %v3497
        %v3586 = vpack.c.b16 %v3506, %v3498
        %v3587 = vpack.c.b16 %v3507, %v3499
        %v3588 = vpack.c.b16 %v3508, %v3500
        %v3589 = vpack.c.b16 %v3509, %v3501
        %v3590 = vpack.c.b16 %v3510, %v3502
        %v3591 = vpack.c.b16 %v3519, %v3511
        %v3592 = vpack.c.b16 %v3520, %v3512
        %v3593 = vpack.c.b16 %v3521, %v3513
        %v3594 = vpack.c.b16 %v3522, %v3514
        %v3595 = vpack.c.b16 %v3523, %v3515
        %v3596 = vpack.c.b16 %v3524, %v3516
        %v3597 = vpack.c.b16 %v3525, %v3517
        %v3598 = vpack.c.b16 %v3526, %v3518
        %v3599 = vpack.c.b16 %v3535, %v3527
        %v3600 = vpack.c.b16 %v3536, %v3528
        %v3601 = vpack.c.b16 %v3537, %v3529
        %v3602 = vpack.c.b16 %v3538, %v3530
        %v3603 = vpack.c.b16 %v3539, %v3531
        %v3604 = vpack.c.b16 %v3540, %v3532
        %v3605 = vpack.c.b16 %v3541, %v3533
        %v3606 = vpack.c.b16 %v3542, %v3534
        %3671 = vmatprep.subr.bf16.mxu0 %v3544
        %3672 = vmatpush1.bf16.msra.mxu0 %v3543
        %3673 = vmatprep.subr.bf16.mxu0 %v3552
        %3674 = vmatpush1.bf16.msra.mxu0 %v3551
        %3675 = vmatprep.subr.bf16.mxu0 %v3560
        %3676 = vmatpush1.bf16.msra.mxu0 %v3559
        %3677 = vmatprep.subr.bf16.mxu0 %v3568
        %3678 = vmatpush1.bf16.msra.mxu0 %v3567
        %3679 = vmatprep.subr.bf16.mxu0 %v3576
        %3680 = vmatpush1.bf16.msra.mxu0 %v3575
        %3681 = vmatprep.subr.bf16.mxu0 %v3584
        %3682 = vmatpush1.bf16.msra.mxu0 %v3583
        %3683 = vmatprep.subr.bf16.mxu0 %v3592
        %3684 = vmatpush1.bf16.msra.mxu0 %v3591
        %3685 = vmatprep.subr.bf16.mxu0 %v3600
        %3686 = vmatpush1.bf16.msra.mxu0 %v3599
        %3687 = vmatprep.subr.bf16.mxu0 0
        %3688 = vmatpush1.bf16.msra.mxu0 0
        %3689 = vmatprep.subr.bf16.mxu0 0
        %3690 = vmatpush1.bf16.msra.mxu0 0
        %3691 = vmatprep.subr.bf16.mxu0 0
        %3692 = vmatpush1.bf16.msra.mxu0 0
        %3693 = vmatprep.subr.bf16.mxu0 0
        %3694 = vmatpush1.bf16.msra.mxu0 0
        %3695 = vmatprep.subr.bf16.mxu0 0
        %3696 = vmatpush1.bf16.msra.mxu0 0
        %3697 = vmatprep.subr.bf16.mxu0 0
        %3698 = vmatpush1.bf16.msra.mxu0 0
        %3699 = vmatprep.subr.bf16.mxu0 0
        %3700 = vmatpush1.bf16.msra.mxu0 0
        %3701 = vmatprep.subr.bf16.mxu0 0
        %3702 = vmatpush1.bf16.msra.mxu0 0
        %3703 = vmatprep.mubr.bf16.mxu0 0
        %3704 = vmatmul.mubr.bf16.gmra.mrb[0].mxu0 %v3349
        %v3705 = vpop.f32.mrb[0].mxu0
        %v3706 = vadd.f32 0.0, %v3705
        %v3707 = vpop.f32.mrb[0].mxu0
        %v3708 = vadd.f32 0.0, %v3707
        %v3709 = vpop.f32.mrb[0].mxu0
        %v3710 = vpop.f32.mrb[0].mxu0
        %3711 = vdwg.mxu0
        %3712 = vmatprep.subr.bf16.mxu0 %v3546
        %3713 = vmatpush1.bf16.msra.mxu0 %v3545
        %3714 = vmatprep.subr.bf16.mxu0 %v3554
        %3715 = vmatpush1.bf16.msra.mxu0 %v3553
        %3716 = vmatprep.subr.bf16.mxu0 %v3562
        %3717 = vmatpush1.bf16.msra.mxu0 %v3561
        %3718 = vmatprep.subr.bf16.mxu0 %v3570
        %3719 = vmatpush1.bf16.msra.mxu0 %v3569
        %3720 = vmatprep.subr.bf16.mxu0 %v3578
        %3721 = vmatpush1.bf16.msra.mxu0 %v3577
        %3722 = vmatprep.subr.bf16.mxu0 %v3586
        %3723 = vmatpush1.bf16.msra.mxu0 %v3585
        %3724 = vmatprep.subr.bf16.mxu0 %v3594
        %3725 = vmatpush1.bf16.msra.mxu0 %v3593
        %3726 = vmatprep.subr.bf16.mxu0 %v3602
        %3727 = vmatpush1.bf16.msra.mxu0 %v3601
        %3728 = vmatprep.subr.bf16.mxu0 0
        %3729 = vmatpush1.bf16.msra.mxu0 0
        %3730 = vmatprep.subr.bf16.mxu0 0
        %3731 = vmatpush1.bf16.msra.mxu0 0
        %3732 = vmatprep.subr.bf16.mxu0 0
        %3733 = vmatpush1.bf16.msra.mxu0 0
        %3734 = vmatprep.subr.bf16.mxu0 0
        %3735 = vmatpush1.bf16.msra.mxu0 0
        %3736 = vmatprep.subr.bf16.mxu0 0
        %3737 = vmatpush1.bf16.msra.mxu0 0
        %3738 = vmatprep.subr.bf16.mxu0 0
        %3739 = vmatpush1.bf16.msra.mxu0 0
        %3740 = vmatprep.subr.bf16.mxu0 0
        %3741 = vmatpush1.bf16.msra.mxu0 0
        %3742 = vmatprep.subr.bf16.mxu0 0
        %3743 = vmatpush1.bf16.msra.mxu0 0
        %3744 = vmatprep.mubr.bf16.mxu0 0
        %3745 = vmatmul.mubr.bf16.gmra.mrb[0].mxu0 %v3349
        %v3746 = vpop.f32.mrb[0].mxu0
        %v3747 = vadd.f32 0.0, %v3746
        %v3748 = vpop.f32.mrb[0].mxu0
        %v3749 = vadd.f32 0.0, %v3748
        %v3750 = vpop.f32.mrb[0].mxu0
        %v3751 = vpop.f32.mrb[0].mxu0
        %3752 = vdwg.mxu0
        %3753 = vmatprep.subr.bf16.mxu0 %v3548
        %3754 = vmatpush1.bf16.msra.mxu0 %v3547
        %3755 = vmatprep.subr.bf16.mxu0 %v3556
        %3756 = vmatpush1.bf16.msra.mxu0 %v3555
        %3757 = vmatprep.subr.bf16.mxu0 %v3564
        %3758 = vmatpush1.bf16.msra.mxu0 %v3563
        %3759 = vmatprep.subr.bf16.mxu0 %v3572
        %3760 = vmatpush1.bf16.msra.mxu0 %v3571
        %3761 = vmatprep.subr.bf16.mxu0 %v3580
        %3762 = vmatpush1.bf16.msra.mxu0 %v3579
        %3763 = vmatprep.subr.bf16.mxu0 %v3588
        %3764 = vmatpush1.bf16.msra.mxu0 %v3587
        %3765 = vmatprep.subr.bf16.mxu0 %v3596
        %3766 = vmatpush1.bf16.msra.mxu0 %v3595
        %3767 = vmatprep.subr.bf16.mxu0 %v3604
        %3768 = vmatpush1.bf16.msra.mxu0 %v3603
        %3769 = vmatprep.subr.bf16.mxu0 0
        %3770 = vmatpush1.bf16.msra.mxu0 0
        %3771 = vmatprep.subr.bf16.mxu0 0
        %3772 = vmatpush1.bf16.msra.mxu0 0
        %3773 = vmatprep.subr.bf16.mxu0 0
        %3774 = vmatpush1.bf16.msra.mxu0 0
        %3775 = vmatprep.subr.bf16.mxu0 0
        %3776 = vmatpush1.bf16.msra.mxu0 0
        %3777 = vmatprep.subr.bf16.mxu0 0
        %3778 = vmatpush1.bf16.msra.mxu0 0
        %3779 = vmatprep.subr.bf16.mxu0 0
        %3780 = vmatpush1.bf16.msra.mxu0 0
        %3781 = vmatprep.subr.bf16.mxu0 0
        %3782 = vmatpush1.bf16.msra.mxu0 0
        %3783 = vmatprep.subr.bf16.mxu0 0
        %3784 = vmatpush1.bf16.msra.mxu0 0
        %3785 = vmatprep.mubr.bf16.mxu0 0
        %3786 = vmatmul.mubr.bf16.gmra.mrb[0].mxu0 %v3349
        %v3787 = vpop.f32.mrb[0].mxu0
        %v3788 = vadd.f32 0.0, %v3787
        %v3789 = vpop.f32.mrb[0].mxu0
        %v3790 = vadd.f32 0.0, %v3789
        %v3791 = vpop.f32.mrb[0].mxu0
        %v3792 = vpop.f32.mrb[0].mxu0
        %3793 = vdwg.mxu0
        %3794 = vmatprep.subr.bf16.mxu0 %v3550
        %3795 = vmatpush1.bf16.msra.mxu0 %v3549
        %3796 = vmatprep.subr.bf16.mxu0 %v3558
        %3797 = vmatpush1.bf16.msra.mxu0 %v3557
        %3798 = vmatprep.subr.bf16.mxu0 %v3566
        %3799 = vmatpush1.bf16.msra.mxu0 %v3565
        %3800 = vmatprep.subr.bf16.mxu0 %v3574
        %3801 = vmatpush1.bf16.msra.mxu0 %v3573
        %3802 = vmatprep.subr.bf16.mxu0 %v3582
        %3803 = vmatpush1.bf16.msra.mxu0 %v3581
        %3804 = vmatprep.subr.bf16.mxu0 %v3590
        %3805 = vmatpush1.bf16.msra.mxu0 %v3589
        %3806 = vmatprep.subr.bf16.mxu0 %v3598
        %3807 = vmatpush1.bf16.msra.mxu0 %v3597
        %3808 = vmatprep.subr.bf16.mxu0 %v3606
        %3809 = vmatpush1.bf16.msra.mxu0 %v3605
        %3810 = vmatprep.subr.bf16.mxu0 0
        %3811 = vmatpush1.bf16.msra.mxu0 0
        %3812 = vmatprep.subr.bf16.mxu0 0
        %3813 = vmatpush1.bf16.msra.mxu0 0
        %3814 = vmatprep.subr.bf16.mxu0 0
        %3815 = vmatpush1.bf16.msra.mxu0 0
        %3816 = vmatprep.subr.bf16.mxu0 0
        %3817 = vmatpush1.bf16.msra.mxu0 0
        %3818 = vmatprep.subr.bf16.mxu0 0
        %3819 = vmatpush1.bf16.msra.mxu0 0
        %3820 = vmatprep.subr.bf16.mxu0 0
        %3821 = vmatpush1.bf16.msra.mxu0 0
        %3822 = vmatprep.subr.bf16.mxu0 0
        %3823 = vmatpush1.bf16.msra.mxu0 0
        %3824 = vmatprep.subr.bf16.mxu0 0
        %3825 = vmatpush1.bf16.msra.mxu0 0
        %3826 = vmatprep.mubr.bf16.mxu0 0
        %3827 = vmatmul.mubr.bf16.gmra.mrb[0].mxu0 %v3349
        %v3828 = vpop.f32.mrb[0].mxu0
        %v3829 = vadd.f32 0.0, %v3828
        %v3830 = vpop.f32.mrb[0].mxu0
        %v3831 = vadd.f32 0.0, %v3830
        %v3832 = vpop.f32.mrb[0].mxu0
        %v3833 = vpop.f32.mrb[0].mxu0
        %3834 = vdwg.mxu0
        %v3843 = vcombine.low %v3706, %v3708
        %v3844 = vcombine.low %v3747, %v3749
        %v3846 = vunpack.c.l.s4 1983009808
        %v3847 = vunpack.c.0.s8 %v3846
        %v3848 = vlaneseq
        %v3849 = vshrl.u32 %v3848, 7
        %v3850 = vsub.s32 %v3847, %v3849
        %v3851 = vrot.slane %v3843, %v3850
        %v3853 = vunpack.c.l.s4 1983009808
        %v3854 = vunpack.c.0.s8 %v3853
        %v3855 = vlaneseq
        %v3856 = vshrl.u32 %v3855, 7
        %v3857 = vsub.s32 %v3854, %v3856
        %v3858 = vrot.slane %v3844, %v3857
        %v3859 = vcombine.low %v3851, %v3858
        %v3860 = vcombine.low %v3788, %v3790
        %v3861 = vcombine.low %v3829, %v3831
        %v3863 = vunpack.c.l.s4 1983009808
        %v3864 = vunpack.c.0.s8 %v3863
        %v3865 = vlaneseq
        %v3866 = vshrl.u32 %v3865, 7
        %v3867 = vsub.s32 %v3864, %v3866
        %v3868 = vrot.slane %v3860, %v3867
        %v3870 = vunpack.c.l.s4 1983009808
        %v3871 = vunpack.c.0.s8 %v3870
        %v3872 = vlaneseq
        %v3873 = vshrl.u32 %v3872, 7
        %v3874 = vsub.s32 %v3871, %v3873
        %v3875 = vrot.slane %v3861, %v3874
        %v3876 = vcombine.low %v3868, %v3875
        %v3879 = vadd.f32 %v3279, %v3859
        %v3880 = vadd.f32 %v3280, %v3876
        %s3881 = scalar_lea.vmem %s344, 2560 [#allocation10]
        %v3882 = vld [vmem:[%s3881] sm:$0xff]
        %v3883 = vld [vmem:[%s3881 + $0x8] sm:$0xff]
        %v3884 = vld [vmem:[%s3881 + $0x10] sm:$0xff]
        %v3885 = vld [vmem:[%s3881 + $0x18] sm:$0xff]
        %v3886 = vld [vmem:[%s3881 + $0x20] sm:$0xff]
        %v3887 = vld [vmem:[%s3881 + $0x28] sm:$0xff]
        %v3888 = vld [vmem:[%s3881 + $0x30] sm:$0xff]
        %v3889 = vld [vmem:[%s3881 + $0x38] sm:$0xff]
        %v3890 = vld [vmem:[%s3881 + $0x40] sm:$0xff]
        %v3891 = vld [vmem:[%s3881 + $0x48] sm:$0xff]
        %v3892 = vld [vmem:[%s3881 + $0x50] sm:$0xff]
        %v3893 = vld [vmem:[%s3881 + $0x58] sm:$0xff]
        %v3894 = vld [vmem:[%s3881 + $0x60] sm:$0xff]
        %v3895 = vld [vmem:[%s3881 + $0x68] sm:$0xff]
        %v3896 = vld [vmem:[%s3881 + $0x70] sm:$0xff]
        %v3897 = vld [vmem:[%s3881 + $0x78] sm:$0xff]
        %v3898 = vld [vmem:[%s3881 + $0x80] sm:$0xff]
        %v3899 = vld [vmem:[%s3881 + $0x88] sm:$0xff]
        %v3900 = vld [vmem:[%s3881 + $0x90] sm:$0xff]
        %v3901 = vld [vmem:[%s3881 + $0x98] sm:$0xff]
        %v3902 = vld [vmem:[%s3881 + $0xa0] sm:$0xff]
        %v3903 = vld [vmem:[%s3881 + $0xa8] sm:$0xff]
        %v3904 = vld [vmem:[%s3881 + $0xb0] sm:$0xff]
        %v3905 = vld [vmem:[%s3881 + $0xb8] sm:$0xff]
        %v3906 = vld [vmem:[%s3881 + $0xc0] sm:$0xff]
        %v3907 = vld [vmem:[%s3881 + $0xc8] sm:$0xff]
        %v3908 = vld [vmem:[%s3881 + $0xd0] sm:$0xff]
        %v3909 = vld [vmem:[%s3881 + $0xd8] sm:$0xff]
        %v3910 = vld [vmem:[%s3881 + $0xe0] sm:$0xff]
        %v3911 = vld [vmem:[%s3881 + $0xe8] sm:$0xff]
        %v3912 = vld [vmem:[%s3881 + $0xf0] sm:$0xff]
        %v3913 = vld [vmem:[%s3881 + $0xf8] sm:$0xff]
        %v3914 = vld [vmem:[%s3881 + $0x100] sm:$0xff]
        %v3915 = vld [vmem:[%s3881 + $0x108] sm:$0xff]
        %v3916 = vld [vmem:[%s3881 + $0x110] sm:$0xff]
        %v3917 = vld [vmem:[%s3881 + $0x118] sm:$0xff]
        %v3918 = vld [vmem:[%s3881 + $0x120] sm:$0xff]
        %v3919 = vld [vmem:[%s3881 + $0x128] sm:$0xff]
        %v3920 = vld [vmem:[%s3881 + $0x130] sm:$0xff]
        %v3921 = vld [vmem:[%s3881 + $0x138] sm:$0xff]
        %v3922 = vld [vmem:[%s3881 + $0x140] sm:$0xff]
        %v3923 = vld [vmem:[%s3881 + $0x148] sm:$0xff]
        %v3924 = vld [vmem:[%s3881 + $0x150] sm:$0xff]
        %v3925 = vld [vmem:[%s3881 + $0x158] sm:$0xff]
        %v3926 = vld [vmem:[%s3881 + $0x160] sm:$0xff]
        %v3927 = vld [vmem:[%s3881 + $0x168] sm:$0xff]
        %v3928 = vld [vmem:[%s3881 + $0x170] sm:$0xff]
        %v3929 = vld [vmem:[%s3881 + $0x178] sm:$0xff]
        %v3930 = vld [vmem:[%s3881 + $0x180] sm:$0xff]
        %v3931 = vld [vmem:[%s3881 + $0x188] sm:$0xff]
        %v3932 = vld [vmem:[%s3881 + $0x190] sm:$0xff]
        %v3933 = vld [vmem:[%s3881 + $0x198] sm:$0xff]
        %v3934 = vld [vmem:[%s3881 + $0x1a0] sm:$0xff]
        %v3935 = vld [vmem:[%s3881 + $0x1a8] sm:$0xff]
        %v3936 = vld [vmem:[%s3881 + $0x1b0] sm:$0xff]
        %v3937 = vld [vmem:[%s3881 + $0x1b8] sm:$0xff]
        %v3938 = vld [vmem:[%s3881 + $0x1c0] sm:$0xff]
        %v3939 = vld [vmem:[%s3881 + $0x1c8] sm:$0xff]
        %v3940 = vld [vmem:[%s3881 + $0x1d0] sm:$0xff]
        %v3941 = vld [vmem:[%s3881 + $0x1d8] sm:$0xff]
        %v3942 = vld [vmem:[%s3881 + $0x1e0] sm:$0xff]
        %v3943 = vld [vmem:[%s3881 + $0x1e8] sm:$0xff]
        %v3944 = vld [vmem:[%s3881 + $0x1f0] sm:$0xff]
        %v3945 = vld [vmem:[%s3881 + $0x1f8] sm:$0xff]
        %v3946 = vrot.slane %v945, 5
        %v3947 = vrot.slane %v946, 4
        %v3948 = vsel %vm948, %v3947, %v3946
        %v3949 = vpack.c.b16 %v3948, %v3948
        %v4015 = vunpack.c.l.b16 %v3882
        %v4016 = vunpack.c.h.b16 %v3882
        %v4017 = vunpack.c.l.b16 %v3883
        %v4018 = vunpack.c.h.b16 %v3883
        %v4019 = vunpack.c.l.b16 %v3884
        %v4020 = vunpack.c.h.b16 %v3884
        %v4021 = vunpack.c.l.b16 %v3885
        %v4022 = vunpack.c.h.b16 %v3885
        %v4023 = vunpack.c.l.b16 %v3886
        %v4024 = vunpack.c.h.b16 %v3886
        %v4025 = vunpack.c.l.b16 %v3887
        %v4026 = vunpack.c.h.b16 %v3887
        %v4027 = vunpack.c.l.b16 %v3888
        %v4028 = vunpack.c.h.b16 %v3888
        %v4029 = vunpack.c.l.b16 %v3889
        %v4030 = vunpack.c.h.b16 %v3889
        %v4031 = vunpack.c.l.b16 %v3890
        %v4032 = vunpack.c.h.b16 %v3890
        %v4033 = vunpack.c.l.b16 %v3891
        %v4034 = vunpack.c.h.b16 %v3891
        %v4035 = vunpack.c.l.b16 %v3892
        %v4036 = vunpack.c.h.b16 %v3892
        %v4037 = vunpack.c.l.b16 %v3893
        %v4038 = vunpack.c.h.b16 %v3893
        %v4039 = vunpack.c.l.b16 %v3894
        %v4040 = vunpack.c.h.b16 %v3894
        %v4041 = vunpack.c.l.b16 %v3895
        %v4042 = vunpack.c.h.b16 %v3895
        %v4043 = vunpack.c.l.b16 %v3896
        %v4044 = vunpack.c.h.b16 %v3896
        %v4045 = vunpack.c.l.b16 %v3897
        %v4046 = vunpack.c.h.b16 %v3897
        %v4047 = vunpack.c.l.b16 %v3898
        %v4048 = vunpack.c.h.b16 %v3898
        %v4049 = vunpack.c.l.b16 %v3899
        %v4050 = vunpack.c.h.b16 %v3899
        %v4051 = vunpack.c.l.b16 %v3900
        %v4052 = vunpack.c.h.b16 %v3900
        %v4053 = vunpack.c.l.b16 %v3901
        %v4054 = vunpack.c.h.b16 %v3901
        %v4055 = vunpack.c.l.b16 %v3902
        %v4056 = vunpack.c.h.b16 %v3902
        %v4057 = vunpack.c.l.b16 %v3903
        %v4058 = vunpack.c.h.b16 %v3903
        %v4059 = vunpack.c.l.b16 %v3904
        %v4060 = vunpack.c.h.b16 %v3904
        %v4061 = vunpack.c.l.b16 %v3905
        %v4062 = vunpack.c.h.b16 %v3905
        %v4063 = vunpack.c.l.b16 %v3906
        %v4064 = vunpack.c.h.b16 %v3906
        %v4065 = vunpack.c.l.b16 %v3907
        %v4066 = vunpack.c.h.b16 %v3907
        %v4067 = vunpack.c.l.b16 %v3908
        %v4068 = vunpack.c.h.b16 %v3908
        %v4069 = vunpack.c.l.b16 %v3909
        %v4070 = vunpack.c.h.b16 %v3909
        %v4071 = vunpack.c.l.b16 %v3910
        %v4072 = vunpack.c.h.b16 %v3910
        %v4073 = vunpack.c.l.b16 %v3911
        %v4074 = vunpack.c.h.b16 %v3911
        %v4075 = vunpack.c.l.b16 %v3912
        %v4076 = vunpack.c.h.b16 %v3912
        %v4077 = vunpack.c.l.b16 %v3913
        %v4078 = vunpack.c.h.b16 %v3913
        %v4079 = vunpack.c.l.b16 %v3914
        %v4080 = vunpack.c.h.b16 %v3914
        %v4081 = vunpack.c.l.b16 %v3915
        %v4082 = vunpack.c.h.b16 %v3915
        %v4083 = vunpack.c.l.b16 %v3916
        %v4084 = vunpack.c.h.b16 %v3916
        %v4085 = vunpack.c.l.b16 %v3917
        %v4086 = vunpack.c.h.b16 %v3917
        %v4087 = vunpack.c.l.b16 %v3918
        %v4088 = vunpack.c.h.b16 %v3918
        %v4089 = vunpack.c.l.b16 %v3919
        %v4090 = vunpack.c.h.b16 %v3919
        %v4091 = vunpack.c.l.b16 %v3920
        %v4092 = vunpack.c.h.b16 %v3920
        %v4093 = vunpack.c.l.b16 %v3921
        %v4094 = vunpack.c.h.b16 %v3921
        %v4095 = vunpack.c.l.b16 %v3922
        %v4096 = vunpack.c.h.b16 %v3922
        %v4097 = vunpack.c.l.b16 %v3923
        %v4098 = vunpack.c.h.b16 %v3923
        %v4099 = vunpack.c.l.b16 %v3924
        %v4100 = vunpack.c.h.b16 %v3924
        %v4101 = vunpack.c.l.b16 %v3925
        %v4102 = vunpack.c.h.b16 %v3925
        %v4103 = vunpack.c.l.b16 %v3926
        %v4104 = vunpack.c.h.b16 %v3926
        %v4105 = vunpack.c.l.b16 %v3927
        %v4106 = vunpack.c.h.b16 %v3927
        %v4107 = vunpack.c.l.b16 %v3928
        %v4108 = vunpack.c.h.b16 %v3928
        %v4109 = vunpack.c.l.b16 %v3929
        %v4110 = vunpack.c.h.b16 %v3929
        %v4111 = vunpack.c.l.b16 %v3930
        %v4112 = vunpack.c.h.b16 %v3930
        %v4113 = vunpack.c.l.b16 %v3931
        %v4114 = vunpack.c.h.b16 %v3931
        %v4115 = vunpack.c.l.b16 %v3932
        %v4116 = vunpack.c.h.b16 %v3932
        %v4117 = vunpack.c.l.b16 %v3933
        %v4118 = vunpack.c.h.b16 %v3933
        %v4119 = vunpack.c.l.b16 %v3934
        %v4120 = vunpack.c.h.b16 %v3934
        %v4121 = vunpack.c.l.b16 %v3935
        %v4122 = vunpack.c.h.b16 %v3935
        %v4123 = vunpack.c.l.b16 %v3936
        %v4124 = vunpack.c.h.b16 %v3936
        %v4125 = vunpack.c.l.b16 %v3937
        %v4126 = vunpack.c.h.b16 %v3937
        %v4127 = vunpack.c.l.b16 %v3938
        %v4128 = vunpack.c.h.b16 %v3938
        %v4129 = vunpack.c.l.b16 %v3939
        %v4130 = vunpack.c.h.b16 %v3939
        %v4131 = vunpack.c.l.b16 %v3940
        %v4132 = vunpack.c.h.b16 %v3940
        %v4133 = vunpack.c.l.b16 %v3941
        %v4134 = vunpack.c.h.b16 %v3941
        %v4135 = vunpack.c.l.b16 %v3942
        %v4136 = vunpack.c.h.b16 %v3942
        %v4137 = vunpack.c.l.b16 %v3943
        %v4138 = vunpack.c.h.b16 %v3943
        %v4139 = vunpack.c.l.b16 %v3944
        %v4140 = vunpack.c.h.b16 %v3944
        %v4141 = vunpack.c.l.b16 %v3945
        %v4142 = vunpack.c.h.b16 %v3945
        %v4143 = vpack.c.b16 %v4023, %v4015
        %v4144 = vpack.c.b16 %v4024, %v4016
        %v4145 = vpack.c.b16 %v4025, %v4017
        %v4146 = vpack.c.b16 %v4026, %v4018
        %v4147 = vpack.c.b16 %v4027, %v4019
        %v4148 = vpack.c.b16 %v4028, %v4020
        %v4149 = vpack.c.b16 %v4029, %v4021
        %v4150 = vpack.c.b16 %v4030, %v4022
        %v4151 = vpack.c.b16 %v4039, %v4031
        %v4152 = vpack.c.b16 %v4040, %v4032
        %v4153 = vpack.c.b16 %v4041, %v4033
        %v4154 = vpack.c.b16 %v4042, %v4034
        %v4155 = vpack.c.b16 %v4043, %v4035
        %v4156 = vpack.c.b16 %v4044, %v4036
        %v4157 = vpack.c.b16 %v4045, %v4037
        %v4158 = vpack.c.b16 %v4046, %v4038
        %v4159 = vpack.c.b16 %v4055, %v4047
        %v4160 = vpack.c.b16 %v4056, %v4048
        %v4161 = vpack.c.b16 %v4057, %v4049
        %v4162 = vpack.c.b16 %v4058, %v4050
        %v4163 = vpack.c.b16 %v4059, %v4051
        %v4164 = vpack.c.b16 %v4060, %v4052
        %v4165 = vpack.c.b16 %v4061, %v4053
        %v4166 = vpack.c.b16 %v4062, %v4054
        %v4167 = vpack.c.b16 %v4071, %v4063
        %v4168 = vpack.c.b16 %v4072, %v4064
        %v4169 = vpack.c.b16 %v4073, %v4065
        %v4170 = vpack.c.b16 %v4074, %v4066
        %v4171 = vpack.c.b16 %v4075, %v4067
        %v4172 = vpack.c.b16 %v4076, %v4068
        %v4173 = vpack.c.b16 %v4077, %v4069
        %v4174 = vpack.c.b16 %v4078, %v4070
        %v4175 = vpack.c.b16 %v4087, %v4079
        %v4176 = vpack.c.b16 %v4088, %v4080
        %v4177 = vpack.c.b16 %v4089, %v4081
        %v4178 = vpack.c.b16 %v4090, %v4082
        %v4179 = vpack.c.b16 %v4091, %v4083
        %v4180 = vpack.c.b16 %v4092, %v4084
        %v4181 = vpack.c.b16 %v4093, %v4085
        %v4182 = vpack.c.b16 %v4094, %v4086
        %v4183 = vpack.c.b16 %v4103, %v4095
        %v4184 = vpack.c.b16 %v4104, %v4096
        %v4185 = vpack.c.b16 %v4105, %v4097
        %v4186 = vpack.c.b16 %v4106, %v4098
        %v4187 = vpack.c.b16 %v4107, %v4099
        %v4188 = vpack.c.b16 %v4108, %v4100
        %v4189 = vpack.c.b16 %v4109, %v4101
        %v4190 = vpack.c.b16 %v4110, %v4102
        %v4191 = vpack.c.b16 %v4119, %v4111
        %v4192 = vpack.c.b16 %v4120, %v4112
        %v4193 = vpack.c.b16 %v4121, %v4113
        %v4194 = vpack.c.b16 %v4122, %v4114
        %v4195 = vpack.c.b16 %v4123, %v4115
        %v4196 = vpack.c.b16 %v4124, %v4116
        %v4197 = vpack.c.b16 %v4125, %v4117
        %v4198 = vpack.c.b16 %v4126, %v4118
        %v4199 = vpack.c.b16 %v4135, %v4127
        %v4200 = vpack.c.b16 %v4136, %v4128
        %v4201 = vpack.c.b16 %v4137, %v4129
        %v4202 = vpack.c.b16 %v4138, %v4130
        %v4203 = vpack.c.b16 %v4139, %v4131
        %v4204 = vpack.c.b16 %v4140, %v4132
        %v4205 = vpack.c.b16 %v4141, %v4133
        %v4206 = vpack.c.b16 %v4142, %v4134
        %4271 = vmatprep.subr.bf16.mxu0 %v4144
        %4272 = vmatpush1.bf16.msra.mxu0 %v4143
        %4273 = vmatprep.subr.bf16.mxu0 %v4152
        %4274 = vmatpush1.bf16.msra.mxu0 %v4151
        %4275 = vmatprep.subr.bf16.mxu0 %v4160
        %4276 = vmatpush1.bf16.msra.mxu0 %v4159
        %4277 = vmatprep.subr.bf16.mxu0 %v4168
        %4278 = vmatpush1.bf16.msra.mxu0 %v4167
        %4279 = vmatprep.subr.bf16.mxu0 %v4176
        %4280 = vmatpush1.bf16.msra.mxu0 %v4175
        %4281 = vmatprep.subr.bf16.mxu0 %v4184
        %4282 = vmatpush1.bf16.msra.mxu0 %v4183
        %4283 = vmatprep.subr.bf16.mxu0 %v4192
        %4284 = vmatpush1.bf16.msra.mxu0 %v4191
        %4285 = vmatprep.subr.bf16.mxu0 %v4200
        %4286 = vmatpush1.bf16.msra.mxu0 %v4199
        %4287 = vmatprep.subr.bf16.mxu0 0
        %4288 = vmatpush1.bf16.msra.mxu0 0
        %4289 = vmatprep.subr.bf16.mxu0 0
        %4290 = vmatpush1.bf16.msra.mxu0 0
        %4291 = vmatprep.subr.bf16.mxu0 0
        %4292 = vmatpush1.bf16.msra.mxu0 0
        %4293 = vmatprep.subr.bf16.mxu0 0
        %4294 = vmatpush1.bf16.msra.mxu0 0
        %4295 = vmatprep.subr.bf16.mxu0 0
        %4296 = vmatpush1.bf16.msra.mxu0 0
        %4297 = vmatprep.subr.bf16.mxu0 0
        %4298 = vmatpush1.bf16.msra.mxu0 0
        %4299 = vmatprep.subr.bf16.mxu0 0
        %4300 = vmatpush1.bf16.msra.mxu0 0
        %4301 = vmatprep.subr.bf16.mxu0 0
        %4302 = vmatpush1.bf16.msra.mxu0 0
        %4303 = vmatprep.mubr.bf16.mxu0 0
        %4304 = vmatmul.mubr.bf16.gmra.mrb[0].mxu0 %v3949
        %v4305 = vpop.f32.mrb[0].mxu0
        %v4306 = vadd.f32 0.0, %v4305
        %v4307 = vpop.f32.mrb[0].mxu0
        %v4308 = vadd.f32 0.0, %v4307
        %v4309 = vpop.f32.mrb[0].mxu0
        %v4310 = vpop.f32.mrb[0].mxu0
        %4311 = vdwg.mxu0
        %4312 = vmatprep.subr.bf16.mxu0 %v4146
        %4313 = vmatpush1.bf16.msra.mxu0 %v4145
        %4314 = vmatprep.subr.bf16.mxu0 %v4154
        %4315 = vmatpush1.bf16.msra.mxu0 %v4153
        %4316 = vmatprep.subr.bf16.mxu0 %v4162
        %4317 = vmatpush1.bf16.msra.mxu0 %v4161
        %4318 = vmatprep.subr.bf16.mxu0 %v4170
        %4319 = vmatpush1.bf16.msra.mxu0 %v4169
        %4320 = vmatprep.subr.bf16.mxu0 %v4178
        %4321 = vmatpush1.bf16.msra.mxu0 %v4177
        %4322 = vmatprep.subr.bf16.mxu0 %v4186
        %4323 = vmatpush1.bf16.msra.mxu0 %v4185
        %4324 = vmatprep.subr.bf16.mxu0 %v4194
        %4325 = vmatpush1.bf16.msra.mxu0 %v4193
        %4326 = vmatprep.subr.bf16.mxu0 %v4202
        %4327 = vmatpush1.bf16.msra.mxu0 %v4201
        %4328 = vmatprep.subr.bf16.mxu0 0
        %4329 = vmatpush1.bf16.msra.mxu0 0
        %4330 = vmatprep.subr.bf16.mxu0 0
        %4331 = vmatpush1.bf16.msra.mxu0 0
        %4332 = vmatprep.subr.bf16.mxu0 0
        %4333 = vmatpush1.bf16.msra.mxu0 0
        %4334 = vmatprep.subr.bf16.mxu0 0
        %4335 = vmatpush1.bf16.msra.mxu0 0
        %4336 = vmatprep.subr.bf16.mxu0 0
        %4337 = vmatpush1.bf16.msra.mxu0 0
        %4338 = vmatprep.subr.bf16.mxu0 0
        %4339 = vmatpush1.bf16.msra.mxu0 0
        %4340 = vmatprep.subr.bf16.mxu0 0
        %4341 = vmatpush1.bf16.msra.mxu0 0
        %4342 = vmatprep.subr.bf16.mxu0 0
        %4343 = vmatpush1.bf16.msra.mxu0 0
        %4344 = vmatprep.mubr.bf16.mxu0 0
        %4345 = vmatmul.mubr.bf16.gmra.mrb[0].mxu0 %v3949
        %v4346 = vpop.f32.mrb[0].mxu0
        %v4347 = vadd.f32 0.0, %v4346
        %v4348 = vpop.f32.mrb[0].mxu0
        %v4349 = vadd.f32 0.0, %v4348
        %v4350 = vpop.f32.mrb[0].mxu0
        %v4351 = vpop.f32.mrb[0].mxu0
        %4352 = vdwg.mxu0
        %4353 = vmatprep.subr.bf16.mxu0 %v4148
        %4354 = vmatpush1.bf16.msra.mxu0 %v4147
        %4355 = vmatprep.subr.bf16.mxu0 %v4156
        %4356 = vmatpush1.bf16.msra.mxu0 %v4155
        %4357 = vmatprep.subr.bf16.mxu0 %v4164
        %4358 = vmatpush1.bf16.msra.mxu0 %v4163
        %4359 = vmatprep.subr.bf16.mxu0 %v4172
        %4360 = vmatpush1.bf16.msra.mxu0 %v4171
        %4361 = vmatprep.subr.bf16.mxu0 %v4180
        %4362 = vmatpush1.bf16.msra.mxu0 %v4179
        %4363 = vmatprep.subr.bf16.mxu0 %v4188
        %4364 = vmatpush1.bf16.msra.mxu0 %v4187
        %4365 = vmatprep.subr.bf16.mxu0 %v4196
        %4366 = vmatpush1.bf16.msra.mxu0 %v4195
        %4367 = vmatprep.subr.bf16.mxu0 %v4204
        %4368 = vmatpush1.bf16.msra.mxu0 %v4203
        %4369 = vmatprep.subr.bf16.mxu0 0
        %4370 = vmatpush1.bf16.msra.mxu0 0
        %4371 = vmatprep.subr.bf16.mxu0 0
        %4372 = vmatpush1.bf16.msra.mxu0 0
        %4373 = vmatprep.subr.bf16.mxu0 0
        %4374 = vmatpush1.bf16.msra.mxu0 0
        %4375 = vmatprep.subr.bf16.mxu0 0
        %4376 = vmatpush1.bf16.msra.mxu0 0
        %4377 = vmatprep.subr.bf16.mxu0 0
        %4378 = vmatpush1.bf16.msra.mxu0 0
        %4379 = vmatprep.subr.bf16.mxu0 0
        %4380 = vmatpush1.bf16.msra.mxu0 0
        %4381 = vmatprep.subr.bf16.mxu0 0
        %4382 = vmatpush1.bf16.msra.mxu0 0
        %4383 = vmatprep.subr.bf16.mxu0 0
        %4384 = vmatpush1.bf16.msra.mxu0 0
        %4385 = vmatprep.mubr.bf16.mxu0 0
        %4386 = vmatmul.mubr.bf16.gmra.mrb[0].mxu0 %v3949
        %v4387 = vpop.f32.mrb[0].mxu0
        %v4388 = vadd.f32 0.0, %v4387
        %v4389 = vpop.f32.mrb[0].mxu0
        %v4390 = vadd.f32 0.0, %v4389
        %v4391 = vpop.f32.mrb[0].mxu0
        %v4392 = vpop.f32.mrb[0].mxu0
        %4393 = vdwg.mxu0
        %4394 = vmatprep.subr.bf16.mxu0 %v4150
        %4395 = vmatpush1.bf16.msra.mxu0 %v4149
        %4396 = vmatprep.subr.bf16.mxu0 %v4158
        %4397 = vmatpush1.bf16.msra.mxu0 %v4157
        %4398 = vmatprep.subr.bf16.mxu0 %v4166
        %4399 = vmatpush1.bf16.msra.mxu0 %v4165
        %4400 = vmatprep.subr.bf16.mxu0 %v4174
        %4401 = vmatpush1.bf16.msra.mxu0 %v4173
        %4402 = vmatprep.subr.bf16.mxu0 %v4182
        %4403 = vmatpush1.bf16.msra.mxu0 %v4181
        %4404 = vmatprep.subr.bf16.mxu0 %v4190
        %4405 = vmatpush1.bf16.msra.mxu0 %v4189
        %4406 = vmatprep.subr.bf16.mxu0 %v4198
        %4407 = vmatpush1.bf16.msra.mxu0 %v4197
        %4408 = vmatprep.subr.bf16.mxu0 %v4206
        %4409 = vmatpush1.bf16.msra.mxu0 %v4205
        %4410 = vmatprep.subr.bf16.mxu0 0
        %4411 = vmatpush1.bf16.msra.mxu0 0
        %4412 = vmatprep.subr.bf16.mxu0 0
        %4413 = vmatpush1.bf16.msra.mxu0 0
        %4414 = vmatprep.subr.bf16.mxu0 0
        %4415 = vmatpush1.bf16.msra.mxu0 0
        %4416 = vmatprep.subr.bf16.mxu0 0
        %4417 = vmatpush1.bf16.msra.mxu0 0
        %4418 = vmatprep.subr.bf16.mxu0 0
        %4419 = vmatpush1.bf16.msra.mxu0 0
        %4420 = vmatprep.subr.bf16.mxu0 0
        %4421 = vmatpush1.bf16.msra.mxu0 0
        %4422 = vmatprep.subr.bf16.mxu0 0
        %4423 = vmatpush1.bf16.msra.mxu0 0
        %4424 = vmatprep.subr.bf16.mxu0 0
        %4425 = vmatpush1.bf16.msra.mxu0 0
        %4426 = vmatprep.mubr.bf16.mxu0 0
        %4427 = vmatmul.mubr.bf16.gmra.mrb[0].mxu0 %v3949
        %v4428 = vpop.f32.mrb[0].mxu0
        %v4429 = vadd.f32 0.0, %v4428
        %v4430 = vpop.f32.mrb[0].mxu0
        %v4431 = vadd.f32 0.0, %v4430
        %v4432 = vpop.f32.mrb[0].mxu0
        %v4433 = vpop.f32.mrb[0].mxu0
        %4434 = vdwg.mxu0
        %v4443 = vcombine.low %v4306, %v4308
        %v4444 = vcombine.low %v4347, %v4349
        %v4446 = vunpack.c.l.s4 1983009808
        %v4447 = vunpack.c.0.s8 %v4446
        %v4448 = vlaneseq
        %v4449 = vshrl.u32 %v4448, 7
        %v4450 = vsub.s32 %v4447, %v4449
        %v4451 = vrot.slane %v4443, %v4450
        %v4453 = vunpack.c.l.s4 1983009808
        %v4454 = vunpack.c.0.s8 %v4453
        %v4455 = vlaneseq
        %v4456 = vshrl.u32 %v4455, 7
        %v4457 = vsub.s32 %v4454, %v4456
        %v4458 = vrot.slane %v4444, %v4457
        %v4459 = vcombine.low %v4451, %v4458
        %v4460 = vcombine.low %v4388, %v4390
        %v4461 = vcombine.low %v4429, %v4431
        %v4463 = vunpack.c.l.s4 1983009808
        %v4464 = vunpack.c.0.s8 %v4463
        %v4465 = vlaneseq
        %v4466 = vshrl.u32 %v4465, 7
        %v4467 = vsub.s32 %v4464, %v4466
        %v4468 = vrot.slane %v4460, %v4467
        %v4470 = vunpack.c.l.s4 1983009808
        %v4471 = vunpack.c.0.s8 %v4470
        %v4472 = vlaneseq
        %v4473 = vshrl.u32 %v4472, 7
        %v4474 = vsub.s32 %v4471, %v4473
        %v4475 = vrot.slane %v4461, %v4474
        %v4476 = vcombine.low %v4468, %v4475
        %v4479 = vadd.f32 %v3879, %v4459
        %v4480 = vadd.f32 %v3880, %v4476
        %s4481 = scalar_lea.vmem %s344, 3072 [#allocation10]
        %v4482 = vld [vmem:[%s4481] sm:$0xff]
        %v4483 = vld [vmem:[%s4481 + $0x8] sm:$0xff]
        %v4484 = vld [vmem:[%s4481 + $0x10] sm:$0xff]
        %v4485 = vld [vmem:[%s4481 + $0x18] sm:$0xff]
        %v4486 = vld [vmem:[%s4481 + $0x20] sm:$0xff]
        %v4487 = vld [vmem:[%s4481 + $0x28] sm:$0xff]
        %v4488 = vld [vmem:[%s4481 + $0x30] sm:$0xff]
        %v4489 = vld [vmem:[%s4481 + $0x38] sm:$0xff]
        %v4490 = vld [vmem:[%s4481 + $0x40] sm:$0xff]
        %v4491 = vld [vmem:[%s4481 + $0x48] sm:$0xff]
        %v4492 = vld [vmem:[%s4481 + $0x50] sm:$0xff]
        %v4493 = vld [vmem:[%s4481 + $0x58] sm:$0xff]
        %v4494 = vld [vmem:[%s4481 + $0x60] sm:$0xff]
        %v4495 = vld [vmem:[%s4481 + $0x68] sm:$0xff]
        %v4496 = vld [vmem:[%s4481 + $0x70] sm:$0xff]
        %v4497 = vld [vmem:[%s4481 + $0x78] sm:$0xff]
        %v4498 = vld [vmem:[%s4481 + $0x80] sm:$0xff]
        %v4499 = vld [vmem:[%s4481 + $0x88] sm:$0xff]
        %v4500 = vld [vmem:[%s4481 + $0x90] sm:$0xff]
        %v4501 = vld [vmem:[%s4481 + $0x98] sm:$0xff]
        %v4502 = vld [vmem:[%s4481 + $0xa0] sm:$0xff]
        %v4503 = vld [vmem:[%s4481 + $0xa8] sm:$0xff]
        %v4504 = vld [vmem:[%s4481 + $0xb0] sm:$0xff]
        %v4505 = vld [vmem:[%s4481 + $0xb8] sm:$0xff]
        %v4506 = vld [vmem:[%s4481 + $0xc0] sm:$0xff]
        %v4507 = vld [vmem:[%s4481 + $0xc8] sm:$0xff]
        %v4508 = vld [vmem:[%s4481 + $0xd0] sm:$0xff]
        %v4509 = vld [vmem:[%s4481 + $0xd8] sm:$0xff]
        %v4510 = vld [vmem:[%s4481 + $0xe0] sm:$0xff]
        %v4511 = vld [vmem:[%s4481 + $0xe8] sm:$0xff]
        %v4512 = vld [vmem:[%s4481 + $0xf0] sm:$0xff]
        %v4513 = vld [vmem:[%s4481 + $0xf8] sm:$0xff]
        %v4514 = vld [vmem:[%s4481 + $0x100] sm:$0xff]
        %v4515 = vld [vmem:[%s4481 + $0x108] sm:$0xff]
        %v4516 = vld [vmem:[%s4481 + $0x110] sm:$0xff]
        %v4517 = vld [vmem:[%s4481 + $0x118] sm:$0xff]
        %v4518 = vld [vmem:[%s4481 + $0x120] sm:$0xff]
        %v4519 = vld [vmem:[%s4481 + $0x128] sm:$0xff]
        %v4520 = vld [vmem:[%s4481 + $0x130] sm:$0xff]
        %v4521 = vld [vmem:[%s4481 + $0x138] sm:$0xff]
        %v4522 = vld [vmem:[%s4481 + $0x140] sm:$0xff]
        %v4523 = vld [vmem:[%s4481 + $0x148] sm:$0xff]
        %v4524 = vld [vmem:[%s4481 + $0x150] sm:$0xff]
        %v4525 = vld [vmem:[%s4481 + $0x158] sm:$0xff]
        %v4526 = vld [vmem:[%s4481 + $0x160] sm:$0xff]
        %v4527 = vld [vmem:[%s4481 + $0x168] sm:$0xff]
        %v4528 = vld [vmem:[%s4481 + $0x170] sm:$0xff]
        %v4529 = vld [vmem:[%s4481 + $0x178] sm:$0xff]
        %v4530 = vld [vmem:[%s4481 + $0x180] sm:$0xff]
        %v4531 = vld [vmem:[%s4481 + $0x188] sm:$0xff]
        %v4532 = vld [vmem:[%s4481 + $0x190] sm:$0xff]
        %v4533 = vld [vmem:[%s4481 + $0x198] sm:$0xff]
        %v4534 = vld [vmem:[%s4481 + $0x1a0] sm:$0xff]
        %v4535 = vld [vmem:[%s4481 + $0x1a8] sm:$0xff]
        %v4536 = vld [vmem:[%s4481 + $0x1b0] sm:$0xff]
        %v4537 = vld [vmem:[%s4481 + $0x1b8] sm:$0xff]
        %v4538 = vld [vmem:[%s4481 + $0x1c0] sm:$0xff]
        %v4539 = vld [vmem:[%s4481 + $0x1c8] sm:$0xff]
        %v4540 = vld [vmem:[%s4481 + $0x1d0] sm:$0xff]
        %v4541 = vld [vmem:[%s4481 + $0x1d8] sm:$0xff]
        %v4542 = vld [vmem:[%s4481 + $0x1e0] sm:$0xff]
        %v4543 = vld [vmem:[%s4481 + $0x1e8] sm:$0xff]
        %v4544 = vld [vmem:[%s4481 + $0x1f0] sm:$0xff]
        %v4545 = vld [vmem:[%s4481 + $0x1f8] sm:$0xff]
        %v4546 = vrot.slane %v945, 6
        %v4547 = vrot.slane %v946, 5
        %v4548 = vsel %vm948, %v4547, %v4546
        %v4549 = vpack.c.b16 %v4548, %v4548
        %v4615 = vunpack.c.l.b16 %v4482
        %v4616 = vunpack.c.h.b16 %v4482
        %v4617 = vunpack.c.l.b16 %v4483
        %v4618 = vunpack.c.h.b16 %v4483
        %v4619 = vunpack.c.l.b16 %v4484
        %v4620 = vunpack.c.h.b16 %v4484
        %v4621 = vunpack.c.l.b16 %v4485
        %v4622 = vunpack.c.h.b16 %v4485
        %v4623 = vunpack.c.l.b16 %v4486
        %v4624 = vunpack.c.h.b16 %v4486
        %v4625 = vunpack.c.l.b16 %v4487
        %v4626 = vunpack.c.h.b16 %v4487
        %v4627 = vunpack.c.l.b16 %v4488
        %v4628 = vunpack.c.h.b16 %v4488
        %v4629 = vunpack.c.l.b16 %v4489
        %v4630 = vunpack.c.h.b16 %v4489
        %v4631 = vunpack.c.l.b16 %v4490
        %v4632 = vunpack.c.h.b16 %v4490
        %v4633 = vunpack.c.l.b16 %v4491
        %v4634 = vunpack.c.h.b16 %v4491
        %v4635 = vunpack.c.l.b16 %v4492
        %v4636 = vunpack.c.h.b16 %v4492
        %v4637 = vunpack.c.l.b16 %v4493
        %v4638 = vunpack.c.h.b16 %v4493
        %v4639 = vunpack.c.l.b16 %v4494
        %v4640 = vunpack.c.h.b16 %v4494
        %v4641 = vunpack.c.l.b16 %v4495
        %v4642 = vunpack.c.h.b16 %v4495
        %v4643 = vunpack.c.l.b16 %v4496
        %v4644 = vunpack.c.h.b16 %v4496
        %v4645 = vunpack.c.l.b16 %v4497
        %v4646 = vunpack.c.h.b16 %v4497
        %v4647 = vunpack.c.l.b16 %v4498
        %v4648 = vunpack.c.h.b16 %v4498
        %v4649 = vunpack.c.l.b16 %v4499
        %v4650 = vunpack.c.h.b16 %v4499
        %v4651 = vunpack.c.l.b16 %v4500
        %v4652 = vunpack.c.h.b16 %v4500
        %v4653 = vunpack.c.l.b16 %v4501
        %v4654 = vunpack.c.h.b16 %v4501
        %v4655 = vunpack.c.l.b16 %v4502
        %v4656 = vunpack.c.h.b16 %v4502
        %v4657 = vunpack.c.l.b16 %v4503
        %v4658 = vunpack.c.h.b16 %v4503
        %v4659 = vunpack.c.l.b16 %v4504
        %v4660 = vunpack.c.h.b16 %v4504
        %v4661 = vunpack.c.l.b16 %v4505
        %v4662 = vunpack.c.h.b16 %v4505
        %v4663 = vunpack.c.l.b16 %v4506
        %v4664 = vunpack.c.h.b16 %v4506
        %v4665 = vunpack.c.l.b16 %v4507
        %v4666 = vunpack.c.h.b16 %v4507
        %v4667 = vunpack.c.l.b16 %v4508
        %v4668 = vunpack.c.h.b16 %v4508
        %v4669 = vunpack.c.l.b16 %v4509
        %v4670 = vunpack.c.h.b16 %v4509
        %v4671 = vunpack.c.l.b16 %v4510
        %v4672 = vunpack.c.h.b16 %v4510
        %v4673 = vunpack.c.l.b16 %v4511
        %v4674 = vunpack.c.h.b16 %v4511
        %v4675 = vunpack.c.l.b16 %v4512
        %v4676 = vunpack.c.h.b16 %v4512
        %v4677 = vunpack.c.l.b16 %v4513
        %v4678 = vunpack.c.h.b16 %v4513
        %v4679 = vunpack.c.l.b16 %v4514
        %v4680 = vunpack.c.h.b16 %v4514
        %v4681 = vunpack.c.l.b16 %v4515
        %v4682 = vunpack.c.h.b16 %v4515
        %v4683 = vunpack.c.l.b16 %v4516
        %v4684 = vunpack.c.h.b16 %v4516
        %v4685 = vunpack.c.l.b16 %v4517
        %v4686 = vunpack.c.h.b16 %v4517
        %v4687 = vunpack.c.l.b16 %v4518
        %v4688 = vunpack.c.h.b16 %v4518
        %v4689 = vunpack.c.l.b16 %v4519
        %v4690 = vunpack.c.h.b16 %v4519
        %v4691 = vunpack.c.l.b16 %v4520
        %v4692 = vunpack.c.h.b16 %v4520
        %v4693 = vunpack.c.l.b16 %v4521
        %v4694 = vunpack.c.h.b16 %v4521
        %v4695 = vunpack.c.l.b16 %v4522
        %v4696 = vunpack.c.h.b16 %v4522
        %v4697 = vunpack.c.l.b16 %v4523
        %v4698 = vunpack.c.h.b16 %v4523
        %v4699 = vunpack.c.l.b16 %v4524
        %v4700 = vunpack.c.h.b16 %v4524
        %v4701 = vunpack.c.l.b16 %v4525
        %v4702 = vunpack.c.h.b16 %v4525
        %v4703 = vunpack.c.l.b16 %v4526
        %v4704 = vunpack.c.h.b16 %v4526
        %v4705 = vunpack.c.l.b16 %v4527
        %v4706 = vunpack.c.h.b16 %v4527
        %v4707 = vunpack.c.l.b16 %v4528
        %v4708 = vunpack.c.h.b16 %v4528
        %v4709 = vunpack.c.l.b16 %v4529
        %v4710 = vunpack.c.h.b16 %v4529
        %v4711 = vunpack.c.l.b16 %v4530
        %v4712 = vunpack.c.h.b16 %v4530
        %v4713 = vunpack.c.l.b16 %v4531
        %v4714 = vunpack.c.h.b16 %v4531
        %v4715 = vunpack.c.l.b16 %v4532
        %v4716 = vunpack.c.h.b16 %v4532
        %v4717 = vunpack.c.l.b16 %v4533
        %v4718 = vunpack.c.h.b16 %v4533
        %v4719 = vunpack.c.l.b16 %v4534
        %v4720 = vunpack.c.h.b16 %v4534
        %v4721 = vunpack.c.l.b16 %v4535
        %v4722 = vunpack.c.h.b16 %v4535
        %v4723 = vunpack.c.l.b16 %v4536
        %v4724 = vunpack.c.h.b16 %v4536
        %v4725 = vunpack.c.l.b16 %v4537
        %v4726 = vunpack.c.h.b16 %v4537
        %v4727 = vunpack.c.l.b16 %v4538
        %v4728 = vunpack.c.h.b16 %v4538
        %v4729 = vunpack.c.l.b16 %v4539
        %v4730 = vunpack.c.h.b16 %v4539
        %v4731 = vunpack.c.l.b16 %v4540
        %v4732 = vunpack.c.h.b16 %v4540
        %v4733 = vunpack.c.l.b16 %v4541
        %v4734 = vunpack.c.h.b16 %v4541
        %v4735 = vunpack.c.l.b16 %v4542
        %v4736 = vunpack.c.h.b16 %v4542
        %v4737 = vunpack.c.l.b16 %v4543
        %v4738 = vunpack.c.h.b16 %v4543
        %v4739 = vunpack.c.l.b16 %v4544
        %v4740 = vunpack.c.h.b16 %v4544
        %v4741 = vunpack.c.l.b16 %v4545
        %v4742 = vunpack.c.h.b16 %v4545
        %v4743 = vpack.c.b16 %v4623, %v4615
        %v4744 = vpack.c.b16 %v4624, %v4616
        %v4745 = vpack.c.b16 %v4625, %v4617
        %v4746 = vpack.c.b16 %v4626, %v4618
        %v4747 = vpack.c.b16 %v4627, %v4619
        %v4748 = vpack.c.b16 %v4628, %v4620
        %v4749 = vpack.c.b16 %v4629, %v4621
        %v4750 = vpack.c.b16 %v4630, %v4622
        %v4751 = vpack.c.b16 %v4639, %v4631
        %v4752 = vpack.c.b16 %v4640, %v4632
        %v4753 = vpack.c.b16 %v4641, %v4633
        %v4754 = vpack.c.b16 %v4642, %v4634
        %v4755 = vpack.c.b16 %v4643, %v4635
        %v4756 = vpack.c.b16 %v4644, %v4636
        %v4757 = vpack.c.b16 %v4645, %v4637
        %v4758 = vpack.c.b16 %v4646, %v4638
        %v4759 = vpack.c.b16 %v4655, %v4647
        %v4760 = vpack.c.b16 %v4656, %v4648
        %v4761 = vpack.c.b16 %v4657, %v4649
        %v4762 = vpack.c.b16 %v4658, %v4650
        %v4763 = vpack.c.b16 %v4659, %v4651
        %v4764 = vpack.c.b16 %v4660, %v4652
        %v4765 = vpack.c.b16 %v4661, %v4653
        %v4766 = vpack.c.b16 %v4662, %v4654
        %v4767 = vpack.c.b16 %v4671, %v4663
        %v4768 = vpack.c.b16 %v4672, %v4664
        %v4769 = vpack.c.b16 %v4673, %v4665
        %v4770 = vpack.c.b16 %v4674, %v4666
        %v4771 = vpack.c.b16 %v4675, %v4667
        %v4772 = vpack.c.b16 %v4676, %v4668
        %v4773 = vpack.c.b16 %v4677, %v4669
        %v4774 = vpack.c.b16 %v4678, %v4670
        %v4775 = vpack.c.b16 %v4687, %v4679
        %v4776 = vpack.c.b16 %v4688, %v4680
        %v4777 = vpack.c.b16 %v4689, %v4681
        %v4778 = vpack.c.b16 %v4690, %v4682
        %v4779 = vpack.c.b16 %v4691, %v4683
        %v4780 = vpack.c.b16 %v4692, %v4684
        %v4781 = vpack.c.b16 %v4693, %v4685
        %v4782 = vpack.c.b16 %v4694, %v4686
        %v4783 = vpack.c.b16 %v4703, %v4695
        %v4784 = vpack.c.b16 %v4704, %v4696
        %v4785 = vpack.c.b16 %v4705, %v4697
        %v4786 = vpack.c.b16 %v4706, %v4698
        %v4787 = vpack.c.b16 %v4707, %v4699
        %v4788 = vpack.c.b16 %v4708, %v4700
        %v4789 = vpack.c.b16 %v4709, %v4701
        %v4790 = vpack.c.b16 %v4710, %v4702
        %v4791 = vpack.c.b16 %v4719, %v4711
        %v4792 = vpack.c.b16 %v4720, %v4712
        %v4793 = vpack.c.b16 %v4721, %v4713
        %v4794 = vpack.c.b16 %v4722, %v4714
        %v4795 = vpack.c.b16 %v4723, %v4715
        %v4796 = vpack.c.b16 %v4724, %v4716
        %v4797 = vpack.c.b16 %v4725, %v4717
        %v4798 = vpack.c.b16 %v4726, %v4718
        %v4799 = vpack.c.b16 %v4735, %v4727
        %v4800 = vpack.c.b16 %v4736, %v4728
        %v4801 = vpack.c.b16 %v4737, %v4729
        %v4802 = vpack.c.b16 %v4738, %v4730
        %v4803 = vpack.c.b16 %v4739, %v4731
        %v4804 = vpack.c.b16 %v4740, %v4732
        %v4805 = vpack.c.b16 %v4741, %v4733
        %v4806 = vpack.c.b16 %v4742, %v4734
        %4871 = vmatprep.subr.bf16.mxu0 %v4744
        %4872 = vmatpush1.bf16.msra.mxu0 %v4743
        %4873 = vmatprep.subr.bf16.mxu0 %v4752
        %4874 = vmatpush1.bf16.msra.mxu0 %v4751
        %4875 = vmatprep.subr.bf16.mxu0 %v4760
        %4876 = vmatpush1.bf16.msra.mxu0 %v4759
        %4877 = vmatprep.subr.bf16.mxu0 %v4768
        %4878 = vmatpush1.bf16.msra.mxu0 %v4767
        %4879 = vmatprep.subr.bf16.mxu0 %v4776
        %4880 = vmatpush1.bf16.msra.mxu0 %v4775
        %4881 = vmatprep.subr.bf16.mxu0 %v4784
        %4882 = vmatpush1.bf16.msra.mxu0 %v4783
        %4883 = vmatprep.subr.bf16.mxu0 %v4792
        %4884 = vmatpush1.bf16.msra.mxu0 %v4791
        %4885 = vmatprep.subr.bf16.mxu0 %v4800
        %4886 = vmatpush1.bf16.msra.mxu0 %v4799
        %4887 = vmatprep.subr.bf16.mxu0 0
        %4888 = vmatpush1.bf16.msra.mxu0 0
        %4889 = vmatprep.subr.bf16.mxu0 0
        %4890 = vmatpush1.bf16.msra.mxu0 0
        %4891 = vmatprep.subr.bf16.mxu0 0
        %4892 = vmatpush1.bf16.msra.mxu0 0
        %4893 = vmatprep.subr.bf16.mxu0 0
        %4894 = vmatpush1.bf16.msra.mxu0 0
        %4895 = vmatprep.subr.bf16.mxu0 0
        %4896 = vmatpush1.bf16.msra.mxu0 0
        %4897 = vmatprep.subr.bf16.mxu0 0
        %4898 = vmatpush1.bf16.msra.mxu0 0
        %4899 = vmatprep.subr.bf16.mxu0 0
        %4900 = vmatpush1.bf16.msra.mxu0 0
        %4901 = vmatprep.subr.bf16.mxu0 0
        %4902 = vmatpush1.bf16.msra.mxu0 0
        %4903 = vmatprep.mubr.bf16.mxu0 0
        %4904 = vmatmul.mubr.bf16.gmra.mrb[0].mxu0 %v4549
        %v4905 = vpop.f32.mrb[0].mxu0
        %v4906 = vadd.f32 0.0, %v4905
        %v4907 = vpop.f32.mrb[0].mxu0
        %v4908 = vadd.f32 0.0, %v4907
        %v4909 = vpop.f32.mrb[0].mxu0
        %v4910 = vpop.f32.mrb[0].mxu0
        %4911 = vdwg.mxu0
        %4912 = vmatprep.subr.bf16.mxu0 %v4746
        %4913 = vmatpush1.bf16.msra.mxu0 %v4745
        %4914 = vmatprep.subr.bf16.mxu0 %v4754
        %4915 = vmatpush1.bf16.msra.mxu0 %v4753
        %4916 = vmatprep.subr.bf16.mxu0 %v4762
        %4917 = vmatpush1.bf16.msra.mxu0 %v4761
        %4918 = vmatprep.subr.bf16.mxu0 %v4770
        %4919 = vmatpush1.bf16.msra.mxu0 %v4769
        %4920 = vmatprep.subr.bf16.mxu0 %v4778
        %4921 = vmatpush1.bf16.msra.mxu0 %v4777
        %4922 = vmatprep.subr.bf16.mxu0 %v4786
        %4923 = vmatpush1.bf16.msra.mxu0 %v4785
        %4924 = vmatprep.subr.bf16.mxu0 %v4794
        %4925 = vmatpush1.bf16.msra.mxu0 %v4793
        %4926 = vmatprep.subr.bf16.mxu0 %v4802
        %4927 = vmatpush1.bf16.msra.mxu0 %v4801
        %4928 = vmatprep.subr.bf16.mxu0 0
        %4929 = vmatpush1.bf16.msra.mxu0 0
        %4930 = vmatprep.subr.bf16.mxu0 0
        %4931 = vmatpush1.bf16.msra.mxu0 0
        %4932 = vmatprep.subr.bf16.mxu0 0
        %4933 = vmatpush1.bf16.msra.mxu0 0
        %4934 = vmatprep.subr.bf16.mxu0 0
        %4935 = vmatpush1.bf16.msra.mxu0 0
        %4936 = vmatprep.subr.bf16.mxu0 0
        %4937 = vmatpush1.bf16.msra.mxu0 0
        %4938 = vmatprep.subr.bf16.mxu0 0
        %4939 = vmatpush1.bf16.msra.mxu0 0
        %4940 = vmatprep.subr.bf16.mxu0 0
        %4941 = vmatpush1.bf16.msra.mxu0 0
        %4942 = vmatprep.subr.bf16.mxu0 0
        %4943 = vmatpush1.bf16.msra.mxu0 0
        %4944 = vmatprep.mubr.bf16.mxu0 0
        %4945 = vmatmul.mubr.bf16.gmra.mrb[0].mxu0 %v4549
        %v4946 = vpop.f32.mrb[0].mxu0
        %v4947 = vadd.f32 0.0, %v4946
        %v4948 = vpop.f32.mrb[0].mxu0
        %v4949 = vadd.f32 0.0, %v4948
        %v4950 = vpop.f32.mrb[0].mxu0
        %v4951 = vpop.f32.mrb[0].mxu0
        %4952 = vdwg.mxu0
        %4953 = vmatprep.subr.bf16.mxu0 %v4748
        %4954 = vmatpush1.bf16.msra.mxu0 %v4747
        %4955 = vmatprep.subr.bf16.mxu0 %v4756
        %4956 = vmatpush1.bf16.msra.mxu0 %v4755
        %4957 = vmatprep.subr.bf16.mxu0 %v4764
        %4958 = vmatpush1.bf16.msra.mxu0 %v4763
        %4959 = vmatprep.subr.bf16.mxu0 %v4772
        %4960 = vmatpush1.bf16.msra.mxu0 %v4771
        %4961 = vmatprep.subr.bf16.mxu0 %v4780
        %4962 = vmatpush1.bf16.msra.mxu0 %v4779
        %4963 = vmatprep.subr.bf16.mxu0 %v4788
        %4964 = vmatpush1.bf16.msra.mxu0 %v4787
        %4965 = vmatprep.subr.bf16.mxu0 %v4796
        %4966 = vmatpush1.bf16.msra.mxu0 %v4795
        %4967 = vmatprep.subr.bf16.mxu0 %v4804
        %4968 = vmatpush1.bf16.msra.mxu0 %v4803
        %4969 = vmatprep.subr.bf16.mxu0 0
        %4970 = vmatpush1.bf16.msra.mxu0 0
        %4971 = vmatprep.subr.bf16.mxu0 0
        %4972 = vmatpush1.bf16.msra.mxu0 0
        %4973 = vmatprep.subr.bf16.mxu0 0
        %4974 = vmatpush1.bf16.msra.mxu0 0
        %4975 = vmatprep.subr.bf16.mxu0 0
        %4976 = vmatpush1.bf16.msra.mxu0 0
        %4977 = vmatprep.subr.bf16.mxu0 0
        %4978 = vmatpush1.bf16.msra.mxu0 0
        %4979 = vmatprep.subr.bf16.mxu0 0
        %4980 = vmatpush1.bf16.msra.mxu0 0
        %4981 = vmatprep.subr.bf16.mxu0 0
        %4982 = vmatpush1.bf16.msra.mxu0 0
        %4983 = vmatprep.subr.bf16.mxu0 0
        %4984 = vmatpush1.bf16.msra.mxu0 0
        %4985 = vmatprep.mubr.bf16.mxu0 0
        %4986 = vmatmul.mubr.bf16.gmra.mrb[0].mxu0 %v4549
        %v4987 = vpop.f32.mrb[0].mxu0
        %v4988 = vadd.f32 0.0, %v4987
        %v4989 = vpop.f32.mrb[0].mxu0
        %v4990 = vadd.f32 0.0, %v4989
        %v4991 = vpop.f32.mrb[0].mxu0
        %v4992 = vpop.f32.mrb[0].mxu0
        %4993 = vdwg.mxu0
        %4994 = vmatprep.subr.bf16.mxu0 %v4750
        %4995 = vmatpush1.bf16.msra.mxu0 %v4749
        %4996 = vmatprep.subr.bf16.mxu0 %v4758
        %4997 = vmatpush1.bf16.msra.mxu0 %v4757
        %4998 = vmatprep.subr.bf16.mxu0 %v4766
        %4999 = vmatpush1.bf16.msra.mxu0 %v4765
        %5000 = vmatprep.subr.bf16.mxu0 %v4774
        %5001 = vmatpush1.bf16.msra.mxu0 %v4773
        %5002 = vmatprep.subr.bf16.mxu0 %v4782
        %5003 = vmatpush1.bf16.msra.mxu0 %v4781
        %5004 = vmatprep.subr.bf16.mxu0 %v4790
        %5005 = vmatpush1.bf16.msra.mxu0 %v4789
        %5006 = vmatprep.subr.bf16.mxu0 %v4798
        %5007 = vmatpush1.bf16.msra.mxu0 %v4797
        %5008 = vmatprep.subr.bf16.mxu0 %v4806
        %5009 = vmatpush1.bf16.msra.mxu0 %v4805
        %5010 = vmatprep.subr.bf16.mxu0 0
        %5011 = vmatpush1.bf16.msra.mxu0 0
        %5012 = vmatprep.subr.bf16.mxu0 0
        %5013 = vmatpush1.bf16.msra.mxu0 0
        %5014 = vmatprep.subr.bf16.mxu0 0
        %5015 = vmatpush1.bf16.msra.mxu0 0
        %5016 = vmatprep.subr.bf16.mxu0 0
        %5017 = vmatpush1.bf16.msra.mxu0 0
        %5018 = vmatprep.subr.bf16.mxu0 0
        %5019 = vmatpush1.bf16.msra.mxu0 0
        %5020 = vmatprep.subr.bf16.mxu0 0
        %5021 = vmatpush1.bf16.msra.mxu0 0
        %5022 = vmatprep.subr.bf16.mxu0 0
        %5023 = vmatpush1.bf16.msra.mxu0 0
        %5024 = vmatprep.subr.bf16.mxu0 0
        %5025 = vmatpush1.bf16.msra.mxu0 0
        %5026 = vmatprep.mubr.bf16.mxu0 0
        %5027 = vmatmul.mubr.bf16.gmra.mrb[0].mxu0 %v4549
        %v5028 = vpop.f32.mrb[0].mxu0
        %v5029 = vadd.f32 0.0, %v5028
        %v5030 = vpop.f32.mrb[0].mxu0
        %v5031 = vadd.f32 0.0, %v5030
        %v5032 = vpop.f32.mrb[0].mxu0
        %v5033 = vpop.f32.mrb[0].mxu0
        %5034 = vdwg.mxu0
        %v5043 = vcombine.low %v4906, %v4908
        %v5044 = vcombine.low %v4947, %v4949
        %v5046 = vunpack.c.l.s4 1983009808
        %v5047 = vunpack.c.0.s8 %v5046
        %v5048 = vlaneseq
        %v5049 = vshrl.u32 %v5048, 7
        %v5050 = vsub.s32 %v5047, %v5049
        %v5051 = vrot.slane %v5043, %v5050
        %v5053 = vunpack.c.l.s4 1983009808
        %v5054 = vunpack.c.0.s8 %v5053
        %v5055 = vlaneseq
        %v5056 = vshrl.u32 %v5055, 7
        %v5057 = vsub.s32 %v5054, %v5056
        %v5058 = vrot.slane %v5044, %v5057
        %v5059 = vcombine.low %v5051, %v5058
        %v5060 = vcombine.low %v4988, %v4990
        %v5061 = vcombine.low %v5029, %v5031
        %v5063 = vunpack.c.l.s4 1983009808
        %v5064 = vunpack.c.0.s8 %v5063
        %v5065 = vlaneseq
        %v5066 = vshrl.u32 %v5065, 7
        %v5067 = vsub.s32 %v5064, %v5066
        %v5068 = vrot.slane %v5060, %v5067
        %v5070 = vunpack.c.l.s4 1983009808
        %v5071 = vunpack.c.0.s8 %v5070
        %v5072 = vlaneseq
        %v5073 = vshrl.u32 %v5072, 7
        %v5074 = vsub.s32 %v5071, %v5073
        %v5075 = vrot.slane %v5061, %v5074
        %v5076 = vcombine.low %v5068, %v5075
        %v5079 = vadd.f32 %v4479, %v5059
        %v5080 = vadd.f32 %v4480, %v5076
        %s5081 = scalar_lea.vmem %s344, 3584 [#allocation10]
        %v5082 = vld [vmem:[%s5081] sm:$0xff]
        %v5083 = vld [vmem:[%s5081 + $0x8] sm:$0xff]
        %v5084 = vld [vmem:[%s5081 + $0x10] sm:$0xff]
        %v5085 = vld [vmem:[%s5081 + $0x18] sm:$0xff]
        %v5086 = vld [vmem:[%s5081 + $0x20] sm:$0xff]
        %v5087 = vld [vmem:[%s5081 + $0x28] sm:$0xff]
        %v5088 = vld [vmem:[%s5081 + $0x30] sm:$0xff]
        %v5089 = vld [vmem:[%s5081 + $0x38] sm:$0xff]
        %v5090 = vld [vmem:[%s5081 + $0x40] sm:$0xff]
        %v5091 = vld [vmem:[%s5081 + $0x48] sm:$0xff]
        %v5092 = vld [vmem:[%s5081 + $0x50] sm:$0xff]
        %v5093 = vld [vmem:[%s5081 + $0x58] sm:$0xff]
        %v5094 = vld [vmem:[%s5081 + $0x60] sm:$0xff]
        %v5095 = vld [vmem:[%s5081 + $0x68] sm:$0xff]
        %v5096 = vld [vmem:[%s5081 + $0x70] sm:$0xff]
        %v5097 = vld [vmem:[%s5081 + $0x78] sm:$0xff]
        %v5098 = vld [vmem:[%s5081 + $0x80] sm:$0xff]
        %v5099 = vld [vmem:[%s5081 + $0x88] sm:$0xff]
        %v5100 = vld [vmem:[%s5081 + $0x90] sm:$0xff]
        %v5101 = vld [vmem:[%s5081 + $0x98] sm:$0xff]
        %v5102 = vld [vmem:[%s5081 + $0xa0] sm:$0xff]
        %v5103 = vld [vmem:[%s5081 + $0xa8] sm:$0xff]
        %v5104 = vld [vmem:[%s5081 + $0xb0] sm:$0xff]
        %v5105 = vld [vmem:[%s5081 + $0xb8] sm:$0xff]
        %v5106 = vld [vmem:[%s5081 + $0xc0] sm:$0xff]
        %v5107 = vld [vmem:[%s5081 + $0xc8] sm:$0xff]
        %v5108 = vld [vmem:[%s5081 + $0xd0] sm:$0xff]
        %v5109 = vld [vmem:[%s5081 + $0xd8] sm:$0xff]
        %v5110 = vld [vmem:[%s5081 + $0xe0] sm:$0xff]
        %v5111 = vld [vmem:[%s5081 + $0xe8] sm:$0xff]
        %v5112 = vld [vmem:[%s5081 + $0xf0] sm:$0xff]
        %v5113 = vld [vmem:[%s5081 + $0xf8] sm:$0xff]
        %v5114 = vld [vmem:[%s5081 + $0x100] sm:$0xff]
        %v5115 = vld [vmem:[%s5081 + $0x108] sm:$0xff]
        %v5116 = vld [vmem:[%s5081 + $0x110] sm:$0xff]
        %v5117 = vld [vmem:[%s5081 + $0x118] sm:$0xff]
        %v5118 = vld [vmem:[%s5081 + $0x120] sm:$0xff]
        %v5119 = vld [vmem:[%s5081 + $0x128] sm:$0xff]
        %v5120 = vld [vmem:[%s5081 + $0x130] sm:$0xff]
        %v5121 = vld [vmem:[%s5081 + $0x138] sm:$0xff]
        %v5122 = vld [vmem:[%s5081 + $0x140] sm:$0xff]
        %v5123 = vld [vmem:[%s5081 + $0x148] sm:$0xff]
        %v5124 = vld [vmem:[%s5081 + $0x150] sm:$0xff]
        %v5125 = vld [vmem:[%s5081 + $0x158] sm:$0xff]
        %v5126 = vld [vmem:[%s5081 + $0x160] sm:$0xff]
        %v5127 = vld [vmem:[%s5081 + $0x168] sm:$0xff]
        %v5128 = vld [vmem:[%s5081 + $0x170] sm:$0xff]
        %v5129 = vld [vmem:[%s5081 + $0x178] sm:$0xff]
        %v5130 = vld [vmem:[%s5081 + $0x180] sm:$0xff]
        %v5131 = vld [vmem:[%s5081 + $0x188] sm:$0xff]
        %v5132 = vld [vmem:[%s5081 + $0x190] sm:$0xff]
        %v5133 = vld [vmem:[%s5081 + $0x198] sm:$0xff]
        %v5134 = vld [vmem:[%s5081 + $0x1a0] sm:$0xff]
        %v5135 = vld [vmem:[%s5081 + $0x1a8] sm:$0xff]
        %v5136 = vld [vmem:[%s5081 + $0x1b0] sm:$0xff]
        %v5137 = vld [vmem:[%s5081 + $0x1b8] sm:$0xff]
        %v5138 = vld [vmem:[%s5081 + $0x1c0] sm:$0xff]
        %v5139 = vld [vmem:[%s5081 + $0x1c8] sm:$0xff]
        %v5140 = vld [vmem:[%s5081 + $0x1d0] sm:$0xff]
        %v5141 = vld [vmem:[%s5081 + $0x1d8] sm:$0xff]
        %v5142 = vld [vmem:[%s5081 + $0x1e0] sm:$0xff]
        %v5143 = vld [vmem:[%s5081 + $0x1e8] sm:$0xff]
        %v5144 = vld [vmem:[%s5081 + $0x1f0] sm:$0xff]
        %v5145 = vld [vmem:[%s5081 + $0x1f8] sm:$0xff]
        %v5146 = vrot.slane %v945, 7
        %v5147 = vrot.slane %v946, 6
        %v5148 = vsel %vm948, %v5147, %v5146
        %v5149 = vpack.c.b16 %v5148, %v5148
        %v5215 = vunpack.c.l.b16 %v5082
        %v5216 = vunpack.c.h.b16 %v5082
        %v5217 = vunpack.c.l.b16 %v5083
        %v5218 = vunpack.c.h.b16 %v5083
        %v5219 = vunpack.c.l.b16 %v5084
        %v5220 = vunpack.c.h.b16 %v5084
        %v5221 = vunpack.c.l.b16 %v5085
        %v5222 = vunpack.c.h.b16 %v5085
        %v5223 = vunpack.c.l.b16 %v5086
        %v5224 = vunpack.c.h.b16 %v5086
        %v5225 = vunpack.c.l.b16 %v5087
        %v5226 = vunpack.c.h.b16 %v5087
        %v5227 = vunpack.c.l.b16 %v5088
        %v5228 = vunpack.c.h.b16 %v5088
        %v5229 = vunpack.c.l.b16 %v5089
        %v5230 = vunpack.c.h.b16 %v5089
        %v5231 = vunpack.c.l.b16 %v5090
        %v5232 = vunpack.c.h.b16 %v5090
        %v5233 = vunpack.c.l.b16 %v5091
        %v5234 = vunpack.c.h.b16 %v5091
        %v5235 = vunpack.c.l.b16 %v5092
        %v5236 = vunpack.c.h.b16 %v5092
        %v5237 = vunpack.c.l.b16 %v5093
        %v5238 = vunpack.c.h.b16 %v5093
        %v5239 = vunpack.c.l.b16 %v5094
        %v5240 = vunpack.c.h.b16 %v5094
        %v5241 = vunpack.c.l.b16 %v5095
        %v5242 = vunpack.c.h.b16 %v5095
        %v5243 = vunpack.c.l.b16 %v5096
        %v5244 = vunpack.c.h.b16 %v5096
        %v5245 = vunpack.c.l.b16 %v5097
        %v5246 = vunpack.c.h.b16 %v5097
        %v5247 = vunpack.c.l.b16 %v5098
        %v5248 = vunpack.c.h.b16 %v5098
        %v5249 = vunpack.c.l.b16 %v5099
        %v5250 = vunpack.c.h.b16 %v5099
        %v5251 = vunpack.c.l.b16 %v5100
        %v5252 = vunpack.c.h.b16 %v5100
        %v5253 = vunpack.c.l.b16 %v5101
        %v5254 = vunpack.c.h.b16 %v5101
        %v5255 = vunpack.c.l.b16 %v5102
        %v5256 = vunpack.c.h.b16 %v5102
        %v5257 = vunpack.c.l.b16 %v5103
        %v5258 = vunpack.c.h.b16 %v5103
        %v5259 = vunpack.c.l.b16 %v5104
        %v5260 = vunpack.c.h.b16 %v5104
        %v5261 = vunpack.c.l.b16 %v5105
        %v5262 = vunpack.c.h.b16 %v5105
        %v5263 = vunpack.c.l.b16 %v5106
        %v5264 = vunpack.c.h.b16 %v5106
        %v5265 = vunpack.c.l.b16 %v5107
        %v5266 = vunpack.c.h.b16 %v5107
        %v5267 = vunpack.c.l.b16 %v5108
        %v5268 = vunpack.c.h.b16 %v5108
        %v5269 = vunpack.c.l.b16 %v5109
        %v5270 = vunpack.c.h.b16 %v5109
        %v5271 = vunpack.c.l.b16 %v5110
        %v5272 = vunpack.c.h.b16 %v5110
        %v5273 = vunpack.c.l.b16 %v5111
        %v5274 = vunpack.c.h.b16 %v5111
        %v5275 = vunpack.c.l.b16 %v5112
        %v5276 = vunpack.c.h.b16 %v5112
        %v5277 = vunpack.c.l.b16 %v5113
        %v5278 = vunpack.c.h.b16 %v5113
        %v5279 = vunpack.c.l.b16 %v5114
        %v5280 = vunpack.c.h.b16 %v5114
        %v5281 = vunpack.c.l.b16 %v5115
        %v5282 = vunpack.c.h.b16 %v5115
        %v5283 = vunpack.c.l.b16 %v5116
        %v5284 = vunpack.c.h.b16 %v5116
        %v5285 = vunpack.c.l.b16 %v5117
        %v5286 = vunpack.c.h.b16 %v5117
        %v5287 = vunpack.c.l.b16 %v5118
        %v5288 = vunpack.c.h.b16 %v5118
        %v5289 = vunpack.c.l.b16 %v5119
        %v5290 = vunpack.c.h.b16 %v5119
        %v5291 = vunpack.c.l.b16 %v5120
        %v5292 = vunpack.c.h.b16 %v5120
        %v5293 = vunpack.c.l.b16 %v5121
        %v5294 = vunpack.c.h.b16 %v5121
        %v5295 = vunpack.c.l.b16 %v5122
        %v5296 = vunpack.c.h.b16 %v5122
        %v5297 = vunpack.c.l.b16 %v5123
        %v5298 = vunpack.c.h.b16 %v5123
        %v5299 = vunpack.c.l.b16 %v5124
        %v5300 = vunpack.c.h.b16 %v5124
        %v5301 = vunpack.c.l.b16 %v5125
        %v5302 = vunpack.c.h.b16 %v5125
        %v5303 = vunpack.c.l.b16 %v5126
        %v5304 = vunpack.c.h.b16 %v5126
        %v5305 = vunpack.c.l.b16 %v5127
        %v5306 = vunpack.c.h.b16 %v5127
        %v5307 = vunpack.c.l.b16 %v5128
        %v5308 = vunpack.c.h.b16 %v5128
        %v5309 = vunpack.c.l.b16 %v5129
        %v5310 = vunpack.c.h.b16 %v5129
        %v5311 = vunpack.c.l.b16 %v5130
        %v5312 = vunpack.c.h.b16 %v5130
        %v5313 = vunpack.c.l.b16 %v5131
        %v5314 = vunpack.c.h.b16 %v5131
        %v5315 = vunpack.c.l.b16 %v5132
        %v5316 = vunpack.c.h.b16 %v5132
        %v5317 = vunpack.c.l.b16 %v5133
        %v5318 = vunpack.c.h.b16 %v5133
        %v5319 = vunpack.c.l.b16 %v5134
        %v5320 = vunpack.c.h.b16 %v5134
        %v5321 = vunpack.c.l.b16 %v5135
        %v5322 = vunpack.c.h.b16 %v5135
        %v5323 = vunpack.c.l.b16 %v5136
        %v5324 = vunpack.c.h.b16 %v5136
        %v5325 = vunpack.c.l.b16 %v5137
        %v5326 = vunpack.c.h.b16 %v5137
        %v5327 = vunpack.c.l.b16 %v5138
        %v5328 = vunpack.c.h.b16 %v5138
        %v5329 = vunpack.c.l.b16 %v5139
        %v5330 = vunpack.c.h.b16 %v5139
        %v5331 = vunpack.c.l.b16 %v5140
        %v5332 = vunpack.c.h.b16 %v5140
        %v5333 = vunpack.c.l.b16 %v5141
        %v5334 = vunpack.c.h.b16 %v5141
        %v5335 = vunpack.c.l.b16 %v5142
        %v5336 = vunpack.c.h.b16 %v5142
        %v5337 = vunpack.c.l.b16 %v5143
        %v5338 = vunpack.c.h.b16 %v5143
        %v5339 = vunpack.c.l.b16 %v5144
        %v5340 = vunpack.c.h.b16 %v5144
        %v5341 = vunpack.c.l.b16 %v5145
        %v5342 = vunpack.c.h.b16 %v5145
        %v5343 = vpack.c.b16 %v5223, %v5215
        %v5344 = vpack.c.b16 %v5224, %v5216
        %v5345 = vpack.c.b16 %v5225, %v5217
        %v5346 = vpack.c.b16 %v5226, %v5218
        %v5347 = vpack.c.b16 %v5227, %v5219
        %v5348 = vpack.c.b16 %v5228, %v5220
        %v5349 = vpack.c.b16 %v5229, %v5221
        %v5350 = vpack.c.b16 %v5230, %v5222
        %v5351 = vpack.c.b16 %v5239, %v5231
        %v5352 = vpack.c.b16 %v5240, %v5232
        %v5353 = vpack.c.b16 %v5241, %v5233
        %v5354 = vpack.c.b16 %v5242, %v5234
        %v5355 = vpack.c.b16 %v5243, %v5235
        %v5356 = vpack.c.b16 %v5244, %v5236
        %v5357 = vpack.c.b16 %v5245, %v5237
        %v5358 = vpack.c.b16 %v5246, %v5238
        %v5359 = vpack.c.b16 %v5255, %v5247
        %v5360 = vpack.c.b16 %v5256, %v5248
        %v5361 = vpack.c.b16 %v5257, %v5249
        %v5362 = vpack.c.b16 %v5258, %v5250
        %v5363 = vpack.c.b16 %v5259, %v5251
        %v5364 = vpack.c.b16 %v5260, %v5252
        %v5365 = vpack.c.b16 %v5261, %v5253
        %v5366 = vpack.c.b16 %v5262, %v5254
        %v5367 = vpack.c.b16 %v5271, %v5263
        %v5368 = vpack.c.b16 %v5272, %v5264
        %v5369 = vpack.c.b16 %v5273, %v5265
        %v5370 = vpack.c.b16 %v5274, %v5266
        %v5371 = vpack.c.b16 %v5275, %v5267
        %v5372 = vpack.c.b16 %v5276, %v5268
        %v5373 = vpack.c.b16 %v5277, %v5269
        %v5374 = vpack.c.b16 %v5278, %v5270
        %v5375 = vpack.c.b16 %v5287, %v5279
        %v5376 = vpack.c.b16 %v5288, %v5280
        %v5377 = vpack.c.b16 %v5289, %v5281
        %v5378 = vpack.c.b16 %v5290, %v5282
        %v5379 = vpack.c.b16 %v5291, %v5283
        %v5380 = vpack.c.b16 %v5292, %v5284
        %v5381 = vpack.c.b16 %v5293, %v5285
        %v5382 = vpack.c.b16 %v5294, %v5286
        %v5383 = vpack.c.b16 %v5303, %v5295
        %v5384 = vpack.c.b16 %v5304, %v5296
        %v5385 = vpack.c.b16 %v5305, %v5297
        %v5386 = vpack.c.b16 %v5306, %v5298
        %v5387 = vpack.c.b16 %v5307, %v5299
        %v5388 = vpack.c.b16 %v5308, %v5300
        %v5389 = vpack.c.b16 %v5309, %v5301
        %v5390 = vpack.c.b16 %v5310, %v5302
        %v5391 = vpack.c.b16 %v5319, %v5311
        %v5392 = vpack.c.b16 %v5320, %v5312
        %v5393 = vpack.c.b16 %v5321, %v5313
        %v5394 = vpack.c.b16 %v5322, %v5314
        %v5395 = vpack.c.b16 %v5323, %v5315
        %v5396 = vpack.c.b16 %v5324, %v5316
        %v5397 = vpack.c.b16 %v5325, %v5317
        %v5398 = vpack.c.b16 %v5326, %v5318
        %v5399 = vpack.c.b16 %v5335, %v5327
        %v5400 = vpack.c.b16 %v5336, %v5328
        %v5401 = vpack.c.b16 %v5337, %v5329
        %v5402 = vpack.c.b16 %v5338, %v5330
        %v5403 = vpack.c.b16 %v5339, %v5331
        %v5404 = vpack.c.b16 %v5340, %v5332
        %v5405 = vpack.c.b16 %v5341, %v5333
        %v5406 = vpack.c.b16 %v5342, %v5334
        %5471 = vmatprep.subr.bf16.mxu0 %v5344
        %5472 = vmatpush1.bf16.msra.mxu0 %v5343
        %5473 = vmatprep.subr.bf16.mxu0 %v5352
        %5474 = vmatpush1.bf16.msra.mxu0 %v5351
        %5475 = vmatprep.subr.bf16.mxu0 %v5360
        %5476 = vmatpush1.bf16.msra.mxu0 %v5359
        %5477 = vmatprep.subr.bf16.mxu0 %v5368
        %5478 = vmatpush1.bf16.msra.mxu0 %v5367
        %5479 = vmatprep.subr.bf16.mxu0 %v5376
        %5480 = vmatpush1.bf16.msra.mxu0 %v5375
        %5481 = vmatprep.subr.bf16.mxu0 %v5384
        %5482 = vmatpush1.bf16.msra.mxu0 %v5383
        %5483 = vmatprep.subr.bf16.mxu0 %v5392
        %5484 = vmatpush1.bf16.msra.mxu0 %v5391
        %5485 = vmatprep.subr.bf16.mxu0 %v5400
        %5486 = vmatpush1.bf16.msra.mxu0 %v5399
        %5487 = vmatprep.subr.bf16.mxu0 0
        %5488 = vmatpush1.bf16.msra.mxu0 0
        %5489 = vmatprep.subr.bf16.mxu0 0
        %5490 = vmatpush1.bf16.msra.mxu0 0
        %5491 = vmatprep.subr.bf16.mxu0 0
        %5492 = vmatpush1.bf16.msra.mxu0 0
        %5493 = vmatprep.subr.bf16.mxu0 0
        %5494 = vmatpush1.bf16.msra.mxu0 0
        %5495 = vmatprep.subr.bf16.mxu0 0
        %5496 = vmatpush1.bf16.msra.mxu0 0
        %5497 = vmatprep.subr.bf16.mxu0 0
        %5498 = vmatpush1.bf16.msra.mxu0 0
        %5499 = vmatprep.subr.bf16.mxu0 0
        %5500 = vmatpush1.bf16.msra.mxu0 0
        %5501 = vmatprep.subr.bf16.mxu0 0
        %5502 = vmatpush1.bf16.msra.mxu0 0
        %5503 = vmatprep.mubr.bf16.mxu0 0
        %5504 = vmatmul.mubr.bf16.gmra.mrb[0].mxu0 %v5149
        %v5505 = vpop.f32.mrb[0].mxu0
        %v5506 = vadd.f32 0.0, %v5505
        %v5507 = vpop.f32.mrb[0].mxu0
        %v5508 = vadd.f32 0.0, %v5507
        %v5509 = vpop.f32.mrb[0].mxu0
        %v5510 = vpop.f32.mrb[0].mxu0
        %5511 = vdwg.mxu0
        %5512 = vmatprep.subr.bf16.mxu0 %v5346
        %5513 = vmatpush1.bf16.msra.mxu0 %v5345
        %5514 = vmatprep.subr.bf16.mxu0 %v5354
        %5515 = vmatpush1.bf16.msra.mxu0 %v5353
        %5516 = vmatprep.subr.bf16.mxu0 %v5362
        %5517 = vmatpush1.bf16.msra.mxu0 %v5361
        %5518 = vmatprep.subr.bf16.mxu0 %v5370
        %5519 = vmatpush1.bf16.msra.mxu0 %v5369
        %5520 = vmatprep.subr.bf16.mxu0 %v5378
        %5521 = vmatpush1.bf16.msra.mxu0 %v5377
        %5522 = vmatprep.subr.bf16.mxu0 %v5386
        %5523 = vmatpush1.bf16.msra.mxu0 %v5385
        %5524 = vmatprep.subr.bf16.mxu0 %v5394
        %5525 = vmatpush1.bf16.msra.mxu0 %v5393
        %5526 = vmatprep.subr.bf16.mxu0 %v5402
        %5527 = vmatpush1.bf16.msra.mxu0 %v5401
        %5528 = vmatprep.subr.bf16.mxu0 0
        %5529 = vmatpush1.bf16.msra.mxu0 0
        %5530 = vmatprep.subr.bf16.mxu0 0
        %5531 = vmatpush1.bf16.msra.mxu0 0
        %5532 = vmatprep.subr.bf16.mxu0 0
        %5533 = vmatpush1.bf16.msra.mxu0 0
        %5534 = vmatprep.subr.bf16.mxu0 0
        %5535 = vmatpush1.bf16.msra.mxu0 0
        %5536 = vmatprep.subr.bf16.mxu0 0
        %5537 = vmatpush1.bf16.msra.mxu0 0
        %5538 = vmatprep.subr.bf16.mxu0 0
        %5539 = vmatpush1.bf16.msra.mxu0 0
        %5540 = vmatprep.subr.bf16.mxu0 0
        %5541 = vmatpush1.bf16.msra.mxu0 0
        %5542 = vmatprep.subr.bf16.mxu0 0
        %5543 = vmatpush1.bf16.msra.mxu0 0
        %5544 = vmatprep.mubr.bf16.mxu0 0
        %5545 = vmatmul.mubr.bf16.gmra.mrb[0].mxu0 %v5149
        %v5546 = vpop.f32.mrb[0].mxu0
        %v5547 = vadd.f32 0.0, %v5546
        %v5548 = vpop.f32.mrb[0].mxu0
        %v5549 = vadd.f32 0.0, %v5548
        %v5550 = vpop.f32.mrb[0].mxu0
        %v5551 = vpop.f32.mrb[0].mxu0
        %5552 = vdwg.mxu0
        %5553 = vmatprep.subr.bf16.mxu0 %v5348
        %5554 = vmatpush1.bf16.msra.mxu0 %v5347
        %5555 = vmatprep.subr.bf16.mxu0 %v5356
        %5556 = vmatpush1.bf16.msra.mxu0 %v5355
        %5557 = vmatprep.subr.bf16.mxu0 %v5364
        %5558 = vmatpush1.bf16.msra.mxu0 %v5363
        %5559 = vmatprep.subr.bf16.mxu0 %v5372
        %5560 = vmatpush1.bf16.msra.mxu0 %v5371
        %5561 = vmatprep.subr.bf16.mxu0 %v5380
        %5562 = vmatpush1.bf16.msra.mxu0 %v5379
        %5563 = vmatprep.subr.bf16.mxu0 %v5388
        %5564 = vmatpush1.bf16.msra.mxu0 %v5387
        %5565 = vmatprep.subr.bf16.mxu0 %v5396
        %5566 = vmatpush1.bf16.msra.mxu0 %v5395
        %5567 = vmatprep.subr.bf16.mxu0 %v5404
        %5568 = vmatpush1.bf16.msra.mxu0 %v5403
        %5569 = vmatprep.subr.bf16.mxu0 0
        %5570 = vmatpush1.bf16.msra.mxu0 0
        %5571 = vmatprep.subr.bf16.mxu0 0
        %5572 = vmatpush1.bf16.msra.mxu0 0
        %5573 = vmatprep.subr.bf16.mxu0 0
        %5574 = vmatpush1.bf16.msra.mxu0 0
        %5575 = vmatprep.subr.bf16.mxu0 0
        %5576 = vmatpush1.bf16.msra.mxu0 0
        %5577 = vmatprep.subr.bf16.mxu0 0
        %5578 = vmatpush1.bf16.msra.mxu0 0
        %5579 = vmatprep.subr.bf16.mxu0 0
        %5580 = vmatpush1.bf16.msra.mxu0 0
        %5581 = vmatprep.subr.bf16.mxu0 0
        %5582 = vmatpush1.bf16.msra.mxu0 0
        %5583 = vmatprep.subr.bf16.mxu0 0
        %5584 = vmatpush1.bf16.msra.mxu0 0
        %5585 = vmatprep.mubr.bf16.mxu0 0
        %5586 = vmatmul.mubr.bf16.gmra.mrb[0].mxu0 %v5149
        %v5587 = vpop.f32.mrb[0].mxu0
        %v5588 = vadd.f32 0.0, %v5587
        %v5589 = vpop.f32.mrb[0].mxu0
        %v5590 = vadd.f32 0.0, %v5589
        %v5591 = vpop.f32.mrb[0].mxu0
        %v5592 = vpop.f32.mrb[0].mxu0
        %5593 = vdwg.mxu0
        %5594 = vmatprep.subr.bf16.mxu0 %v5350
        %5595 = vmatpush1.bf16.msra.mxu0 %v5349
        %5596 = vmatprep.subr.bf16.mxu0 %v5358
        %5597 = vmatpush1.bf16.msra.mxu0 %v5357
        %5598 = vmatprep.subr.bf16.mxu0 %v5366
        %5599 = vmatpush1.bf16.msra.mxu0 %v5365
        %5600 = vmatprep.subr.bf16.mxu0 %v5374
        %5601 = vmatpush1.bf16.msra.mxu0 %v5373
        %5602 = vmatprep.subr.bf16.mxu0 %v5382
        %5603 = vmatpush1.bf16.msra.mxu0 %v5381
        %5604 = vmatprep.subr.bf16.mxu0 %v5390
        %5605 = vmatpush1.bf16.msra.mxu0 %v5389
        %5606 = vmatprep.subr.bf16.mxu0 %v5398
        %5607 = vmatpush1.bf16.msra.mxu0 %v5397
        %5608 = vmatprep.subr.bf16.mxu0 %v5406
        %5609 = vmatpush1.bf16.msra.mxu0 %v5405
        %5610 = vmatprep.subr.bf16.mxu0 0
        %5611 = vmatpush1.bf16.msra.mxu0 0
        %5612 = vmatprep.subr.bf16.mxu0 0
        %5613 = vmatpush1.bf16.msra.mxu0 0
        %5614 = vmatprep.subr.bf16.mxu0 0
        %5615 = vmatpush1.bf16.msra.mxu0 0
        %5616 = vmatprep.subr.bf16.mxu0 0
        %5617 = vmatpush1.bf16.msra.mxu0 0
        %5618 = vmatprep.subr.bf16.mxu0 0
        %5619 = vmatpush1.bf16.msra.mxu0 0
        %5620 = vmatprep.subr.bf16.mxu0 0
        %5621 = vmatpush1.bf16.msra.mxu0 0
        %5622 = vmatprep.subr.bf16.mxu0 0
        %5623 = vmatpush1.bf16.msra.mxu0 0
        %5624 = vmatprep.subr.bf16.mxu0 0
        %5625 = vmatpush1.bf16.msra.mxu0 0
        %5626 = vmatprep.mubr.bf16.mxu0 0
        %5627 = vmatmul.mubr.bf16.gmra.mrb[0].mxu0 %v5149
        %v5628 = vpop.f32.mrb[0].mxu0
        %v5629 = vadd.f32 0.0, %v5628
        %v5630 = vpop.f32.mrb[0].mxu0
        %v5631 = vadd.f32 0.0, %v5630
        %v5632 = vpop.f32.mrb[0].mxu0
        %v5633 = vpop.f32.mrb[0].mxu0
        %5634 = vdwg.mxu0
        %v5643 = vcombine.low %v5506, %v5508
        %v5644 = vcombine.low %v5547, %v5549
        %v5646 = vunpack.c.l.s4 1983009808
        %v5647 = vunpack.c.0.s8 %v5646
        %v5648 = vlaneseq
        %v5649 = vshrl.u32 %v5648, 7
        %v5650 = vsub.s32 %v5647, %v5649
        %v5651 = vrot.slane %v5643, %v5650
        %v5653 = vunpack.c.l.s4 1983009808
        %v5654 = vunpack.c.0.s8 %v5653
        %v5655 = vlaneseq
        %v5656 = vshrl.u32 %v5655, 7
        %v5657 = vsub.s32 %v5654, %v5656
        %v5658 = vrot.slane %v5644, %v5657
        %v5659 = vcombine.low %v5651, %v5658
        %v5660 = vcombine.low %v5588, %v5590
        %v5661 = vcombine.low %v5629, %v5631
        %v5663 = vunpack.c.l.s4 1983009808
        %v5664 = vunpack.c.0.s8 %v5663
        %v5665 = vlaneseq
        %v5666 = vshrl.u32 %v5665, 7
        %v5667 = vsub.s32 %v5664, %v5666
        %v5668 = vrot.slane %v5660, %v5667
        %v5670 = vunpack.c.l.s4 1983009808
        %v5671 = vunpack.c.0.s8 %v5670
        %v5672 = vlaneseq
        %v5673 = vshrl.u32 %v5672, 7
        %v5674 = vsub.s32 %v5671, %v5673
        %v5675 = vrot.slane %v5661, %v5674
        %v5676 = vcombine.low %v5668, %v5675
        %v5679 = vadd.f32 %v5079, %v5659
        %v5680 = vadd.f32 %v5080, %v5676
        %5681 = vst [vmem:[#allocation3] sm:$0xff] %v5679
        %5682 = vst [vmem:[#allocation3 + $0x8] sm:$0xff] %v5680
        %p5683 = scmp.eq.s32.totalorder %s26, 1
        // Predicated region
        $region81: #{tpu_custom_call.1} parent=51 // pred_check
          %p5684 = pneg %p5683
        $region82: #{tpu_custom_call.1} parent=51 // pred_check_branch
          %5686 = sbr.rel (%p5684) target = $region84
        $region83: #{tpu_custom_call.1} parent=51 // pred_region
          %v5687 = vld [vmem:[#allocation3] sm:$0xff]
          %v5688 = vld [vmem:[#allocation3 + $0x8] sm:$0xff]
          %v5689 = vld [vmem:[#allocation12] sm:$0xff]
          %v5691 = vlaneseq
          %v5692 = vshrl.u32 %v5691, 7
          %v5693 = vsub.s32 0, %v5692
          %v5694 = vrot.slane %v5689, %v5693
          %v5695 = vlaneseq
          %v5696 = vshrl.u32 %v5695, 7
          %v5697 = vsub.s32 1, %v5696
          %v5698 = vrot.slane %v5689, %v5697
          %v5699 = vlaneseq
          %v5700 = vshrl.u32 %v5699, 7
          %v5701 = vsub.s32 2, %v5700
          %v5702 = vrot.slane %v5689, %v5701
          %v5703 = vlaneseq
          %v5704 = vshrl.u32 %v5703, 7
          %v5705 = vsub.s32 3, %v5704
          %v5706 = vrot.slane %v5689, %v5705
          %v5707 = vlaneseq
          %v5708 = vshrl.u32 %v5707, 7
          %v5709 = vsub.s32 4, %v5708
          %v5710 = vrot.slane %v5689, %v5709
          %v5711 = vlaneseq
          %v5712 = vshrl.u32 %v5711, 7
          %v5713 = vsub.s32 5, %v5712
          %v5714 = vrot.slane %v5689, %v5713
          %v5715 = vlaneseq
          %v5716 = vshrl.u32 %v5715, 7
          %v5717 = vsub.s32 6, %v5716
          %v5718 = vrot.slane %v5689, %v5717
          %v5719 = vlaneseq
          %v5720 = vshrl.u32 %v5719, 7
          %v5721 = vsub.s32 7, %v5720
          %v5722 = vrot.slane %v5689, %v5721
          %v5723 = vcombine.low %v5694, %v5698
          %v5724 = vcombine.low %v5702, %v5706
          %v5726 = vunpack.c.l.s4 1983009808
          %v5727 = vunpack.c.0.s8 %v5726
          %v5728 = vlaneseq
          %v5729 = vshrl.u32 %v5728, 7
          %v5730 = vsub.s32 %v5727, %v5729
          %v5731 = vrot.slane %v5723, %v5730
          %v5733 = vunpack.c.l.s4 1983009808
          %v5734 = vunpack.c.0.s8 %v5733
          %v5735 = vlaneseq
          %v5736 = vshrl.u32 %v5735, 7
          %v5737 = vsub.s32 %v5734, %v5736
          %v5738 = vrot.slane %v5724, %v5737
          %v5739 = vcombine.low %v5731, %v5738
          %v5740 = vcombine.low %v5710, %v5714
          %v5741 = vcombine.low %v5718, %v5722
          %v5743 = vunpack.c.l.s4 1983009808
          %v5744 = vunpack.c.0.s8 %v5743
          %v5745 = vlaneseq
          %v5746 = vshrl.u32 %v5745, 7
          %v5747 = vsub.s32 %v5744, %v5746
          %v5748 = vrot.slane %v5740, %v5747
          %v5750 = vunpack.c.l.s4 1983009808
          %v5751 = vunpack.c.0.s8 %v5750
          %v5752 = vlaneseq
          %v5753 = vshrl.u32 %v5752, 7
          %v5754 = vsub.s32 %v5751, %v5753
          %v5755 = vrot.slane %v5741, %v5754
          %v5756 = vcombine.low %v5748, %v5755
          %v5759 = vadd.f32 %v5687, %v5739
          %v5760 = vadd.f32 %v5688, %v5756
          %v5763 = vcombine.high %v5759, %v5759
          %v5765 = vunpack.c.l.s4 1983009808
          %v5766 = vunpack.c.0.s8 %v5765
          %v5767 = vlaneseq
          %v5768 = vshrl.u32 %v5767, 7
          %v5769 = vsub.s32 %v5766, %v5768
          %v5770 = vrot.slane %v5759, %v5769
          %v5772 = vunpack.c.l.s4 1983009808
          %v5773 = vunpack.c.0.s8 %v5772
          %v5774 = vlaneseq
          %v5775 = vshrl.u32 %v5774, 7
          %v5776 = vsub.s32 %v5773, %v5775
          %v5777 = vrot.slane %v5763, %v5776
          %v5778 = vcombine.high %v5770, %v5770
          %v5779 = vcombine.high %v5777, %v5777
          %v5780 = vcombine.high %v5760, %v5760
          %v5782 = vunpack.c.l.s4 1983009808
          %v5783 = vunpack.c.0.s8 %v5782
          %v5784 = vlaneseq
          %v5785 = vshrl.u32 %v5784, 7
          %v5786 = vsub.s32 %v5783, %v5785
          %v5787 = vrot.slane %v5760, %v5786
          %v5789 = vunpack.c.l.s4 1983009808
          %v5790 = vunpack.c.0.s8 %v5789
          %v5791 = vlaneseq
          %v5792 = vshrl.u32 %v5791, 7
          %v5793 = vsub.s32 %v5790, %v5792
          %v5794 = vrot.slane %v5780, %v5793
          %v5795 = vcombine.high %v5787, %v5787
          %v5796 = vcombine.high %v5794, %v5794
          %v5805 = vpack.c.bf16 %v5770, %v5770
          %v5806 = vpack.c.bf16 %v5778, %v5778
          %v5807 = vpack.c.bf16 %v5777, %v5777
          %v5808 = vpack.c.bf16 %v5779, %v5779
          %v5809 = vpack.c.bf16 %v5787, %v5787
          %v5810 = vpack.c.bf16 %v5795, %v5795
          %v5811 = vpack.c.bf16 %v5794, %v5794
          %v5812 = vpack.c.bf16 %v5796, %v5796
          %v5813 = vld [vmem:[%s6] sm:$0xf]
          %v5814 = vld [vmem:[%s6 + $0x4] sm:$0xf]
          %v5815 = vld [vmem:[%s6 + $0x8] sm:$0xf]
          %v5816 = vld [vmem:[%s6 + $0xc] sm:$0xf]
          %v5817 = vld [vmem:[%s6 + $0x10] sm:$0xf]
          %v5818 = vld [vmem:[%s6 + $0x14] sm:$0xf]
          %v5819 = vld [vmem:[%s6 + $0x18] sm:$0xf]
          %v5820 = vld [vmem:[%s6 + $0x1c] sm:$0xf]
          %v5821 = vld [vmem:[%s6 + $0x20] sm:$0xf]
          %v5822 = vld [vmem:[%s6 + $0x24] sm:$0xf]
          %v5823 = vld [vmem:[%s6 + $0x28] sm:$0xf]
          %v5824 = vld [vmem:[%s6 + $0x2c] sm:$0xf]
          %v5825 = vld [vmem:[%s6 + $0x30] sm:$0xf]
          %v5826 = vld [vmem:[%s6 + $0x34] sm:$0xf]
          %v5827 = vld [vmem:[%s6 + $0x38] sm:$0xf]
          %v5828 = vld [vmem:[%s6 + $0x3c] sm:$0xf]
          %v5829 = vld [vmem:[%s6 + $0x40] sm:$0xf]
          %v5830 = vld [vmem:[%s6 + $0x44] sm:$0xf]
          %v5831 = vld [vmem:[%s6 + $0x48] sm:$0xf]
          %v5832 = vld [vmem:[%s6 + $0x4c] sm:$0xf]
          %v5833 = vld [vmem:[%s6 + $0x50] sm:$0xf]
          %v5834 = vld [vmem:[%s6 + $0x54] sm:$0xf]
          %v5835 = vld [vmem:[%s6 + $0x58] sm:$0xf]
          %v5836 = vld [vmem:[%s6 + $0x5c] sm:$0xf]
          %v5837 = vld [vmem:[%s6 + $0x60] sm:$0xf]
          %v5838 = vld [vmem:[%s6 + $0x64] sm:$0xf]
          %v5839 = vld [vmem:[%s6 + $0x68] sm:$0xf]
          %v5840 = vld [vmem:[%s6 + $0x6c] sm:$0xf]
          %v5841 = vld [vmem:[%s6 + $0x70] sm:$0xf]
          %v5842 = vld [vmem:[%s6 + $0x74] sm:$0xf]
          %v5843 = vld [vmem:[%s6 + $0x78] sm:$0xf]
          %v5844 = vld [vmem:[%s6 + $0x7c] sm:$0xf]
          %v5845 = vld [vmem:[%s6 + $0x80] sm:$0xf]
          %v5846 = vld [vmem:[%s6 + $0x84] sm:$0xf]
          %v5847 = vld [vmem:[%s6 + $0x88] sm:$0xf]
          %v5848 = vld [vmem:[%s6 + $0x8c] sm:$0xf]
          %v5849 = vld [vmem:[%s6 + $0x90] sm:$0xf]
          %v5850 = vld [vmem:[%s6 + $0x94] sm:$0xf]
          %v5851 = vld [vmem:[%s6 + $0x98] sm:$0xf]
          %v5852 = vld [vmem:[%s6 + $0x9c] sm:$0xf]
          %v5853 = vld [vmem:[%s6 + $0xa0] sm:$0xf]
          %v5854 = vld [vmem:[%s6 + $0xa4] sm:$0xf]
          %v5855 = vld [vmem:[%s6 + $0xa8] sm:$0xf]
          %v5856 = vld [vmem:[%s6 + $0xac] sm:$0xf]
          %v5857 = vld [vmem:[%s6 + $0xb0] sm:$0xf]
          %v5858 = vld [vmem:[%s6 + $0xb4] sm:$0xf]
          %v5859 = vld [vmem:[%s6 + $0xb8] sm:$0xf]
          %v5860 = vld [vmem:[%s6 + $0xbc] sm:$0xf]
          %v5861 = vld [vmem:[%s6 + $0xc0] sm:$0xf]
          %v5862 = vld [vmem:[%s6 + $0xc4] sm:$0xf]
          %v5863 = vld [vmem:[%s6 + $0xc8] sm:$0xf]
          %v5864 = vld [vmem:[%s6 + $0xcc] sm:$0xf]
          %v5865 = vld [vmem:[%s6 + $0xd0] sm:$0xf]
          %v5866 = vld [vmem:[%s6 + $0xd4] sm:$0xf]
          %v5867 = vld [vmem:[%s6 + $0xd8] sm:$0xf]
          %v5868 = vld [vmem:[%s6 + $0xdc] sm:$0xf]
          %v5869 = vld [vmem:[%s6 + $0xe0] sm:$0xf]
          %v5870 = vld [vmem:[%s6 + $0xe4] sm:$0xf]
          %v5871 = vld [vmem:[%s6 + $0xe8] sm:$0xf]
          %v5872 = vld [vmem:[%s6 + $0xec] sm:$0xf]
          %v5873 = vld [vmem:[%s6 + $0xf0] sm:$0xf]
          %v5874 = vld [vmem:[%s6 + $0xf4] sm:$0xf]
          %v5875 = vld [vmem:[%s6 + $0xf8] sm:$0xf]
          %v5876 = vld [vmem:[%s6 + $0xfc] sm:$0xf]
          %v5877 = vld [vmem:[%s6 + $0x100] sm:$0xf]
          %v5878 = vld [vmem:[%s6 + $0x104] sm:$0xf]
          %v5879 = vld [vmem:[%s6 + $0x108] sm:$0xf]
          %v5880 = vld [vmem:[%s6 + $0x10c] sm:$0xf]
          %v5881 = vld [vmem:[%s6 + $0x110] sm:$0xf]
          %v5882 = vld [vmem:[%s6 + $0x114] sm:$0xf]
          %v5883 = vld [vmem:[%s6 + $0x118] sm:$0xf]
          %v5884 = vld [vmem:[%s6 + $0x11c] sm:$0xf]
          %v5885 = vld [vmem:[%s6 + $0x120] sm:$0xf]
          %v5886 = vld [vmem:[%s6 + $0x124] sm:$0xf]
          %v5887 = vld [vmem:[%s6 + $0x128] sm:$0xf]
          %v5888 = vld [vmem:[%s6 + $0x12c] sm:$0xf]
          %v5889 = vld [vmem:[%s6 + $0x130] sm:$0xf]
          %v5890 = vld [vmem:[%s6 + $0x134] sm:$0xf]
          %v5891 = vld [vmem:[%s6 + $0x138] sm:$0xf]
          %v5892 = vld [vmem:[%s6 + $0x13c] sm:$0xf]
          %v5893 = vld [vmem:[%s6 + $0x140] sm:$0xf]
          %v5894 = vld [vmem:[%s6 + $0x144] sm:$0xf]
          %v5895 = vld [vmem:[%s6 + $0x148] sm:$0xf]
          %v5896 = vld [vmem:[%s6 + $0x14c] sm:$0xf]
          %v5897 = vld [vmem:[%s6 + $0x150] sm:$0xf]
          %v5898 = vld [vmem:[%s6 + $0x154] sm:$0xf]
          %v5899 = vld [vmem:[%s6 + $0x158] sm:$0xf]
          %v5900 = vld [vmem:[%s6 + $0x15c] sm:$0xf]
          %v5901 = vld [vmem:[%s6 + $0x160] sm:$0xf]
          %v5902 = vld [vmem:[%s6 + $0x164] sm:$0xf]
          %v5903 = vld [vmem:[%s6 + $0x168] sm:$0xf]
          %v5904 = vld [vmem:[%s6 + $0x16c] sm:$0xf]
          %v5905 = vld [vmem:[%s6 + $0x170] sm:$0xf]
          %v5906 = vld [vmem:[%s6 + $0x174] sm:$0xf]
          %v5907 = vld [vmem:[%s6 + $0x178] sm:$0xf]
          %v5908 = vld [vmem:[%s6 + $0x17c] sm:$0xf]
          %v5909 = vld [vmem:[%s6 + $0x180] sm:$0xf]
          %v5910 = vld [vmem:[%s6 + $0x184] sm:$0xf]
          %v5911 = vld [vmem:[%s6 + $0x188] sm:$0xf]
          %v5912 = vld [vmem:[%s6 + $0x18c] sm:$0xf]
          %v5913 = vld [vmem:[%s6 + $0x190] sm:$0xf]
          %v5914 = vld [vmem:[%s6 + $0x194] sm:$0xf]
          %v5915 = vld [vmem:[%s6 + $0x198] sm:$0xf]
          %v5916 = vld [vmem:[%s6 + $0x19c] sm:$0xf]
          %v5917 = vld [vmem:[%s6 + $0x1a0] sm:$0xf]
          %v5918 = vld [vmem:[%s6 + $0x1a4] sm:$0xf]
          %v5919 = vld [vmem:[%s6 + $0x1a8] sm:$0xf]
          %v5920 = vld [vmem:[%s6 + $0x1ac] sm:$0xf]
          %v5921 = vld [vmem:[%s6 + $0x1b0] sm:$0xf]
          %v5922 = vld [vmem:[%s6 + $0x1b4] sm:$0xf]
          %v5923 = vld [vmem:[%s6 + $0x1b8] sm:$0xf]
          %v5924 = vld [vmem:[%s6 + $0x1bc] sm:$0xf]
          %v5925 = vld [vmem:[%s6 + $0x1c0] sm:$0xf]
          %v5926 = vld [vmem:[%s6 + $0x1c4] sm:$0xf]
          %v5927 = vld [vmem:[%s6 + $0x1c8] sm:$0xf]
          %v5928 = vld [vmem:[%s6 + $0x1cc] sm:$0xf]
          %v5929 = vld [vmem:[%s6 + $0x1d0] sm:$0xf]
          %v5930 = vld [vmem:[%s6 + $0x1d4] sm:$0xf]
          %v5931 = vld [vmem:[%s6 + $0x1d8] sm:$0xf]
          %v5932 = vld [vmem:[%s6 + $0x1dc] sm:$0xf]
          %v5933 = vld [vmem:[%s6 + $0x1e0] sm:$0xf]
          %v5934 = vld [vmem:[%s6 + $0x1e4] sm:$0xf]
          %v5935 = vld [vmem:[%s6 + $0x1e8] sm:$0xf]
          %v5936 = vld [vmem:[%s6 + $0x1ec] sm:$0xf]
          %v5937 = vld [vmem:[%s6 + $0x1f0] sm:$0xf]
          %v5938 = vld [vmem:[%s6 + $0x1f4] sm:$0xf]
          %v5939 = vld [vmem:[%s6 + $0x1f8] sm:$0xf]
          %v5940 = vld [vmem:[%s6 + $0x1fc] sm:$0xf]
          %v5941 = vld [vmem:[#allocation13] sm:$0x1]
          %v5943 = vlaneseq
          %v5944 = vshrl.u32 %v5943, 7
          %v5945 = vsub.s32 0, %v5944
          %v5946 = vrot.slane %v5941, %v5945
          %v6076 = vunpack.c.l.b16 %v5813
          %v6077 = vunpack.c.l.b16 %v5814
          %v6078 = vunpack.c.l.b16 %v5815
          %v6079 = vunpack.c.l.b16 %v5816
          %v6080 = vunpack.c.l.b16 %v5817
          %v6081 = vunpack.c.l.b16 %v5818
          %v6082 = vunpack.c.l.b16 %v5819
          %v6083 = vunpack.c.l.b16 %v5820
          %v6084 = vunpack.c.l.b16 %v5821
          %v6085 = vunpack.c.l.b16 %v5822
          %v6086 = vunpack.c.l.b16 %v5823
          %v6087 = vunpack.c.l.b16 %v5824
          %v6088 = vunpack.c.l.b16 %v5825
          %v6089 = vunpack.c.l.b16 %v5826
          %v6090 = vunpack.c.l.b16 %v5827
          %v6091 = vunpack.c.l.b16 %v5828
          %v6092 = vunpack.c.l.b16 %v5829
          %v6093 = vunpack.c.l.b16 %v5830
          %v6094 = vunpack.c.l.b16 %v5831
          %v6095 = vunpack.c.l.b16 %v5832
          %v6096 = vunpack.c.l.b16 %v5833
          %v6097 = vunpack.c.l.b16 %v5834
          %v6098 = vunpack.c.l.b16 %v5835
          %v6099 = vunpack.c.l.b16 %v5836
          %v6100 = vunpack.c.l.b16 %v5837
          %v6101 = vunpack.c.l.b16 %v5838
          %v6102 = vunpack.c.l.b16 %v5839
          %v6103 = vunpack.c.l.b16 %v5840
          %v6104 = vunpack.c.l.b16 %v5841
          %v6105 = vunpack.c.l.b16 %v5842
          %v6106 = vunpack.c.l.b16 %v5843
          %v6107 = vunpack.c.l.b16 %v5844
          %v6108 = vunpack.c.l.b16 %v5845
          %v6109 = vunpack.c.l.b16 %v5846
          %v6110 = vunpack.c.l.b16 %v5847
          %v6111 = vunpack.c.l.b16 %v5848
          %v6112 = vunpack.c.l.b16 %v5849
          %v6113 = vunpack.c.l.b16 %v5850
          %v6114 = vunpack.c.l.b16 %v5851
          %v6115 = vunpack.c.l.b16 %v5852
          %v6116 = vunpack.c.l.b16 %v5853
          %v6117 = vunpack.c.l.b16 %v5854
          %v6118 = vunpack.c.l.b16 %v5855
          %v6119 = vunpack.c.l.b16 %v5856
          %v6120 = vunpack.c.l.b16 %v5857
          %v6121 = vunpack.c.l.b16 %v5858
          %v6122 = vunpack.c.l.b16 %v5859
          %v6123 = vunpack.c.l.b16 %v5860
          %v6124 = vunpack.c.l.b16 %v5861
          %v6125 = vunpack.c.l.b16 %v5862
          %v6126 = vunpack.c.l.b16 %v5863
          %v6127 = vunpack.c.l.b16 %v5864
          %v6128 = vunpack.c.l.b16 %v5865
          %v6129 = vunpack.c.l.b16 %v5866
          %v6130 = vunpack.c.l.b16 %v5867
          %v6131 = vunpack.c.l.b16 %v5868
          %v6132 = vunpack.c.l.b16 %v5869
          %v6133 = vunpack.c.l.b16 %v5870
          %v6134 = vunpack.c.l.b16 %v5871
          %v6135 = vunpack.c.l.b16 %v5872
          %v6136 = vunpack.c.l.b16 %v5873
          %v6137 = vunpack.c.l.b16 %v5874
          %v6138 = vunpack.c.l.b16 %v5875
          %v6139 = vunpack.c.l.b16 %v5876
          %v6140 = vunpack.c.l.b16 %v5877
          %v6141 = vunpack.c.l.b16 %v5878
          %v6142 = vunpack.c.l.b16 %v5879
          %v6143 = vunpack.c.l.b16 %v5880
          %v6144 = vunpack.c.l.b16 %v5881
          %v6145 = vunpack.c.l.b16 %v5882
          %v6146 = vunpack.c.l.b16 %v5883
          %v6147 = vunpack.c.l.b16 %v5884
          %v6148 = vunpack.c.l.b16 %v5885
          %v6149 = vunpack.c.l.b16 %v5886
          %v6150 = vunpack.c.l.b16 %v5887
          %v6151 = vunpack.c.l.b16 %v5888
          %v6152 = vunpack.c.l.b16 %v5889
          %v6153 = vunpack.c.l.b16 %v5890
          %v6154 = vunpack.c.l.b16 %v5891
          %v6155 = vunpack.c.l.b16 %v5892
          %v6156 = vunpack.c.l.b16 %v5893
          %v6157 = vunpack.c.l.b16 %v5894
          %v6158 = vunpack.c.l.b16 %v5895
          %v6159 = vunpack.c.l.b16 %v5896
          %v6160 = vunpack.c.l.b16 %v5897
          %v6161 = vunpack.c.l.b16 %v5898
          %v6162 = vunpack.c.l.b16 %v5899
          %v6163 = vunpack.c.l.b16 %v5900
          %v6164 = vunpack.c.l.b16 %v5901
          %v6165 = vunpack.c.l.b16 %v5902
          %v6166 = vunpack.c.l.b16 %v5903
          %v6167 = vunpack.c.l.b16 %v5904
          %v6168 = vunpack.c.l.b16 %v5905
          %v6169 = vunpack.c.l.b16 %v5906
          %v6170 = vunpack.c.l.b16 %v5907
          %v6171 = vunpack.c.l.b16 %v5908
          %v6172 = vunpack.c.l.b16 %v5909
          %v6173 = vunpack.c.l.b16 %v5910
          %v6174 = vunpack.c.l.b16 %v5911
          %v6175 = vunpack.c.l.b16 %v5912
          %v6176 = vunpack.c.l.b16 %v5913
          %v6177 = vunpack.c.l.b16 %v5914
          %v6178 = vunpack.c.l.b16 %v5915
          %v6179 = vunpack.c.l.b16 %v5916
          %v6180 = vunpack.c.l.b16 %v5917
          %v6181 = vunpack.c.l.b16 %v5918
          %v6182 = vunpack.c.l.b16 %v5919
          %v6183 = vunpack.c.l.b16 %v5920
          %v6184 = vunpack.c.l.b16 %v5921
          %v6185 = vunpack.c.l.b16 %v5922
          %v6186 = vunpack.c.l.b16 %v5923
          %v6187 = vunpack.c.l.b16 %v5924
          %v6188 = vunpack.c.l.b16 %v5925
          %v6189 = vunpack.c.l.b16 %v5926
          %v6190 = vunpack.c.l.b16 %v5927
          %v6191 = vunpack.c.l.b16 %v5928
          %v6192 = vunpack.c.l.b16 %v5929
          %v6193 = vunpack.c.l.b16 %v5930
          %v6194 = vunpack.c.l.b16 %v5931
          %v6195 = vunpack.c.l.b16 %v5932
          %v6196 = vunpack.c.l.b16 %v5933
          %v6197 = vunpack.c.l.b16 %v5934
          %v6198 = vunpack.c.l.b16 %v5935
          %v6199 = vunpack.c.l.b16 %v5936
          %v6200 = vunpack.c.l.b16 %v5937
          %v6201 = vunpack.c.l.b16 %v5938
          %v6202 = vunpack.c.l.b16 %v5939
          %v6203 = vunpack.c.l.b16 %v5940
          %v6204 = vpack.c.b16 %v6077, %v6076
          %v6205 = vpack.c.b16 %v6079, %v6078
          %v6206 = vpack.c.b16 %v6081, %v6080
          %v6207 = vpack.c.b16 %v6083, %v6082
          %v6208 = vpack.c.b16 %v6085, %v6084
          %v6209 = vpack.c.b16 %v6087, %v6086
          %v6210 = vpack.c.b16 %v6089, %v6088
          %v6211 = vpack.c.b16 %v6091, %v6090
          %v6212 = vpack.c.b16 %v6093, %v6092
          %v6213 = vpack.c.b16 %v6095, %v6094
          %v6214 = vpack.c.b16 %v6097, %v6096
          %v6215 = vpack.c.b16 %v6099, %v6098
          %v6216 = vpack.c.b16 %v6101, %v6100
          %v6217 = vpack.c.b16 %v6103, %v6102
          %v6218 = vpack.c.b16 %v6105, %v6104
          %v6219 = vpack.c.b16 %v6107, %v6106
          %v6220 = vpack.c.b16 %v6109, %v6108
          %v6221 = vpack.c.b16 %v6111, %v6110
          %v6222 = vpack.c.b16 %v6113, %v6112
          %v6223 = vpack.c.b16 %v6115, %v6114
          %v6224 = vpack.c.b16 %v6117, %v6116
          %v6225 = vpack.c.b16 %v6119, %v6118
          %v6226 = vpack.c.b16 %v6121, %v6120
          %v6227 = vpack.c.b16 %v6123, %v6122
          %v6228 = vpack.c.b16 %v6125, %v6124
          %v6229 = vpack.c.b16 %v6127, %v6126
          %v6230 = vpack.c.b16 %v6129, %v6128
          %v6231 = vpack.c.b16 %v6131, %v6130
          %v6232 = vpack.c.b16 %v6133, %v6132
          %v6233 = vpack.c.b16 %v6135, %v6134
          %v6234 = vpack.c.b16 %v6137, %v6136
          %v6235 = vpack.c.b16 %v6139, %v6138
          %v6236 = vpack.c.b16 %v6141, %v6140
          %v6237 = vpack.c.b16 %v6143, %v6142
          %v6238 = vpack.c.b16 %v6145, %v6144
          %v6239 = vpack.c.b16 %v6147, %v6146
          %v6240 = vpack.c.b16 %v6149, %v6148
          %v6241 = vpack.c.b16 %v6151, %v6150
          %v6242 = vpack.c.b16 %v6153, %v6152
          %v6243 = vpack.c.b16 %v6155, %v6154
          %v6244 = vpack.c.b16 %v6157, %v6156
          %v6245 = vpack.c.b16 %v6159, %v6158
          %v6246 = vpack.c.b16 %v6161, %v6160
          %v6247 = vpack.c.b16 %v6163, %v6162
          %v6248 = vpack.c.b16 %v6165, %v6164
          %v6249 = vpack.c.b16 %v6167, %v6166
          %v6250 = vpack.c.b16 %v6169, %v6168
          %v6251 = vpack.c.b16 %v6171, %v6170
          %v6252 = vpack.c.b16 %v6173, %v6172
          %v6253 = vpack.c.b16 %v6175, %v6174
          %v6254 = vpack.c.b16 %v6177, %v6176
          %v6255 = vpack.c.b16 %v6179, %v6178
          %v6256 = vpack.c.b16 %v6181, %v6180
          %v6257 = vpack.c.b16 %v6183, %v6182
          %v6258 = vpack.c.b16 %v6185, %v6184
          %v6259 = vpack.c.b16 %v6187, %v6186
          %v6260 = vpack.c.b16 %v6189, %v6188
          %v6261 = vpack.c.b16 %v6191, %v6190
          %v6262 = vpack.c.b16 %v6193, %v6192
          %v6263 = vpack.c.b16 %v6195, %v6194
          %v6264 = vpack.c.b16 %v6197, %v6196
          %v6265 = vpack.c.b16 %v6199, %v6198
          %v6266 = vpack.c.b16 %v6201, %v6200
          %v6267 = vpack.c.b16 %v6203, %v6202
          %6332 = vmatprep.subr.bf16.mxu0 0
          %6333 = vmatpush1.bf16.msra.mxu0 %v6204
          %6334 = vmatprep.subr.bf16.mxu0 0
          %6335 = vmatpush1.bf16.msra.mxu0 %v6205
          %6336 = vmatprep.subr.bf16.mxu0 0
          %6337 = vmatpush1.bf16.msra.mxu0 %v6206
          %6338 = vmatprep.subr.bf16.mxu0 0
          %6339 = vmatpush1.bf16.msra.mxu0 %v6207
          %6340 = vmatprep.subr.bf16.mxu0 0
          %6341 = vmatpush1.bf16.msra.mxu0 %v6208
          %6342 = vmatprep.subr.bf16.mxu0 0
          %6343 = vmatpush1.bf16.msra.mxu0 %v6209
          %6344 = vmatprep.subr.bf16.mxu0 0
          %6345 = vmatpush1.bf16.msra.mxu0 %v6210
          %6346 = vmatprep.subr.bf16.mxu0 0
          %6347 = vmatpush1.bf16.msra.mxu0 %v6211
          %6348 = vmatprep.subr.bf16.mxu0 0
          %6349 = vmatpush1.bf16.msra.mxu0 %v6212
          %6350 = vmatprep.subr.bf16.mxu0 0
          %6351 = vmatpush1.bf16.msra.mxu0 %v6213
          %6352 = vmatprep.subr.bf16.mxu0 0
          %6353 = vmatpush1.bf16.msra.mxu0 %v6214
          %6354 = vmatprep.subr.bf16.mxu0 0
          %6355 = vmatpush1.bf16.msra.mxu0 %v6215
          %6356 = vmatprep.subr.bf16.mxu0 0
          %6357 = vmatpush1.bf16.msra.mxu0 %v6216
          %6358 = vmatprep.subr.bf16.mxu0 0
          %6359 = vmatpush1.bf16.msra.mxu0 %v6217
          %6360 = vmatprep.subr.bf16.mxu0 0
          %6361 = vmatpush1.bf16.msra.mxu0 %v6218
          %6362 = vmatprep.subr.bf16.mxu0 0
          %6363 = vmatpush1.bf16.msra.mxu0 %v6219
          %6364 = vmatprep.mubr.bf16.mxu0 %v5806
          %6365 = vmatmul.mubr.bf16.gmra.mrb[0].mxu0 %v5805
          %v6366 = vpop.f32.mrb[0].mxu0
          %v6367 = vadd.f32 %v5946, %v6366
          %v6368 = vpop.f32.mrb[0].mxu0
          %v6369 = vpop.f32.mrb[0].mxu0
          %v6370 = vpop.f32.mrb[0].mxu0
          %6371 = vdwg.mxu0
          %6372 = vmatprep.subr.bf16.mxu0 0
          %6373 = vmatpush1.bf16.msra.mxu0 %v6220
          %6374 = vmatprep.subr.bf16.mxu0 0
          %6375 = vmatpush1.bf16.msra.mxu0 %v6221
          %6376 = vmatprep.subr.bf16.mxu0 0
          %6377 = vmatpush1.bf16.msra.mxu0 %v6222
          %6378 = vmatprep.subr.bf16.mxu0 0
          %6379 = vmatpush1.bf16.msra.mxu0 %v6223
          %6380 = vmatprep.subr.bf16.mxu0 0
          %6381 = vmatpush1.bf16.msra.mxu0 %v6224
          %6382 = vmatprep.subr.bf16.mxu0 0
          %6383 = vmatpush1.bf16.msra.mxu0 %v6225
          %6384 = vmatprep.subr.bf16.mxu0 0
          %6385 = vmatpush1.bf16.msra.mxu0 %v6226
          %6386 = vmatprep.subr.bf16.mxu0 0
          %6387 = vmatpush1.bf16.msra.mxu0 %v6227
          %6388 = vmatprep.subr.bf16.mxu0 0
          %6389 = vmatpush1.bf16.msra.mxu0 %v6228
          %6390 = vmatprep.subr.bf16.mxu0 0
          %6391 = vmatpush1.bf16.msra.mxu0 %v6229
          %6392 = vmatprep.subr.bf16.mxu0 0
          %6393 = vmatpush1.bf16.msra.mxu0 %v6230
          %6394 = vmatprep.subr.bf16.mxu0 0
          %6395 = vmatpush1.bf16.msra.mxu0 %v6231
          %6396 = vmatprep.subr.bf16.mxu0 0
          %6397 = vmatpush1.bf16.msra.mxu0 %v6232
          %6398 = vmatprep.subr.bf16.mxu0 0
          %6399 = vmatpush1.bf16.msra.mxu0 %v6233
          %6400 = vmatprep.subr.bf16.mxu0 0
          %6401 = vmatpush1.bf16.msra.mxu0 %v6234
          %6402 = vmatprep.subr.bf16.mxu0 0
          %6403 = vmatpush1.bf16.msra.mxu0 %v6235
          %6404 = vmatprep.mubr.bf16.mxu0 %v5808
          %6405 = vmatmul.mubr.bf16.gmra.mrb[0].mxu0 %v5807
          %v6406 = vpop.f32.mrb[0].mxu0
          %v6407 = vadd.f32 %v6367, %v6406
          %v6408 = vpop.f32.mrb[0].mxu0
          %v6409 = vpop.f32.mrb[0].mxu0
          %v6410 = vpop.f32.mrb[0].mxu0
          %6411 = vdwg.mxu0
          %6412 = vmatprep.subr.bf16.mxu0 0
          %6413 = vmatpush1.bf16.msra.mxu0 %v6236
          %6414 = vmatprep.subr.bf16.mxu0 0
          %6415 = vmatpush1.bf16.msra.mxu0 %v6237
          %6416 = vmatprep.subr.bf16.mxu0 0
          %6417 = vmatpush1.bf16.msra.mxu0 %v6238
          %6418 = vmatprep.subr.bf16.mxu0 0
          %6419 = vmatpush1.bf16.msra.mxu0 %v6239
          %6420 = vmatprep.subr.bf16.mxu0 0
          %6421 = vmatpush1.bf16.msra.mxu0 %v6240
          %6422 = vmatprep.subr.bf16.mxu0 0
          %6423 = vmatpush1.bf16.msra.mxu0 %v6241
          %6424 = vmatprep.subr.bf16.mxu0 0
          %6425 = vmatpush1.bf16.msra.mxu0 %v6242
          %6426 = vmatprep.subr.bf16.mxu0 0
          %6427 = vmatpush1.bf16.msra.mxu0 %v6243
          %6428 = vmatprep.subr.bf16.mxu0 0
          %6429 = vmatpush1.bf16.msra.mxu0 %v6244
          %6430 = vmatprep.subr.bf16.mxu0 0
          %6431 = vmatpush1.bf16.msra.mxu0 %v6245
          %6432 = vmatprep.subr.bf16.mxu0 0
          %6433 = vmatpush1.bf16.msra.mxu0 %v6246
          %6434 = vmatprep.subr.bf16.mxu0 0
          %6435 = vmatpush1.bf16.msra.mxu0 %v6247
          %6436 = vmatprep.subr.bf16.mxu0 0
          %6437 = vmatpush1.bf16.msra.mxu0 %v6248
          %6438 = vmatprep.subr.bf16.mxu0 0
          %6439 = vmatpush1.bf16.msra.mxu0 %v6249
          %6440 = vmatprep.subr.bf16.mxu0 0
          %6441 = vmatpush1.bf16.msra.mxu0 %v6250
          %6442 = vmatprep.subr.bf16.mxu0 0
          %6443 = vmatpush1.bf16.msra.mxu0 %v6251
          %6444 = vmatprep.mubr.bf16.mxu0 %v5810
          %6445 = vmatmul.mubr.bf16.gmra.mrb[0].mxu0 %v5809
          %v6446 = vpop.f32.mrb[0].mxu0
          %v6447 = vadd.f32 %v6407, %v6446
          %v6448 = vpop.f32.mrb[0].mxu0
          %v6449 = vpop.f32.mrb[0].mxu0
          %v6450 = vpop.f32.mrb[0].mxu0
          %6451 = vdwg.mxu0
          %6452 = vmatprep.subr.bf16.mxu0 0
          %6453 = vmatpush1.bf16.msra.mxu0 %v6252
          %6454 = vmatprep.subr.bf16.mxu0 0
          %6455 = vmatpush1.bf16.msra.mxu0 %v6253
          %6456 = vmatprep.subr.bf16.mxu0 0
          %6457 = vmatpush1.bf16.msra.mxu0 %v6254
          %6458 = vmatprep.subr.bf16.mxu0 0
          %6459 = vmatpush1.bf16.msra.mxu0 %v6255
          %6460 = vmatprep.subr.bf16.mxu0 0
          %6461 = vmatpush1.bf16.msra.mxu0 %v6256
          %6462 = vmatprep.subr.bf16.mxu0 0
          %6463 = vmatpush1.bf16.msra.mxu0 %v6257
          %6464 = vmatprep.subr.bf16.mxu0 0
          %6465 = vmatpush1.bf16.msra.mxu0 %v6258
          %6466 = vmatprep.subr.bf16.mxu0 0
          %6467 = vmatpush1.bf16.msra.mxu0 %v6259
          %6468 = vmatprep.subr.bf16.mxu0 0
          %6469 = vmatpush1.bf16.msra.mxu0 %v6260
          %6470 = vmatprep.subr.bf16.mxu0 0
          %6471 = vmatpush1.bf16.msra.mxu0 %v6261
          %6472 = vmatprep.subr.bf16.mxu0 0
          %6473 = vmatpush1.bf16.msra.mxu0 %v6262
          %6474 = vmatprep.subr.bf16.mxu0 0
          %6475 = vmatpush1.bf16.msra.mxu0 %v6263
          %6476 = vmatprep.subr.bf16.mxu0 0
          %6477 = vmatpush1.bf16.msra.mxu0 %v6264
          %6478 = vmatprep.subr.bf16.mxu0 0
          %6479 = vmatpush1.bf16.msra.mxu0 %v6265
          %6480 = vmatprep.subr.bf16.mxu0 0
          %6481 = vmatpush1.bf16.msra.mxu0 %v6266
          %6482 = vmatprep.subr.bf16.mxu0 0
          %6483 = vmatpush1.bf16.msra.mxu0 %v6267
          %6484 = vmatprep.mubr.bf16.mxu0 %v5812
          %6485 = vmatmul.mubr.bf16.gmra.mrb[0].mxu0 %v5811
          %v6486 = vpop.f32.mrb[0].mxu0
          %v6487 = vadd.f32 %v6447, %v6486
          %v6488 = vpop.f32.mrb[0].mxu0
          %v6489 = vpop.f32.mrb[0].mxu0
          %v6490 = vpop.f32.mrb[0].mxu0
          %6491 = vdwg.mxu0
          %vm6492 = vcmask 74752
          %6493 = vst.msk [vmem:[#allocation15] sm:$0x3] %vm6492, %v6487
        $region84: #{tpu_custom_call.1} parent=51 // pred_fallthru
          _
        // Predicated region
        $region85: #{tpu_custom_call.1} parent=51 // pred_check
          %p6494 = pneg %p212
        $region86: #{tpu_custom_call.1} parent=51 // pred_check_branch
          %6496 = sbr.rel (%p6494) target = $region88
        $region87: #{tpu_custom_call.1} parent=51 // pred_region
          %s6498 = ssub.s32 32, 32
          %6499 = vsyncadd [#allocation6], %s6498
          %s6501 = sshll.u32 [#allocation15], 4
          %s6502 = int_to_ptr.vmem [resolvable:$true] %s6501
          %6504 = dma.vmem_to_hbm [thread:$0]  %s6502, 32, %s8, [#allocation6]
        $region88: #{tpu_custom_call.1} parent=51 // pred_fallthru
          _
        // Predicated region
        $region89: #{tpu_custom_call.1} parent=51 // pred_check
          %p6505 = pneg %p212
        $region90: #{tpu_custom_call.1} parent=51 // pred_check_branch
          %6507 = sbr.rel (%p6505) target = $region92
        $region91: #{tpu_custom_call.1} parent=51 // pred_region
          %6508 = dma.done [#allocation6], 32
        $region92: #{tpu_custom_call.1} parent=51 // pred_fallthru
          _
      $region52: #{tpu_custom_call.1} parent=5 // pred_fallthru
        _
      %p6509 = scmp.le.s32.totalorder 2, %s21
      // Predicated region
      $region93: #{tpu_custom_call.1} parent=5 // pred_check
        %p6510 = pneg %p6509
      $region94: #{tpu_custom_call.1} parent=5 // pred_check_branch
        %6512 = sbr.rel (%p6510) target = $region96
      $region95: #{tpu_custom_call.1} parent=5 // pred_region
        %s6513 = ssub.s32 %s21, 2
      $region96: #{tpu_custom_call.1} parent=5 // pred_fallthru
        _
    $region6: #{tpu_custom_call.1} parent=1 // loop_footer
      %s25 = sadd.s32 1, %s21
    $region7: #{tpu_custom_call.1} parent=1 // loop_footer_branch
      %20 = sbr.rel target = $region3
    $region8: #{tpu_custom_call.1} parent=1 // loop_exit
      _
    %6514 = vsyncpa [#allocation5], 1
    %s6515 = scalar_lea.sflag [#allocation5], 1
    %6516 = vsyncpa %s6515, 1
    %6517 = vsyncpa [#allocation8], 1
    %6518 = vsyncpa [#allocation11], 1
    %s6519 = scalar_lea.sflag [#allocation11], 1
    %6520 = vsyncpa %s6519, 1
    %6521 = vsyncpa [#allocation14], 1
    %6522 = vsyncpa [#allocation6], 1
    %s6523 = scalar_lea.sflag [#allocation6], 1
    %6524 = vsyncpa %s6523, 1

</llo_original>
